<compile_context>
chip_gen: v5e
topology: v5e:2x2
jax: 0.10.0
libtpu: 0.0.40
codegen_flags: <defaults>
</compile_context>

<pallas_src>
import functools

import jax
import jax.numpy as jnp
from jax.experimental import pallas as pl
from jax.experimental.pallas import tpu as pltpu

EPS = 1e-5      # PyTorch BatchNorm2d default eps
LANES = 128     # TPU lane width; Cout is zero-padded to this for dense stores


def _block_footprint_bytes(th, wpad, cin, lanes, kh, kw):
    """Approximate per-grid-step VMEM footprint for one (n, h-tile) block."""
    rows = th * wpad
    rows_in = (th + kh - 1) * wpad + (kw - 1)
    return (rows_in * cin * 2 * 2            # bf16 input strip, double-buffered
            + kh * kw * cin * lanes * 2 * 2  # bf16 weight taps, double-buffered
            + rows * 4 * 2                   # f32 mask, double-buffered
            + rows * lanes * 2 * 2           # bf16 output slab, double-buffered
            + rows * lanes * 4               # f32 conv accumulator
            + 2 * rows * cin * 2)            # tap relayout temporaries


def _choose_h_tile(hout, wpad, cin, lanes, kh, kw, budget=26 << 20):
    """Largest H tile whose block footprint stays under the VMEM budget.

    The budget is chosen so that 2x footprint stays well under v7x's 64 MiB
    physical VMEM; v5e/v6e (128 MiB) trivially fit the same tiles.
    """
    th = max(int(hout), 1)
    while th > 1 and _block_footprint_bytes(th, wpad, cin, lanes, kh, kw) > budget:
        th = -(-th // 2)
    return th


def _conv_taps(x_ref, w_ref, *, kh, kw, wpad, rows):
    """KH*KW flat-shifted taps, each one MXU matmul, accumulated in f32.

    x_ref : [rows_in, Cin]      flattened (H,Wpad) input strip (bf16)
    w_ref : [KH*KW, Cin, 128]   per-tap weights, Cout padded to 128 (bf16)
    Flat output row r = h*Wpad + w; tap (i,j) reads flat input row
    i*Wpad + j + r, which equals x_pad[h+i, w+j] whenever w < Wout (the last
    KW-1 columns per row are garbage and are masked / discarded later).
    """
    acc = jnp.zeros((rows, LANES), jnp.float32)
    for i in range(kh):
        for j in range(kw):
            start = i * wpad + j
            tap = x_ref[pl.ds(start, rows), :]                      # [rows, Cin]
            acc = acc + jnp.dot(tap, w_ref[i * kw + j],
                                preferred_element_type=jnp.float32)
    return acc


def _conv_stats_kernel(x_ref, w_ref, mask_ref, stats_ref, *, kh, kw, wpad, rows):
    """Pass 1: per-tile per-channel sum and sum-of-squares of the conv output."""
    conv = _conv_taps(x_ref, w_ref, kh=kh, kw=kw, wpad=wpad, rows=rows)
    conv = conv * mask_ref[...]          # zero W-garbage columns / H-overflow rows
    stats_ref[0:1, :] = jnp.sum(conv, axis=0, keepdims=True)
    stats_ref[1:2, :] = jnp.sum(conv * conv, axis=0, keepdims=True)


def _conv_bn_relu_kernel(x_ref, w_ref, sc_ref, o_ref, *, kh, kw, wpad, rows):
    """Pass 2: recompute conv, apply folded BN scale/shift + ReLU, bf16 store."""
    conv = _conv_taps(x_ref, w_ref, kh=kh, kw=kw, wpad=wpad, rows=rows)
    scale = sc_ref[0:1, :]
    shift = sc_ref[1:2, :]
    o_ref[...] = jnp.maximum(conv * scale + shift, 0.0).astype(o_ref.dtype)


@functools.partial(jax.jit, static_argnames=("padding",))
def conv_layer_forward(x_nchw, weight, bias, gamma, beta, padding=1):
    """ConvLayer.forward equivalent.

    x_nchw : [N, Cin, H, W]
    weight : [Cout, Cin, KH, KW]   (PyTorch Conv2d layout)
    bias   : [Cout]  (accepted for API parity; cancels under batch-stat BN)
    gamma  : [Cout]
    beta   : [Cout]
    returns: [N, Cout, Hout, Wout] float32
    """
    del bias  # cancels exactly in BatchNorm with batch statistics
    N, Cin, H, W = x_nchw.shape
    Cout, _, KH, KW = weight.shape
    assert Cout <= LANES, "Cout > 128 needs a lane-tile grid axis (see TODO)."

    Hout = H + 2 * padding - KH + 1
    Wout = W + 2 * padding - KW + 1
    Hpad = H + 2 * padding
    Wpad = W + 2 * padding

    TH = _choose_h_tile(Hout, Wpad, Cin, LANES, KH, KW)
    num_h = -(-Hout // TH)
    rows = TH * Wpad                          # flat output rows per tile
    rows_in = (TH + KH - 1) * Wpad + (KW - 1)  # flat input rows per strip

    # ---- glue in plain JAX: NCHW -> NHWC (bf16 BEFORE any blow-up), pad, strips
    x = jnp.transpose(x_nchw, (0, 2, 3, 1)).astype(jnp.bfloat16)
    h_extra = num_h * TH + (KH - 1) - Hpad            # extra zero rows for last strip
    x_pad = jnp.pad(x, ((0, 0), (padding, padding + h_extra),
                        (padding, padding), (0, 0)))
    # Overlapping H-strips (only the KH-1 halo rows are duplicated).
    strips = jnp.stack([x_pad[:, t * TH: t * TH + TH + KH - 1]
                        for t in range(num_h)], axis=1)
    strips = strips.reshape(N, num_h, (TH + KH - 1) * Wpad, Cin)
    strips = jnp.pad(strips, ((0, 0), (0, 0), (0, KW - 1), (0, 0)))  # flat-shift guard

    # [Cout, Cin, KH, KW] -> [KH*KW, Cin, 128] (Cout zero-padded to lane width).
    w_taps = jnp.transpose(weight, (2, 3, 1, 0)).reshape(KH * KW, Cin, Cout)
    w_taps = jnp.pad(w_taps, ((0, 0), (0, 0), (0, LANES - Cout))).astype(jnp.bfloat16)

    # Per-tile validity mask: drops the KW-1 garbage columns of the flat-shift
    # trick and the H-overflow rows of the last tile (so BN stats are exact).
    r_idx = jnp.arange(rows, dtype=jnp.int32)
    w_ok = (r_idx % Wpad) < Wout
    h_idx = r_idx // Wpad
    masks = [(w_ok & (h_idx < min(TH, Hout - t * TH))).astype(jnp.float32)
             for t in range(num_h)]
    mask = jnp.stack(masks).reshape(num_h, rows, 1)

    footprint = _block_footprint_bytes(TH, Wpad, Cin, LANES, KH, KW)
    vmem_limit = int(min(max(2 * footprint, 32 << 20), 56 << 20))
    cparams = pltpu.CompilerParams(
        dimension_semantics=("parallel", "parallel"),   # no scratch coupling ->
        vmem_limit_bytes=vmem_limit)                    # megacore-shardable (v7x)
    flops = 2 * N * num_h * rows * (KH * KW * Cin) * LANES
    kern_kwargs = dict(kh=KH, kw=KW, wpad=Wpad, rows=rows)

    strip_spec = pl.BlockSpec((None, None, rows_in, Cin), lambda n, h: (n, h, 0, 0))
    w_spec = pl.BlockSpec((KH * KW, Cin, LANES), lambda n, h: (0, 0, 0))

    # ---- pass 1: per-(n, h-tile) partial BN statistics -----------------------
    stats = pl.pallas_call(
        functools.partial(_conv_stats_kernel, **kern_kwargs),
        out_shape=jax.ShapeDtypeStruct((N, num_h, 2, LANES), jnp.float32),
        grid_spec=pltpu.PrefetchScalarGridSpec(
            num_scalar_prefetch=0,
            grid=(N, num_h),
            in_specs=[strip_spec, w_spec,
                      pl.BlockSpec((None, rows, 1), lambda n, h: (h, 0, 0))],
            out_specs=pl.BlockSpec((None, None, 2, LANES),
                                   lambda n, h: (n, h, 0, 0))),
        compiler_params=cparams,
        cost_estimate=pl.CostEstimate(
            flops=flops, transcendentals=0,
            bytes_accessed=(strips.size * 2 + w_taps.size * 2 + mask.size * 4
                            + N * num_h * 2 * LANES * 4)),
    )(strips, w_taps, mask)

    # ---- tiny reduction + BN folding in plain JAX -----------------------------
    count = float(N * Hout * Wout)
    ch_sum = jnp.sum(stats[:, :, 0, :], axis=(0, 1))
    ch_sq = jnp.sum(stats[:, :, 1, :], axis=(0, 1))
    mean = ch_sum / count
    var = jnp.maximum(ch_sq / count - mean * mean, 0.0)
    gamma_p = jnp.pad(gamma.astype(jnp.float32), (0, LANES - Cout))
    beta_p = jnp.pad(beta.astype(jnp.float32), (0, LANES - Cout))
    scale = gamma_p * jax.lax.rsqrt(var + EPS)
    shift = beta_p - mean * scale
    sc = jnp.stack([scale, shift], axis=0)               # [2, 128] f32

    # ---- pass 2: normalize + ReLU, lane-dense bf16 slab -----------------------
    out_slab = pl.pallas_call(
        functools.partial(_conv_bn_relu_kernel, **kern_kwargs),
        out_shape=jax.ShapeDtypeStruct((N, num_h, rows, LANES), jnp.bfloat16),
        grid_spec=pltpu.PrefetchScalarGridSpec(
            num_scalar_prefetch=0,
            grid=(N, num_h),
            in_specs=[strip_spec, w_spec,
                      pl.BlockSpec((2, LANES), lambda n, h: (0, 0))],
            out_specs=pl.BlockSpec((None, None, rows, LANES),
                                   lambda n, h: (n, h, 0, 0))),
        compiler_params=cparams,
        cost_estimate=pl.CostEstimate(
            flops=flops, transcendentals=0,
            bytes_accessed=(strips.size * 2 + w_taps.size * 2 + 2 * LANES * 4
                            + N * num_h * rows * LANES * 2)),
    )(strips, w_taps, sc)

    # Strip the flat-shift garbage columns, the H padding and the lane padding.
    out = out_slab.reshape(N, num_h, TH, Wpad, LANES)[:, :, :, :Wout, :Cout]
    out = out.reshape(N, num_h * TH, Wout, Cout)[:, :Hout]
    return jnp.transpose(out, (0, 3, 1, 2)).astype(jnp.float32)   # NCHW


def _reference_forward(x_nchw, weight, bias, gamma, beta, padding=1):
    """Pure-JAX reference. Conv inputs are quantized to bf16 to mirror the
    kernel's MXU feed (accumulation stays f32)."""
    xq = x_nchw.astype(jnp.bfloat16).astype(jnp.float32)
    wq = weight.astype(jnp.bfloat16).astype(jnp.float32)
    y = jax.lax.conv_general_dilated(
        xq, wq, window_strides=(1, 1),
        padding=[(padding, padding), (padding, padding)],
        dimension_numbers=("NCHW", "OIHW", "NCHW"),
    ) + bias.reshape(1, -1, 1, 1)
    mean = jnp.mean(y, axis=(0, 2, 3), keepdims=True)
    var = jnp.mean((y - mean) ** 2, axis=(0, 2, 3), keepdims=True)
    y = (y - mean) * jax.lax.rsqrt(var + EPS)
    y = y * gamma.reshape(1, -1, 1, 1) + beta.reshape(1, -1, 1, 1)
    return jnp.maximum(y, 0.0)


if __name__ == "__main__":
    # Small deterministic config: ConvLayer(in_channels=4, out_channels=8)
    N, Cin, H, W = 2, 4, 16, 16
    Cout, KH, KW = 8, 3, 3

    key = jax.random.PRNGKey(0)
    kx, kw_, kb, kg, kbe = jax.random.split(key, 5)

    x = jax.random.normal(kx, (N, Cin, H, W), dtype=jnp.float32)
    fan_in = Cin * KH * KW
    weight = jax.random.normal(kw_, (Cout, Cin, KH, KW), dtype=jnp.float32) / jnp.sqrt(fan_in)
    bias = jax.random.normal(kb, (Cout,), dtype=jnp.float32) * 0.01
    gamma = jnp.ones((Cout,), dtype=jnp.float32) + 0.05 * jax.random.normal(kg, (Cout,))
    beta = 0.05 * jax.random.normal(kbe, (Cout,), dtype=jnp.float32)

    out = conv_layer_forward(x, weight, bias, gamma, beta, padding=1)
    out = jax.block_until_ready(out)

    ref = _reference_forward(x, weight, bias, gamma, beta, padding=1)
    assert out.shape == (N, Cout, H, W)
    # Tolerance reflects the bf16 output slab (kernel) vs f32 reference.
    assert jnp.allclose(out, ref, atol=2e-2, rtol=2e-2), float(jnp.max(jnp.abs(out - ref)))

    print("KERNEL_OK")
</pallas_src>

<mosaic_0001>
module attributes {stable_mosaic.version = 11 : i64} {
  func.func @_conv_stats_kernel(%arg0: i32, %arg1: i32, %arg2: memref<1x1x326x4xbf16, #tpu.memory_space<vmem>>, %arg3: memref<9x4x128xbf16, #tpu.memory_space<vmem>>, %arg4: memref<1x288x1xf32, #tpu.memory_space<vmem>>, %arg5: memref<1x1x2x128xf32, #tpu.memory_space<vmem>>) attributes {dimension_semantics = [#tpu.dimension_semantics<parallel>, #tpu.dimension_semantics<parallel>], iteration_bounds = array<i64: 2, 1>, scalar_prefetch = 0 : i64, scratch_operands = 0 : i64, tpu.core_type = #tpu.core_type<tc>, window_params = [{transform_indices = @transform_0, window_bounds = array<i64: 1, 1, 326, 4>}, {pipeline_mode = #tpu.pipeline_mode<synchronous>, transform_indices = @transform_1, window_bounds = array<i64: 9, 4, 128>}, {transform_indices = @transform_2, window_bounds = array<i64: 1, 288, 1>}, {transform_indices = @transform_3, window_bounds = array<i64: 1, 1, 2, 128>}]} {
    %cst = arith.constant 0.000000e+00 : f32
    %0 = vector.broadcast %cst : f32 to vector<288x128xf32>
    %c0 = arith.constant 0 : index
    %c0_0 = arith.constant 0 : index
    %c0_1 = arith.constant 0 : index
    %c0_2 = arith.constant 0 : index
    %1 = vector.load %arg2[%c0, %c0_0, %c0_1, %c0_2] : memref<1x1x326x4xbf16, #tpu.memory_space<vmem>>, vector<1x1x288x4xbf16>
    %2 = vector.shape_cast %1 : vector<1x1x288x4xbf16> to vector<288x4xbf16>
    %c0_3 = arith.constant 0 : index
    %c0_4 = arith.constant 0 : index
    %c0_5 = arith.constant 0 : index
    %3 = vector.load %arg3[%c0_3, %c0_4, %c0_5] : memref<9x4x128xbf16, #tpu.memory_space<vmem>>, vector<1x4x128xbf16>
    %4 = vector.shape_cast %3 : vector<1x4x128xbf16> to vector<4x128xbf16>
    %cst_6 = arith.constant dense<0.000000e+00> : vector<288x128xf32>
    %5 = tpu.matmul %2, %4, %cst_6 {dimension_numbers = #tpu.dot_dimension_numbers<[1], [0], [0], [1], [0, 0, 1, 1], [], []>} : vector<288x4xbf16>, vector<4x128xbf16>, vector<288x128xf32> -> vector<288x128xf32>
    %6 = arith.addf %0, %5 : vector<288x128xf32>
    %c0_7 = arith.constant 0 : index
    %c0_8 = arith.constant 0 : index
    %c1 = arith.constant 1 : index
    %c0_9 = arith.constant 0 : index
    %7 = vector.load %arg2[%c0_7, %c0_8, %c1, %c0_9] : memref<1x1x326x4xbf16, #tpu.memory_space<vmem>>, vector<1x1x288x4xbf16>
    %8 = vector.shape_cast %7 : vector<1x1x288x4xbf16> to vector<288x4xbf16>
    %c1_10 = arith.constant 1 : index
    %c0_11 = arith.constant 0 : index
    %c0_12 = arith.constant 0 : index
    %9 = vector.load %arg3[%c1_10, %c0_11, %c0_12] : memref<9x4x128xbf16, #tpu.memory_space<vmem>>, vector<1x4x128xbf16>
    %10 = vector.shape_cast %9 : vector<1x4x128xbf16> to vector<4x128xbf16>
    %cst_13 = arith.constant dense<0.000000e+00> : vector<288x128xf32>
    %11 = tpu.matmul %8, %10, %cst_13 {dimension_numbers = #tpu.dot_dimension_numbers<[1], [0], [0], [1], [0, 0, 1, 1], [], []>} : vector<288x4xbf16>, vector<4x128xbf16>, vector<288x128xf32> -> vector<288x128xf32>
    %12 = arith.addf %6, %11 : vector<288x128xf32>
    %c0_14 = arith.constant 0 : index
    %c0_15 = arith.constant 0 : index
    %c2 = arith.constant 2 : index
    %c0_16 = arith.constant 0 : index
    %13 = vector.load %arg2[%c0_14, %c0_15, %c2, %c0_16] : memref<1x1x326x4xbf16, #tpu.memory_space<vmem>>, vector<1x1x288x4xbf16>
    %14 = vector.shape_cast %13 : vector<1x1x288x4xbf16> to vector<288x4xbf16>
    %c2_17 = arith.constant 2 : index
    %c0_18 = arith.constant 0 : index
    %c0_19 = arith.constant 0 : index
    %15 = vector.load %arg3[%c2_17, %c0_18, %c0_19] : memref<9x4x128xbf16, #tpu.memory_space<vmem>>, vector<1x4x128xbf16>
    %16 = vector.shape_cast %15 : vector<1x4x128xbf16> to vector<4x128xbf16>
    %cst_20 = arith.constant dense<0.000000e+00> : vector<288x128xf32>
    %17 = tpu.matmul %14, %16, %cst_20 {dimension_numbers = #tpu.dot_dimension_numbers<[1], [0], [0], [1], [0, 0, 1, 1], [], []>} : vector<288x4xbf16>, vector<4x128xbf16>, vector<288x128xf32> -> vector<288x128xf32>
    %18 = arith.addf %12, %17 : vector<288x128xf32>
    %c0_21 = arith.constant 0 : index
    %c0_22 = arith.constant 0 : index
    %c18 = arith.constant 18 : index
    %c0_23 = arith.constant 0 : index
    %19 = vector.load %arg2[%c0_21, %c0_22, %c18, %c0_23] : memref<1x1x326x4xbf16, #tpu.memory_space<vmem>>, vector<1x1x288x4xbf16>
    %20 = vector.shape_cast %19 : vector<1x1x288x4xbf16> to vector<288x4xbf16>
    %c3 = arith.constant 3 : index
    %c0_24 = arith.constant 0 : index
    %c0_25 = arith.constant 0 : index
    %21 = vector.load %arg3[%c3, %c0_24, %c0_25] : memref<9x4x128xbf16, #tpu.memory_space<vmem>>, vector<1x4x128xbf16>
    %22 = vector.shape_cast %21 : vector<1x4x128xbf16> to vector<4x128xbf16>
    %cst_26 = arith.constant dense<0.000000e+00> : vector<288x128xf32>
    %23 = tpu.matmul %20, %22, %cst_26 {dimension_numbers = #tpu.dot_dimension_numbers<[1], [0], [0], [1], [0, 0, 1, 1], [], []>} : vector<288x4xbf16>, vector<4x128xbf16>, vector<288x128xf32> -> vector<288x128xf32>
    %24 = arith.addf %18, %23 : vector<288x128xf32>
    %c0_27 = arith.constant 0 : index
    %c0_28 = arith.constant 0 : index
    %c19 = arith.constant 19 : index
    %c0_29 = arith.constant 0 : index
    %25 = vector.load %arg2[%c0_27, %c0_28, %c19, %c0_29] : memref<1x1x326x4xbf16, #tpu.memory_space<vmem>>, vector<1x1x288x4xbf16>
    %26 = vector.shape_cast %25 : vector<1x1x288x4xbf16> to vector<288x4xbf16>
    %c4 = arith.constant 4 : index
    %c0_30 = arith.constant 0 : index
    %c0_31 = arith.constant 0 : index
    %27 = vector.load %arg3[%c4, %c0_30, %c0_31] : memref<9x4x128xbf16, #tpu.memory_space<vmem>>, vector<1x4x128xbf16>
    %28 = vector.shape_cast %27 : vector<1x4x128xbf16> to vector<4x128xbf16>
    %cst_32 = arith.constant dense<0.000000e+00> : vector<288x128xf32>
    %29 = tpu.matmul %26, %28, %cst_32 {dimension_numbers = #tpu.dot_dimension_numbers<[1], [0], [0], [1], [0, 0, 1, 1], [], []>} : vector<288x4xbf16>, vector<4x128xbf16>, vector<288x128xf32> -> vector<288x128xf32>
    %30 = arith.addf %24, %29 : vector<288x128xf32>
    %c0_33 = arith.constant 0 : index
    %c0_34 = arith.constant 0 : index
    %c20 = arith.constant 20 : index
    %c0_35 = arith.constant 0 : index
    %31 = vector.load %arg2[%c0_33, %c0_34, %c20, %c0_35] : memref<1x1x326x4xbf16, #tpu.memory_space<vmem>>, vector<1x1x288x4xbf16>
    %32 = vector.shape_cast %31 : vector<1x1x288x4xbf16> to vector<288x4xbf16>
    %c5 = arith.constant 5 : index
    %c0_36 = arith.constant 0 : index
    %c0_37 = arith.constant 0 : index
    %33 = vector.load %arg3[%c5, %c0_36, %c0_37] : memref<9x4x128xbf16, #tpu.memory_space<vmem>>, vector<1x4x128xbf16>
    %34 = vector.shape_cast %33 : vector<1x4x128xbf16> to vector<4x128xbf16>
    %cst_38 = arith.constant dense<0.000000e+00> : vector<288x128xf32>
    %35 = tpu.matmul %32, %34, %cst_38 {dimension_numbers = #tpu.dot_dimension_numbers<[1], [0], [0], [1], [0, 0, 1, 1], [], []>} : vector<288x4xbf16>, vector<4x128xbf16>, vector<288x128xf32> -> vector<288x128xf32>
    %36 = arith.addf %30, %35 : vector<288x128xf32>
    %c0_39 = arith.constant 0 : index
    %c0_40 = arith.constant 0 : index
    %c36 = arith.constant 36 : index
    %c0_41 = arith.constant 0 : index
    %37 = vector.load %arg2[%c0_39, %c0_40, %c36, %c0_41] : memref<1x1x326x4xbf16, #tpu.memory_space<vmem>>, vector<1x1x288x4xbf16>
    %38 = vector.shape_cast %37 : vector<1x1x288x4xbf16> to vector<288x4xbf16>
    %c6 = arith.constant 6 : index
    %c0_42 = arith.constant 0 : index
    %c0_43 = arith.constant 0 : index
    %39 = vector.load %arg3[%c6, %c0_42, %c0_43] : memref<9x4x128xbf16, #tpu.memory_space<vmem>>, vector<1x4x128xbf16>
    %40 = vector.shape_cast %39 : vector<1x4x128xbf16> to vector<4x128xbf16>
    %cst_44 = arith.constant dense<0.000000e+00> : vector<288x128xf32>
    %41 = tpu.matmul %38, %40, %cst_44 {dimension_numbers = #tpu.dot_dimension_numbers<[1], [0], [0], [1], [0, 0, 1, 1], [], []>} : vector<288x4xbf16>, vector<4x128xbf16>, vector<288x128xf32> -> vector<288x128xf32>
    %42 = arith.addf %36, %41 : vector<288x128xf32>
    %c0_45 = arith.constant 0 : index
    %c0_46 = arith.constant 0 : index
    %c37 = arith.constant 37 : index
    %c0_47 = arith.constant 0 : index
    %43 = vector.load %arg2[%c0_45, %c0_46, %c37, %c0_47] : memref<1x1x326x4xbf16, #tpu.memory_space<vmem>>, vector<1x1x288x4xbf16>
    %44 = vector.shape_cast %43 : vector<1x1x288x4xbf16> to vector<288x4xbf16>
    %c7 = arith.constant 7 : index
    %c0_48 = arith.constant 0 : index
    %c0_49 = arith.constant 0 : index
    %45 = vector.load %arg3[%c7, %c0_48, %c0_49] : memref<9x4x128xbf16, #tpu.memory_space<vmem>>, vector<1x4x128xbf16>
    %46 = vector.shape_cast %45 : vector<1x4x128xbf16> to vector<4x128xbf16>
    %cst_50 = arith.constant dense<0.000000e+00> : vector<288x128xf32>
    %47 = tpu.matmul %44, %46, %cst_50 {dimension_numbers = #tpu.dot_dimension_numbers<[1], [0], [0], [1], [0, 0, 1, 1], [], []>} : vector<288x4xbf16>, vector<4x128xbf16>, vector<288x128xf32> -> vector<288x128xf32>
    %48 = arith.addf %42, %47 : vector<288x128xf32>
    %c0_51 = arith.constant 0 : index
    %c0_52 = arith.constant 0 : index
    %c38 = arith.constant 38 : index
    %c0_53 = arith.constant 0 : index
    %49 = vector.load %arg2[%c0_51, %c0_52, %c38, %c0_53] : memref<1x1x326x4xbf16, #tpu.memory_space<vmem>>, vector<1x1x288x4xbf16>
    %50 = vector.shape_cast %49 : vector<1x1x288x4xbf16> to vector<288x4xbf16>
    %c8 = arith.constant 8 : index
    %c0_54 = arith.constant 0 : index
    %c0_55 = arith.constant 0 : index
    %51 = vector.load %arg3[%c8, %c0_54, %c0_55] : memref<9x4x128xbf16, #tpu.memory_space<vmem>>, vector<1x4x128xbf16>
    %52 = vector.shape_cast %51 : vector<1x4x128xbf16> to vector<4x128xbf16>
    %cst_56 = arith.constant dense<0.000000e+00> : vector<288x128xf32>
    %53 = tpu.matmul %50, %52, %cst_56 {dimension_numbers = #tpu.dot_dimension_numbers<[1], [0], [0], [1], [0, 0, 1, 1], [], []>} : vector<288x4xbf16>, vector<4x128xbf16>, vector<288x128xf32> -> vector<288x128xf32>
    %54 = arith.addf %48, %53 : vector<288x128xf32>
    %c0_57 = arith.constant 0 : index
    %c0_58 = arith.constant 0 : index
    %c0_59 = arith.constant 0 : index
    %55 = vector.load %arg4[%c0_57, %c0_58, %c0_59] : memref<1x288x1xf32, #tpu.memory_space<vmem>>, vector<1x288x1xf32>
    %56 = vector.shape_cast %55 : vector<1x288x1xf32> to vector<288x1xf32>
    %57 = vector.broadcast %56 : vector<288x1xf32> to vector<288x128xf32>
    %58 = arith.mulf %54, %57 : vector<288x128xf32>
    %cst_60 = arith.constant dense<0.000000e+00> : vector<128xf32>
    %59 = vector.multi_reduction <add>, %58, %cst_60 [0] : vector<288x128xf32> to vector<128xf32>
    %60 = vector.shape_cast %59 : vector<128xf32> to vector<1x128xf32>
    %c0_61 = arith.constant 0 : index
    %c0_62 = arith.constant 0 : index
    %c0_63 = arith.constant 0 : index
    %c0_64 = arith.constant 0 : index
    %61 = vector.load %arg5[%c0_61, %c0_62, %c0_63, %c0_64] : memref<1x1x2x128xf32, #tpu.memory_space<vmem>>, vector<1x1x1x128xf32>
    %62 = vector.shape_cast %61 : vector<1x1x1x128xf32> to vector<1x128xf32>
    %63 = vector.shape_cast %60 : vector<1x128xf32> to vector<1x1x1x128xf32>
    tpu.vector_store %arg5[%c0_61, %c0_62, %c0_63, %c0_64], %63 {strides = array<i32>} : memref<1x1x2x128xf32, #tpu.memory_space<vmem>>, vector<1x1x1x128xf32>,
    %64 = arith.mulf %58, %58 : vector<288x128xf32>
    %cst_65 = arith.constant dense<0.000000e+00> : vector<128xf32>
    %65 = vector.multi_reduction <add>, %64, %cst_65 [0] : vector<288x128xf32> to vector<128xf32>
    %66 = vector.shape_cast %65 : vector<128xf32> to vector<1x128xf32>
    %c0_66 = arith.constant 0 : index
    %c0_67 = arith.constant 0 : index
    %c1_68 = arith.constant 1 : index
    %c0_69 = arith.constant 0 : index
    %67 = vector.load %arg5[%c0_66, %c0_67, %c1_68, %c0_69] : memref<1x1x2x128xf32, #tpu.memory_space<vmem>>, vector<1x1x1x128xf32>
    %68 = vector.shape_cast %67 : vector<1x1x1x128xf32> to vector<1x128xf32>
    %69 = vector.shape_cast %66 : vector<1x128xf32> to vector<1x1x1x128xf32>
    tpu.vector_store %arg5[%c0_66, %c0_67, %c1_68, %c0_69], %69 {strides = array<i32>} : memref<1x1x2x128xf32, #tpu.memory_space<vmem>>, vector<1x1x1x128xf32>,
    return
  }
  func.func @transform_0(%arg0: i32, %arg1: i32) -> (i32, i32, i32, i32) {
    %c0_i32 = arith.constant 0 : i32
    %c0_i32_0 = arith.constant 0 : i32
    %c0_i32_1 = arith.constant 0 : i32
    return %arg0, %arg1, %c0_i32, %c0_i32_0 : i32, i32, i32, i32
  }
  func.func @transform_1(%arg0: i32, %arg1: i32) -> (i32, i32, i32) {
    %c0_i32 = arith.constant 0 : i32
    %c0_i32_0 = arith.constant 0 : i32
    %c0_i32_1 = arith.constant 0 : i32
    %c0_i32_2 = arith.constant 0 : i32
    return %c0_i32, %c0_i32_0, %c0_i32_1 : i32, i32, i32
  }
  func.func @transform_2(%arg0: i32, %arg1: i32) -> (i32, i32, i32) {
    %c0_i32 = arith.constant 0 : i32
    %c0_i32_0 = arith.constant 0 : i32
    %c0_i32_1 = arith.constant 0 : i32
    return %arg1, %c0_i32, %c0_i32_0 : i32, i32, i32
  }
  func.func @transform_3(%arg0: i32, %arg1: i32) -> (i32, i32, i32, i32) {
    %c0_i32 = arith.constant 0 : i32
    %c0_i32_0 = arith.constant 0 : i32
    %c0_i32_1 = arith.constant 0 : i32
    return %arg0, %arg1, %c0_i32, %c0_i32_0 : i32, i32, i32, i32
  }
}

module attributes {stable_mosaic.version = 11 : i64} {
  func.func @_conv_bn_relu_kernel(%arg0: i32, %arg1: i32, %arg2: memref<1x1x326x4xbf16, #tpu.memory_space<vmem>>, %arg3: memref<9x4x128xbf16, #tpu.memory_space<vmem>>, %arg4: memref<2x128xf32, #tpu.memory_space<vmem>>, %arg5: memref<1x1x288x128xbf16, #tpu.memory_space<vmem>>) attributes {dimension_semantics = [#tpu.dimension_semantics<parallel>, #tpu.dimension_semantics<parallel>], iteration_bounds = array<i64: 2, 1>, scalar_prefetch = 0 : i64, scratch_operands = 0 : i64, tpu.core_type = #tpu.core_type<tc>, window_params = [{transform_indices = @transform_0, window_bounds = array<i64: 1, 1, 326, 4>}, {pipeline_mode = #tpu.pipeline_mode<synchronous>, transform_indices = @transform_1, window_bounds = array<i64: 9, 4, 128>}, {pipeline_mode = #tpu.pipeline_mode<synchronous>, transform_indices = @transform_2, window_bounds = array<i64: 2, 128>}, {transform_indices = @transform_3, window_bounds = array<i64: 1, 1, 288, 128>}]} {
    %cst = arith.constant 0.000000e+00 : f32
    %0 = vector.broadcast %cst : f32 to vector<288x128xf32>
    %c0 = arith.constant 0 : index
    %c0_0 = arith.constant 0 : index
    %c0_1 = arith.constant 0 : index
    %c0_2 = arith.constant 0 : index
    %1 = vector.load %arg2[%c0, %c0_0, %c0_1, %c0_2] : memref<1x1x326x4xbf16, #tpu.memory_space<vmem>>, vector<1x1x288x4xbf16>
    %2 = vector.shape_cast %1 : vector<1x1x288x4xbf16> to vector<288x4xbf16>
    %c0_3 = arith.constant 0 : index
    %c0_4 = arith.constant 0 : index
    %c0_5 = arith.constant 0 : index
    %3 = vector.load %arg3[%c0_3, %c0_4, %c0_5] : memref<9x4x128xbf16, #tpu.memory_space<vmem>>, vector<1x4x128xbf16>
    %4 = vector.shape_cast %3 : vector<1x4x128xbf16> to vector<4x128xbf16>
    %cst_6 = arith.constant dense<0.000000e+00> : vector<288x128xf32>
    %5 = tpu.matmul %2, %4, %cst_6 {dimension_numbers = #tpu.dot_dimension_numbers<[1], [0], [0], [1], [0, 0, 1, 1], [], []>} : vector<288x4xbf16>, vector<4x128xbf16>, vector<288x128xf32> -> vector<288x128xf32>
    %6 = arith.addf %0, %5 : vector<288x128xf32>
    %c0_7 = arith.constant 0 : index
    %c0_8 = arith.constant 0 : index
    %c1 = arith.constant 1 : index
    %c0_9 = arith.constant 0 : index
    %7 = vector.load %arg2[%c0_7, %c0_8, %c1, %c0_9] : memref<1x1x326x4xbf16, #tpu.memory_space<vmem>>, vector<1x1x288x4xbf16>
    %8 = vector.shape_cast %7 : vector<1x1x288x4xbf16> to vector<288x4xbf16>
    %c1_10 = arith.constant 1 : index
    %c0_11 = arith.constant 0 : index
    %c0_12 = arith.constant 0 : index
    %9 = vector.load %arg3[%c1_10, %c0_11, %c0_12] : memref<9x4x128xbf16, #tpu.memory_space<vmem>>, vector<1x4x128xbf16>
    %10 = vector.shape_cast %9 : vector<1x4x128xbf16> to vector<4x128xbf16>
    %cst_13 = arith.constant dense<0.000000e+00> : vector<288x128xf32>
    %11 = tpu.matmul %8, %10, %cst_13 {dimension_numbers = #tpu.dot_dimension_numbers<[1], [0], [0], [1], [0, 0, 1, 1], [], []>} : vector<288x4xbf16>, vector<4x128xbf16>, vector<288x128xf32> -> vector<288x128xf32>
    %12 = arith.addf %6, %11 : vector<288x128xf32>
    %c0_14 = arith.constant 0 : index
    %c0_15 = arith.constant 0 : index
    %c2 = arith.constant 2 : index
    %c0_16 = arith.constant 0 : index
    %13 = vector.load %arg2[%c0_14, %c0_15, %c2, %c0_16] : memref<1x1x326x4xbf16, #tpu.memory_space<vmem>>, vector<1x1x288x4xbf16>
    %14 = vector.shape_cast %13 : vector<1x1x288x4xbf16> to vector<288x4xbf16>
    %c2_17 = arith.constant 2 : index
    %c0_18 = arith.constant 0 : index
    %c0_19 = arith.constant 0 : index
    %15 = vector.load %arg3[%c2_17, %c0_18, %c0_19] : memref<9x4x128xbf16, #tpu.memory_space<vmem>>, vector<1x4x128xbf16>
    %16 = vector.shape_cast %15 : vector<1x4x128xbf16> to vector<4x128xbf16>
    %cst_20 = arith.constant dense<0.000000e+00> : vector<288x128xf32>
    %17 = tpu.matmul %14, %16, %cst_20 {dimension_numbers = #tpu.dot_dimension_numbers<[1], [0], [0], [1], [0, 0, 1, 1], [], []>} : vector<288x4xbf16>, vector<4x128xbf16>, vector<288x128xf32> -> vector<288x128xf32>
    %18 = arith.addf %12, %17 : vector<288x128xf32>
    %c0_21 = arith.constant 0 : index
    %c0_22 = arith.constant 0 : index
    %c18 = arith.constant 18 : index
    %c0_23 = arith.constant 0 : index
    %19 = vector.load %arg2[%c0_21, %c0_22, %c18, %c0_23] : memref<1x1x326x4xbf16, #tpu.memory_space<vmem>>, vector<1x1x288x4xbf16>
    %20 = vector.shape_cast %19 : vector<1x1x288x4xbf16> to vector<288x4xbf16>
    %c3 = arith.constant 3 : index
    %c0_24 = arith.constant 0 : index
    %c0_25 = arith.constant 0 : index
    %21 = vector.load %arg3[%c3, %c0_24, %c0_25] : memref<9x4x128xbf16, #tpu.memory_space<vmem>>, vector<1x4x128xbf16>
    %22 = vector.shape_cast %21 : vector<1x4x128xbf16> to vector<4x128xbf16>
    %cst_26 = arith.constant dense<0.000000e+00> : vector<288x128xf32>
    %23 = tpu.matmul %20, %22, %cst_26 {dimension_numbers = #tpu.dot_dimension_numbers<[1], [0], [0], [1], [0, 0, 1, 1], [], []>} : vector<288x4xbf16>, vector<4x128xbf16>, vector<288x128xf32> -> vector<288x128xf32>
    %24 = arith.addf %18, %23 : vector<288x128xf32>
    %c0_27 = arith.constant 0 : index
    %c0_28 = arith.constant 0 : index
    %c19 = arith.constant 19 : index
    %c0_29 = arith.constant 0 : index
    %25 = vector.load %arg2[%c0_27, %c0_28, %c19, %c0_29] : memref<1x1x326x4xbf16, #tpu.memory_space<vmem>>, vector<1x1x288x4xbf16>
    %26 = vector.shape_cast %25 : vector<1x1x288x4xbf16> to vector<288x4xbf16>
    %c4 = arith.constant 4 : index
    %c0_30 = arith.constant 0 : index
    %c0_31 = arith.constant 0 : index
    %27 = vector.load %arg3[%c4, %c0_30, %c0_31] : memref<9x4x128xbf16, #tpu.memory_space<vmem>>, vector<1x4x128xbf16>
    %28 = vector.shape_cast %27 : vector<1x4x128xbf16> to vector<4x128xbf16>
    %cst_32 = arith.constant dense<0.000000e+00> : vector<288x128xf32>
    %29 = tpu.matmul %26, %28, %cst_32 {dimension_numbers = #tpu.dot_dimension_numbers<[1], [0], [0], [1], [0, 0, 1, 1], [], []>} : vector<288x4xbf16>, vector<4x128xbf16>, vector<288x128xf32> -> vector<288x128xf32>
    %30 = arith.addf %24, %29 : vector<288x128xf32>
    %c0_33 = arith.constant 0 : index
    %c0_34 = arith.constant 0 : index
    %c20 = arith.constant 20 : index
    %c0_35 = arith.constant 0 : index
    %31 = vector.load %arg2[%c0_33, %c0_34, %c20, %c0_35] : memref<1x1x326x4xbf16, #tpu.memory_space<vmem>>, vector<1x1x288x4xbf16>
    %32 = vector.shape_cast %31 : vector<1x1x288x4xbf16> to vector<288x4xbf16>
    %c5 = arith.constant 5 : index
    %c0_36 = arith.constant 0 : index
    %c0_37 = arith.constant 0 : index
    %33 = vector.load %arg3[%c5, %c0_36, %c0_37] : memref<9x4x128xbf16, #tpu.memory_space<vmem>>, vector<1x4x128xbf16>
    %34 = vector.shape_cast %33 : vector<1x4x128xbf16> to vector<4x128xbf16>
    %cst_38 = arith.constant dense<0.000000e+00> : vector<288x128xf32>
    %35 = tpu.matmul %32, %34, %cst_38 {dimension_numbers = #tpu.dot_dimension_numbers<[1], [0], [0], [1], [0, 0, 1, 1], [], []>} : vector<288x4xbf16>, vector<4x128xbf16>, vector<288x128xf32> -> vector<288x128xf32>
    %36 = arith.addf %30, %35 : vector<288x128xf32>
    %c0_39 = arith.constant 0 : index
    %c0_40 = arith.constant 0 : index
    %c36 = arith.constant 36 : index
    %c0_41 = arith.constant 0 : index
    %37 = vector.load %arg2[%c0_39, %c0_40, %c36, %c0_41] : memref<1x1x326x4xbf16, #tpu.memory_space<vmem>>, vector<1x1x288x4xbf16>
    %38 = vector.shape_cast %37 : vector<1x1x288x4xbf16> to vector<288x4xbf16>
    %c6 = arith.constant 6 : index
    %c0_42 = arith.constant 0 : index
    %c0_43 = arith.constant 0 : index
    %39 = vector.load %arg3[%c6, %c0_42, %c0_43] : memref<9x4x128xbf16, #tpu.memory_space<vmem>>, vector<1x4x128xbf16>
    %40 = vector.shape_cast %39 : vector<1x4x128xbf16> to vector<4x128xbf16>
    %cst_44 = arith.constant dense<0.000000e+00> : vector<288x128xf32>
    %41 = tpu.matmul %38, %40, %cst_44 {dimension_numbers = #tpu.dot_dimension_numbers<[1], [0], [0], [1], [0, 0, 1, 1], [], []>} : vector<288x4xbf16>, vector<4x128xbf16>, vector<288x128xf32> -> vector<288x128xf32>
    %42 = arith.addf %36, %41 : vector<288x128xf32>
    %c0_45 = arith.constant 0 : index
    %c0_46 = arith.constant 0 : index
    %c37 = arith.constant 37 : index
    %c0_47 = arith.constant 0 : index
    %43 = vector.load %arg2[%c0_45, %c0_46, %c37, %c0_47] : memref<1x1x326x4xbf16, #tpu.memory_space<vmem>>, vector<1x1x288x4xbf16>
    %44 = vector.shape_cast %43 : vector<1x1x288x4xbf16> to vector<288x4xbf16>
    %c7 = arith.constant 7 : index
    %c0_48 = arith.constant 0 : index
    %c0_49 = arith.constant 0 : index
    %45 = vector.load %arg3[%c7, %c0_48, %c0_49] : memref<9x4x128xbf16, #tpu.memory_space<vmem>>, vector<1x4x128xbf16>
    %46 = vector.shape_cast %45 : vector<1x4x128xbf16> to vector<4x128xbf16>
    %cst_50 = arith.constant dense<0.000000e+00> : vector<288x128xf32>
    %47 = tpu.matmul %44, %46, %cst_50 {dimension_numbers = #tpu.dot_dimension_numbers<[1], [0], [0], [1], [0, 0, 1, 1], [], []>} : vector<288x4xbf16>, vector<4x128xbf16>, vector<288x128xf32> -> vector<288x128xf32>
    %48 = arith.addf %42, %47 : vector<288x128xf32>
    %c0_51 = arith.constant 0 : index
    %c0_52 = arith.constant 0 : index
    %c38 = arith.constant 38 : index
    %c0_53 = arith.constant 0 : index
    %49 = vector.load %arg2[%c0_51, %c0_52, %c38, %c0_53] : memref<1x1x326x4xbf16, #tpu.memory_space<vmem>>, vector<1x1x288x4xbf16>
    %50 = vector.shape_cast %49 : vector<1x1x288x4xbf16> to vector<288x4xbf16>
    %c8 = arith.constant 8 : index
    %c0_54 = arith.constant 0 : index
    %c0_55 = arith.constant 0 : index
    %51 = vector.load %arg3[%c8, %c0_54, %c0_55] : memref<9x4x128xbf16, #tpu.memory_space<vmem>>, vector<1x4x128xbf16>
    %52 = vector.shape_cast %51 : vector<1x4x128xbf16> to vector<4x128xbf16>
    %cst_56 = arith.constant dense<0.000000e+00> : vector<288x128xf32>
    %53 = tpu.matmul %50, %52, %cst_56 {dimension_numbers = #tpu.dot_dimension_numbers<[1], [0], [0], [1], [0, 0, 1, 1], [], []>} : vector<288x4xbf16>, vector<4x128xbf16>, vector<288x128xf32> -> vector<288x128xf32>
    %54 = arith.addf %48, %53 : vector<288x128xf32>
    %c0_57 = arith.constant 0 : index
    %c0_58 = arith.constant 0 : index
    %55 = vector.load %arg4[%c0_57, %c0_58] : memref<2x128xf32, #tpu.memory_space<vmem>>, vector<1x128xf32>
    %c1_59 = arith.constant 1 : index
    %c0_60 = arith.constant 0 : index
    %56 = vector.load %arg4[%c1_59, %c0_60] : memref<2x128xf32, #tpu.memory_space<vmem>>, vector<1x128xf32>
    %57 = vector.broadcast %55 : vector<1x128xf32> to vector<288x128xf32>
    %58 = arith.mulf %54, %57 : vector<288x128xf32>
    %59 = vector.broadcast %56 : vector<1x128xf32> to vector<288x128xf32>
    %60 = arith.addf %58, %59 : vector<288x128xf32>
    %cst_61 = arith.constant 0.000000e+00 : f32
    %61 = vector.broadcast %cst_61 : f32 to vector<288x128xf32>
    %62 = arith.maximumf %60, %61 : vector<288x128xf32>
    %63 = arith.truncf %62 : vector<288x128xf32> to vector<288x128xbf16>
    %c0_62 = arith.constant 0 : index
    %c0_63 = arith.constant 0 : index
    %c0_64 = arith.constant 0 : index
    %c0_65 = arith.constant 0 : index
    %64 = vector.load %arg5[%c0_62, %c0_63, %c0_64, %c0_65] : memref<1x1x288x128xbf16, #tpu.memory_space<vmem>>, vector<1x1x288x128xbf16>
    %65 = vector.shape_cast %64 : vector<1x1x288x128xbf16> to vector<288x128xbf16>
    %66 = vector.shape_cast %63 : vector<288x128xbf16> to vector<1x1x288x128xbf16>
    tpu.vector_store %arg5[%c0_62, %c0_63, %c0_64, %c0_65], %66 {strides = array<i32>} : memref<1x1x288x128xbf16, #tpu.memory_space<vmem>>, vector<1x1x288x128xbf16>,
    return
  }
  func.func @transform_0(%arg0: i32, %arg1: i32) -> (i32, i32, i32, i32) {
    %c0_i32 = arith.constant 0 : i32
    %c0_i32_0 = arith.constant 0 : i32
    %c0_i32_1 = arith.constant 0 : i32
    return %arg0, %arg1, %c0_i32, %c0_i32_0 : i32, i32, i32, i32
  }
  func.func @transform_1(%arg0: i32, %arg1: i32) -> (i32, i32, i32) {
    %c0_i32 = arith.constant 0 : i32
    %c0_i32_0 = arith.constant 0 : i32
    %c0_i32_1 = arith.constant 0 : i32
    %c0_i32_2 = arith.constant 0 : i32
    return %c0_i32, %c0_i32_0, %c0_i32_1 : i32, i32, i32
  }
  func.func @transform_2(%arg0: i32, %arg1: i32) -> (i32, i32) {
    %c0_i32 = arith.constant 0 : i32
    %c0_i32_0 = arith.constant 0 : i32
    %c0_i32_1 = arith.constant 0 : i32
    return %c0_i32, %c0_i32_0 : i32, i32
  }
  func.func @transform_3(%arg0: i32, %arg1: i32) -> (i32, i32, i32, i32) {
    %c0_i32 = arith.constant 0 : i32
    %c0_i32_0 = arith.constant 0 : i32
    %c0_i32_1 = arith.constant 0 : i32
    return %arg0, %arg1, %c0_i32, %c0_i32_0 : i32, i32, i32, i32
  }
}

</mosaic_0001>

<llo_original>
// kernel: conv_layer_forward.3
$region0: #{conv_layer_forward.3}
  #allocation0 [shape = 'u32[]', space=smem, size = 0x4, offset = 0x4, fixed_abs, tag = 'smem constant byte address 0x4 - core index']
  #allocation1 [shape = 'u32[72,128]{1,0:T(1,128)}', space=vmem, size = 0x9000, scoped, tag = 'internal scratch']
  %s0 = inlined_call_operand.vmem [shape: bf16[2,1,326,4], index: 0, kind: input, shape index: {}]
  %s1 = inlined_call_operand.vmem [shape: bf16[9,4,128], index: 1, kind: input, shape index: {}]
  %s2 = inlined_call_operand.vmem [shape: f32[2,128], index: 2, kind: input, shape index: {}]
  %s3 = inlined_call_operand.vmem [shape: bf16[2,1,288,128], index: 3, kind: output, shape index: {}]
  %s4 = sld [smem:[#allocation0]]
  $region45: #{conv_layer_forward.3} parent=0
    _
  %s6 = ssub.s32 1, %s4
  %s7 = scalar_select 0, %s6, %s4
  loop: start=0, step=1, limit=4
  $region2: #{conv_layer_forward.3} parent=0 // loop_pre_header
    _
  $region3: #{conv_layer_forward.3} parent=0 // loop_header
    %s9 = sphi 0, %s13
    %p10 = scmp.ge.s32.totalorder %s9, 4
    %s16 = sphi 0, %s28
    %s17 = sphi 0, %s24
    %s18 = sphi 0, %s16
    %s19 = sphi 0, %s17
    %s20 = sphi 0, %s18
    %s21 = sphi 0, %s19
    %s33 = sphi 0, %s35
    %s36 = sphi 0, %s33
    %s37 = sphi 0, %s36
    %s53 = sphi 0, %s37
    %s57 = sphi 0, %s57
    %s59 = sphi 0, %s57
    %s60 = sphi 0, %s59
    %s74 = sphi 0, %s60
    %s78 = sphi 0, %s78
    %s80 = sphi 0, %s78
    %s81 = sphi 0, %s80
    %s95 = sphi 0, %s81
    %s103 = sphi 0, %s105
    %s106 = sphi 0, %s103
    %s107 = sphi 0, %s106
    %s123 = sphi 0, %s107
  $region4: #{conv_layer_forward.3} parent=0 // loop_header_branch
    %12 = sbr.rel (%p10) target = $region8
  $region5: #{conv_layer_forward.3} parent=0 // loop_body
    %s14 = ssub.s32 %s9, 1
    %s15 = ssub.s32 %s9, 2
    %s22 = sadd.s32 1, %s17
    %p23 = scmp.ge.s32.totalorder %s22, 1
    %s24 = scalar_select %p23, 0, %s22
    %s25 = sadd.s32 1, %s16
    %s26 = scalar_select %p23, %s25, %s16
    %p27 = scmp.ge.s32.totalorder %s26, 2
    %s28 = scalar_select %p27, 0, %s26
    %s29 = ssub.s32 %s16, %s28
    %s30 = ssub.s32 %s17, %s24
    %s31 = sor.u32 %s29, %s30
    %p32 = scmp.eq.s32.totalorder %s31, 0
    %s34 = sadd.s32 %s33, 1
    %s35 = scalar_select %p32, %s33, %s34
    %p38 = pneg %p32
    %p39 = scmp.eq.s32.totalorder %s9, 1
    %p40 = por %p38, %p39
    %p41 = scmp.ne.s32.totalorder %s33, %s36
    %p42 = scmp.eq.s32.totalorder %s9, 0
    %p43 = por %p41, %p42
    %p44 = scmp.ne.s32.totalorder %s33, %s36
    %p45 = scmp.eq.s32.totalorder %s14, 1
    %p46 = por %p44, %p45
    %p47 = scmp.ne.s32.totalorder %s36, %s37
    %p48 = scmp.eq.s32.totalorder %s14, 0
    %p49 = por %p47, %p48
    %p50 = scmp.ne.s32.totalorder %s36, %s37
    %p51 = scmp.eq.s32.totalorder %s15, 1
    %p52 = por %p50, %p51
    %p54 = scmp.ne.s32.totalorder %s37, %s53
    %p55 = scmp.eq.s32.totalorder %s15, 0
    %p56 = por %p54, %p55
    %s58 = sadd.s32 %s57, 1
    %p61 = scmp.eq.s32.totalorder %s9, 1
    %p62 = scmp.ne.s32.totalorder %s57, %s59
    %p63 = scmp.eq.s32.totalorder %s9, 0
    %p64 = por %p62, %p63
    %p65 = scmp.ne.s32.totalorder %s57, %s59
    %p66 = scmp.eq.s32.totalorder %s14, 1
    %p67 = por %p65, %p66
    %p68 = scmp.ne.s32.totalorder %s59, %s60
    %p69 = scmp.eq.s32.totalorder %s14, 0
    %p70 = por %p68, %p69
    %p71 = scmp.ne.s32.totalorder %s59, %s60
    %p72 = scmp.eq.s32.totalorder %s15, 1
    %p73 = por %p71, %p72
    %p75 = scmp.ne.s32.totalorder %s60, %s74
    %p76 = scmp.eq.s32.totalorder %s15, 0
    %p77 = por %p75, %p76
    %s79 = sadd.s32 %s78, 1
    %p82 = scmp.eq.s32.totalorder %s9, 1
    %p83 = scmp.ne.s32.totalorder %s78, %s80
    %p84 = scmp.eq.s32.totalorder %s9, 0
    %p85 = por %p83, %p84
    %p86 = scmp.ne.s32.totalorder %s78, %s80
    %p87 = scmp.eq.s32.totalorder %s14, 1
    %p88 = por %p86, %p87
    %p89 = scmp.ne.s32.totalorder %s80, %s81
    %p90 = scmp.eq.s32.totalorder %s14, 0
    %p91 = por %p89, %p90
    %p92 = scmp.ne.s32.totalorder %s80, %s81
    %p93 = scmp.eq.s32.totalorder %s15, 1
    %p94 = por %p92, %p93
    %p96 = scmp.ne.s32.totalorder %s81, %s95
    %p97 = scmp.eq.s32.totalorder %s15, 0
    %p98 = por %p96, %p97
    %s99 = ssub.s32 %s16, %s28
    %s100 = ssub.s32 %s17, %s24
    %s101 = sor.u32 %s99, %s100
    %p102 = scmp.eq.s32.totalorder %s101, 0
    %s104 = sadd.s32 %s103, 1
    %s105 = scalar_select %p102, %s103, %s104
    %p108 = pneg %p102
    %p109 = scmp.eq.s32.totalorder %s9, 1
    %p110 = por %p108, %p109
    %p111 = scmp.ne.s32.totalorder %s103, %s106
    %p112 = scmp.eq.s32.totalorder %s9, 0
    %p113 = por %p111, %p112
    %p114 = scmp.ne.s32.totalorder %s103, %s106
    %p115 = scmp.eq.s32.totalorder %s14, 1
    %p116 = por %p114, %p115
    %p117 = scmp.ne.s32.totalorder %s106, %s107
    %p118 = scmp.eq.s32.totalorder %s14, 0
    %p119 = por %p117, %p118
    %p120 = scmp.ne.s32.totalorder %s106, %s107
    %p121 = scmp.eq.s32.totalorder %s15, 1
    %p122 = por %p120, %p121
    %p124 = scmp.ne.s32.totalorder %s107, %s123
    %p125 = scmp.eq.s32.totalorder %s15, 0
    %p126 = por %p124, %p125
    %p127 = scmp.le.s32.totalorder 1, %s9
    %p128 = scmp.lt.s32.totalorder %s9, 3
    %p129 = pnand %p127, %p128
    %p130 = pneg %p129
    // Predicated region
    $region9: #{conv_layer_forward.3} parent=5 // pred_check
      _
    $region10: #{conv_layer_forward.3} parent=5 // pred_check_branch
      %132 = sbr.rel (%p129) target = $region12
    $region11: #{conv_layer_forward.3} parent=5 // pred_region
      %s133 = ssub.s32 %s9, 1
      // Predicated region
      $region13: #{conv_layer_forward.3} parent=11 // pred_check
        %p134 = pneg %p70
      $region14: #{conv_layer_forward.3} parent=11 // pred_check_branch
        %136 = sbr.rel (%p134) target = $region16
      $region15: #{conv_layer_forward.3} parent=11 // pred_region
        _
      $region16: #{conv_layer_forward.3} parent=11 // pred_fallthru
        _
      // Predicated region
      $region17: #{conv_layer_forward.3} parent=11 // pred_check
        %p137 = pneg %p91
      $region18: #{conv_layer_forward.3} parent=11 // pred_check_branch
        %139 = sbr.rel (%p137) target = $region20
      $region19: #{conv_layer_forward.3} parent=11 // pred_region
        _
      $region20: #{conv_layer_forward.3} parent=11 // pred_fallthru
        _
    $region12: #{conv_layer_forward.3} parent=5 // pred_fallthru
      _
    %p140 = scmp.lt.s32.totalorder %s9, 2
    // Predicated region
    $region21: #{conv_layer_forward.3} parent=5 // pred_check
      %p141 = pneg %p140
    $region22: #{conv_layer_forward.3} parent=5 // pred_check_branch
      %143 = sbr.rel (%p141) target = $region24
    $region23: #{conv_layer_forward.3} parent=5 // pred_region
      // Predicated region
      $region25: #{conv_layer_forward.3} parent=23 // pred_check
        %p144 = pneg %p43
      $region26: #{conv_layer_forward.3} parent=23 // pred_check_branch
        %146 = sbr.rel (%p144) target = $region28
      $region27: #{conv_layer_forward.3} parent=23 // pred_region
        %p147 = scmp.lt.s32.totalorder %s16, 1
        %s148 = scalar_select %p147, %s16, 1
        %p149 = scmp.lt.s32.totalorder %s17, 0
        %s150 = scalar_select %p149, %s17, 0
        %s151 = smul.addr %s150, 41
        %s152 = smul.addr %s148, 41
        %s153 = sadd.s32 %s151, %s152
        %s154 = smul.addr %s153, 4
        %s155 = scalar_lea.vmem %s0, %s154
      $region28: #{conv_layer_forward.3} parent=23 // pred_fallthru
        _
    $region24: #{conv_layer_forward.3} parent=5 // pred_fallthru
      _
    %p156 = scmp.le.s32.totalorder 1, %s9
    %p157 = scmp.lt.s32.totalorder %s9, 3
    %p158 = pnand %p156, %p157
    %p159 = pneg %p158
    // Predicated region
    $region29: #{conv_layer_forward.3} parent=5 // pred_check
      _
    $region30: #{conv_layer_forward.3} parent=5 // pred_check_branch
      %161 = sbr.rel (%p158) target = $region32
    $region31: #{conv_layer_forward.3} parent=5 // pred_region
      %s162 = ssub.s32 %s9, 1
      %p163 = scmp.lt.s32.totalorder %s18, 1
      %s164 = scalar_select %p163, %s18, 1
      %p165 = scmp.lt.s32.totalorder %s19, 0
      %s166 = scalar_select %p165, %s19, 0
      %s167 = smul.addr %s166, 41
      %s168 = smul.addr %s164, 41
      %s169 = sadd.s32 %s167, %s168
      %s170 = smul.addr %s169, 4
      %s171 = scalar_lea.vmem %s0, %s170
      %p172 = pneg %p49
      %p173 = pneg %p46
      %p174 = pneg %p70
      %p175 = pneg %p67
      %p176 = pneg %p91
      %p177 = pneg %p88
      %p178 = pneg %p119
      %p179 = pneg %p116
      %p180 = scmp.lt.s32.totalorder %s18, 1
      %s181 = scalar_select %p180, %s18, 1
      %p182 = scmp.lt.s32.totalorder %s19, 0
      %s183 = scalar_select %p182, %s19, 0
      %s184 = smul.addr %s183, 36
      %s185 = smul.addr %s181, 36
      %s186 = sadd.s32 %s184, %s185
      %s187 = smul.addr %s186, 4
      %s188 = scalar_lea.vmem %s3, %s187
      %p189 = scmp.lt.s32.totalorder %s18, 1
      %s190 = scalar_select %p189, %s18, 1
      %p191 = scmp.lt.s32.totalorder %s19, 0
      %s192 = scalar_select %p191, %s19, 0
      %s193 = smul.addr %s192, 41
      %s194 = smul.addr %s190, 41
      %s195 = sadd.s32 %s193, %s194
      %s196 = smul.addr %s195, 4
      %s197 = scalar_lea.vmem %s0, %s196
      %p198 = scmp.lt.s32.totalorder %s18, 1
      %s199 = scalar_select %p198, %s18, 1
      %p200 = scmp.lt.s32.totalorder %s19, 0
      %s201 = scalar_select %p200, %s19, 0
      %s202 = smul.addr %s201, 36
      %s203 = smul.addr %s199, 36
      %s204 = sadd.s32 %s202, %s203
      %s205 = smul.addr %s204, 4
      %s206 = scalar_lea.vmem %s3, %s205
      %v208 = vld [vmem:[%s197] sm:$0xf]
      %v209 = vld [vmem:[%s197 + $0x4] sm:$0xf]
      %v210 = vld [vmem:[%s197 + $0x8] sm:$0xf]
      %v211 = vld [vmem:[%s197 + $0xc] sm:$0xf]
      %v212 = vld [vmem:[%s197 + $0x10] sm:$0xf]
      %v213 = vld [vmem:[%s197 + $0x14] sm:$0xf]
      %v214 = vld [vmem:[%s197 + $0x18] sm:$0xf]
      %v215 = vld [vmem:[%s197 + $0x1c] sm:$0xf]
      %v216 = vld [vmem:[%s197 + $0x20] sm:$0xf]
      %v217 = vld [vmem:[%s197 + $0x24] sm:$0xf]
      %v218 = vld [vmem:[%s197 + $0x28] sm:$0xf]
      %v219 = vld [vmem:[%s197 + $0x2c] sm:$0xf]
      %v220 = vld [vmem:[%s197 + $0x30] sm:$0xf]
      %v221 = vld [vmem:[%s197 + $0x34] sm:$0xf]
      %v222 = vld [vmem:[%s197 + $0x38] sm:$0xf]
      %v223 = vld [vmem:[%s197 + $0x3c] sm:$0xf]
      %v224 = vld [vmem:[%s197 + $0x40] sm:$0xf]
      %v225 = vld [vmem:[%s197 + $0x44] sm:$0xf]
      %v226 = vld [vmem:[%s197 + $0x48] sm:$0xf]
      %v227 = vld [vmem:[%s197 + $0x4c] sm:$0xf]
      %v228 = vld [vmem:[%s197 + $0x50] sm:$0xf]
      %v229 = vld [vmem:[%s197 + $0x54] sm:$0xf]
      %v230 = vld [vmem:[%s197 + $0x58] sm:$0xf]
      %v231 = vld [vmem:[%s197 + $0x5c] sm:$0xf]
      %v232 = vld [vmem:[%s197 + $0x60] sm:$0xf]
      %v233 = vld [vmem:[%s197 + $0x64] sm:$0xf]
      %v234 = vld [vmem:[%s197 + $0x68] sm:$0xf]
      %v235 = vld [vmem:[%s197 + $0x6c] sm:$0xf]
      %v236 = vld [vmem:[%s197 + $0x70] sm:$0xf]
      %v237 = vld [vmem:[%s197 + $0x74] sm:$0xf]
      %v238 = vld [vmem:[%s197 + $0x78] sm:$0xf]
      %v239 = vld [vmem:[%s197 + $0x7c] sm:$0xf]
      %v240 = vld [vmem:[%s197 + $0x80] sm:$0xf]
      %v241 = vld [vmem:[%s197 + $0x84] sm:$0xf]
      %v242 = vld [vmem:[%s197 + $0x88] sm:$0xf]
      %v243 = vld [vmem:[%s197 + $0x8c] sm:$0xf]
      %v244 = vld [vmem:[%s1] sm:$0x3]
      %v245 = vld [vmem:[%s197 + $0x90] sm:$0x1]
      %s246 = scalar_lea.vmem %s1, 2
      %v247 = vld [vmem:[%s246] sm:$0x3]
      %v285 = vunpack.c.l.b16 %v208
      %v286 = vunpack.c.l.b16 %v209
      %v287 = vunpack.c.l.b16 %v210
      %v288 = vunpack.c.l.b16 %v211
      %v289 = vunpack.c.l.b16 %v212
      %v290 = vunpack.c.l.b16 %v213
      %v291 = vunpack.c.l.b16 %v214
      %v292 = vunpack.c.l.b16 %v215
      %v293 = vunpack.c.l.b16 %v216
      %v294 = vunpack.c.l.b16 %v217
      %v295 = vunpack.c.l.b16 %v218
      %v296 = vunpack.c.l.b16 %v219
      %v297 = vunpack.c.l.b16 %v220
      %v298 = vunpack.c.l.b16 %v221
      %v299 = vunpack.c.l.b16 %v222
      %v300 = vunpack.c.l.b16 %v223
      %v301 = vunpack.c.l.b16 %v224
      %v302 = vunpack.c.l.b16 %v225
      %v303 = vunpack.c.l.b16 %v226
      %v304 = vunpack.c.l.b16 %v227
      %v305 = vunpack.c.l.b16 %v228
      %v306 = vunpack.c.l.b16 %v229
      %v307 = vunpack.c.l.b16 %v230
      %v308 = vunpack.c.l.b16 %v231
      %v309 = vunpack.c.l.b16 %v232
      %v310 = vunpack.c.l.b16 %v233
      %v311 = vunpack.c.l.b16 %v234
      %v312 = vunpack.c.l.b16 %v235
      %v313 = vunpack.c.l.b16 %v236
      %v314 = vunpack.c.l.b16 %v237
      %v315 = vunpack.c.l.b16 %v238
      %v316 = vunpack.c.l.b16 %v239
      %v317 = vunpack.c.l.b16 %v240
      %v318 = vunpack.c.l.b16 %v241
      %v319 = vunpack.c.l.b16 %v242
      %v320 = vunpack.c.l.b16 %v243
      %v321 = vunpack.c.l.b16 %v245
      %v322 = vpack.c.b16 %v286, %v285
      %v323 = vpack.c.b16 %v288, %v287
      %v324 = vpack.c.b16 %v290, %v289
      %v325 = vpack.c.b16 %v292, %v291
      %v326 = vpack.c.b16 %v294, %v293
      %v327 = vpack.c.b16 %v296, %v295
      %v328 = vpack.c.b16 %v298, %v297
      %v329 = vpack.c.b16 %v300, %v299
      %v330 = vpack.c.b16 %v302, %v301
      %v331 = vpack.c.b16 %v304, %v303
      %v332 = vpack.c.b16 %v306, %v305
      %v333 = vpack.c.b16 %v308, %v307
      %v334 = vpack.c.b16 %v310, %v309
      %v335 = vpack.c.b16 %v312, %v311
      %v336 = vpack.c.b16 %v314, %v313
      %v337 = vpack.c.b16 %v316, %v315
      %v338 = vpack.c.b16 %v318, %v317
      %v339 = vpack.c.b16 %v320, %v319
      %v340 = vpack.c.b16 %v321, %v321
      %vm341 = vsmask.f32 7424
      %v343 = vshrl.u32 %v322, 16
      %v345 = vshll.u32 %v322, 16
      %v347 = vrot.slane %v345, 1
      %v348 = vor.u32 %v343, %v347
      %v350 = vshll.u32 %v323, 16
      %v352 = vrot.slane %v350, 1
      %v353 = vsel %vm341, %v348, %v352
      %v354 = vshrl.u32 %v323, 16
      %v356 = vor.u32 %v354, %v352
      %v358 = vshll.u32 %v324, 16
      %v360 = vrot.slane %v358, 1
      %v361 = vsel %vm341, %v356, %v360
      %v362 = vshrl.u32 %v324, 16
      %v364 = vor.u32 %v362, %v360
      %v366 = vshll.u32 %v325, 16
      %v368 = vrot.slane %v366, 1
      %v369 = vsel %vm341, %v364, %v368
      %v370 = vshrl.u32 %v325, 16
      %v372 = vor.u32 %v370, %v368
      %v374 = vshll.u32 %v326, 16
      %v376 = vrot.slane %v374, 1
      %v377 = vsel %vm341, %v372, %v376
      %v378 = vshrl.u32 %v326, 16
      %v380 = vor.u32 %v378, %v376
      %v382 = vshll.u32 %v327, 16
      %v384 = vrot.slane %v382, 1
      %v385 = vsel %vm341, %v380, %v384
      %v386 = vshrl.u32 %v327, 16
      %v388 = vor.u32 %v386, %v384
      %v390 = vshll.u32 %v328, 16
      %v392 = vrot.slane %v390, 1
      %v393 = vsel %vm341, %v388, %v392
      %v394 = vshrl.u32 %v328, 16
      %v396 = vor.u32 %v394, %v392
      %v398 = vshll.u32 %v329, 16
      %v400 = vrot.slane %v398, 1
      %v401 = vsel %vm341, %v396, %v400
      %v402 = vshrl.u32 %v329, 16
      %v404 = vor.u32 %v402, %v400
      %v406 = vshll.u32 %v330, 16
      %v408 = vrot.slane %v406, 1
      %v409 = vsel %vm341, %v404, %v408
      %v410 = vshrl.u32 %v330, 16
      %v412 = vor.u32 %v410, %v408
      %v414 = vshll.u32 %v331, 16
      %v416 = vrot.slane %v414, 1
      %v417 = vsel %vm341, %v412, %v416
      %v418 = vshrl.u32 %v331, 16
      %v420 = vor.u32 %v418, %v416
      %v422 = vshll.u32 %v332, 16
      %v424 = vrot.slane %v422, 1
      %v425 = vsel %vm341, %v420, %v424
      %v426 = vshrl.u32 %v332, 16
      %v428 = vor.u32 %v426, %v424
      %v430 = vshll.u32 %v333, 16
      %v432 = vrot.slane %v430, 1
      %v433 = vsel %vm341, %v428, %v432
      %v434 = vshrl.u32 %v333, 16
      %v436 = vor.u32 %v434, %v432
      %v438 = vshll.u32 %v334, 16
      %v440 = vrot.slane %v438, 1
      %v441 = vsel %vm341, %v436, %v440
      %v442 = vshrl.u32 %v334, 16
      %v444 = vor.u32 %v442, %v440
      %v446 = vshll.u32 %v335, 16
      %v448 = vrot.slane %v446, 1
      %v449 = vsel %vm341, %v444, %v448
      %v450 = vshrl.u32 %v335, 16
      %v452 = vor.u32 %v450, %v448
      %v454 = vshll.u32 %v336, 16
      %v456 = vrot.slane %v454, 1
      %v457 = vsel %vm341, %v452, %v456
      %v458 = vshrl.u32 %v336, 16
      %v460 = vor.u32 %v458, %v456
      %v462 = vshll.u32 %v337, 16
      %v464 = vrot.slane %v462, 1
      %v465 = vsel %vm341, %v460, %v464
      %v466 = vshrl.u32 %v337, 16
      %v468 = vor.u32 %v466, %v464
      %v470 = vshll.u32 %v338, 16
      %v472 = vrot.slane %v470, 1
      %v473 = vsel %vm341, %v468, %v472
      %v474 = vshrl.u32 %v338, 16
      %v476 = vor.u32 %v474, %v472
      %v478 = vshll.u32 %v339, 16
      %v480 = vrot.slane %v478, 1
      %v481 = vsel %vm341, %v476, %v480
      %v482 = vshrl.u32 %v339, 16
      %v484 = vor.u32 %v482, %v480
      %v486 = vshll.u32 %v340, 16
      %v488 = vrot.slane %v486, 1
      %v489 = vsel %vm341, %v484, %v488
      %vm490 = vcmask 31744
      %v492 = vsel %vm490, %v353, 0
      %v495 = vsel %vm490, %v361, 0
      %v498 = vsel %vm490, %v369, 0
      %v501 = vsel %vm490, %v377, 0
      %v504 = vsel %vm490, %v385, 0
      %v507 = vsel %vm490, %v393, 0
      %v510 = vsel %vm490, %v401, 0
      %v513 = vsel %vm490, %v409, 0
      %v516 = vsel %vm490, %v417, 0
      %v519 = vsel %vm490, %v425, 0
      %v522 = vsel %vm490, %v433, 0
      %v525 = vsel %vm490, %v441, 0
      %v528 = vsel %vm490, %v449, 0
      %v531 = vsel %vm490, %v457, 0
      %v534 = vsel %vm490, %v465, 0
      %v537 = vsel %vm490, %v473, 0
      %v540 = vsel %vm490, %v481, 0
      %v543 = vsel %vm490, %v489, 0
      %vm545 = vcmask 1041408
      %v547 = vsel %vm545, %v247, 0
      %549 = vmatpush.bf16.msra.mxu0 0
      %550 = vmatpush.bf16.msra.mxu0 0
      %551 = vmatpush.bf16.msra.mxu0 0
      %552 = vmatpush.bf16.msra.mxu0 0
      %553 = vmatpush.bf16.msra.mxu0 0
      %554 = vmatpush.bf16.msra.mxu0 0
      %555 = vmatpush.bf16.msra.mxu0 0
      %556 = vmatpush.bf16.msra.mxu0 %v547
      %557 = vmatmul.bf16.gmra.mxu0 %v492
      %v558 = vpop.f32.mrf.mxu0
      %v559 = vadd.f32 0.0, %v558
      %v560 = vpop.f32.mrf.mxu0
      %v561 = vadd.f32 0.0, %v560
      %562 = vmatmul.bf16.gmra.mxu0 %v495
      %v563 = vpop.f32.mrf.mxu0
      %v564 = vadd.f32 0.0, %v563
      %v565 = vpop.f32.mrf.mxu0
      %v566 = vadd.f32 0.0, %v565
      %567 = vmatmul.bf16.gmra.mxu0 %v498
      %v568 = vpop.f32.mrf.mxu0
      %v569 = vadd.f32 0.0, %v568
      %v570 = vpop.f32.mrf.mxu0
      %v571 = vadd.f32 0.0, %v570
      %572 = vmatmul.bf16.gmra.mxu0 %v501
      %v573 = vpop.f32.mrf.mxu0
      %v574 = vadd.f32 0.0, %v573
      %v575 = vpop.f32.mrf.mxu0
      %v576 = vadd.f32 0.0, %v575
      %577 = vmatmul.bf16.gmra.mxu0 %v504
      %v578 = vpop.f32.mrf.mxu0
      %v579 = vadd.f32 0.0, %v578
      %v580 = vpop.f32.mrf.mxu0
      %v581 = vadd.f32 0.0, %v580
      %582 = vmatmul.bf16.gmra.mxu0 %v507
      %v583 = vpop.f32.mrf.mxu0
      %v584 = vadd.f32 0.0, %v583
      %v585 = vpop.f32.mrf.mxu0
      %v586 = vadd.f32 0.0, %v585
      %587 = vmatmul.bf16.gmra.mxu0 %v510
      %v588 = vpop.f32.mrf.mxu0
      %v589 = vadd.f32 0.0, %v588
      %v590 = vpop.f32.mrf.mxu0
      %v591 = vadd.f32 0.0, %v590
      %592 = vmatmul.bf16.gmra.mxu0 %v513
      %v593 = vpop.f32.mrf.mxu0
      %v594 = vadd.f32 0.0, %v593
      %v595 = vpop.f32.mrf.mxu0
      %v596 = vadd.f32 0.0, %v595
      %597 = vmatmul.bf16.gmra.mxu0 %v516
      %v598 = vpop.f32.mrf.mxu0
      %v599 = vadd.f32 0.0, %v598
      %v600 = vpop.f32.mrf.mxu0
      %v601 = vadd.f32 0.0, %v600
      %602 = vmatmul.bf16.gmra.mxu0 %v519
      %v603 = vpop.f32.mrf.mxu0
      %v604 = vadd.f32 0.0, %v603
      %v605 = vpop.f32.mrf.mxu0
      %v606 = vadd.f32 0.0, %v605
      %607 = vmatmul.bf16.gmra.mxu0 %v522
      %v608 = vpop.f32.mrf.mxu0
      %v609 = vadd.f32 0.0, %v608
      %v610 = vpop.f32.mrf.mxu0
      %v611 = vadd.f32 0.0, %v610
      %612 = vmatmul.bf16.gmra.mxu0 %v525
      %v613 = vpop.f32.mrf.mxu0
      %v614 = vadd.f32 0.0, %v613
      %v615 = vpop.f32.mrf.mxu0
      %v616 = vadd.f32 0.0, %v615
      %617 = vmatmul.bf16.gmra.mxu0 %v528
      %v618 = vpop.f32.mrf.mxu0
      %v619 = vadd.f32 0.0, %v618
      %v620 = vpop.f32.mrf.mxu0
      %v621 = vadd.f32 0.0, %v620
      %622 = vmatmul.bf16.gmra.mxu0 %v531
      %v623 = vpop.f32.mrf.mxu0
      %v624 = vadd.f32 0.0, %v623
      %v625 = vpop.f32.mrf.mxu0
      %v626 = vadd.f32 0.0, %v625
      %627 = vmatmul.bf16.gmra.mxu0 %v534
      %v628 = vpop.f32.mrf.mxu0
      %v629 = vadd.f32 0.0, %v628
      %v630 = vpop.f32.mrf.mxu0
      %v631 = vadd.f32 0.0, %v630
      %632 = vmatmul.bf16.gmra.mxu0 %v537
      %v633 = vpop.f32.mrf.mxu0
      %v634 = vadd.f32 0.0, %v633
      %v635 = vpop.f32.mrf.mxu0
      %v636 = vadd.f32 0.0, %v635
      %637 = vmatmul.bf16.gmra.mxu0 %v540
      %v638 = vpop.f32.mrf.mxu0
      %v639 = vadd.f32 0.0, %v638
      %v640 = vpop.f32.mrf.mxu0
      %v641 = vadd.f32 0.0, %v640
      %642 = vmatmul.bf16.gmra.mxu0 %v543
      %v643 = vpop.f32.mrf.mxu0
      %v644 = vadd.f32 0.0, %v643
      %v645 = vpop.f32.mrf.mxu0
      %v646 = vadd.f32 0.0, %v645
      %647 = vdwg.mxu0
      %v648 = vsel %vm490, %v322, 0
      %v650 = vsel %vm490, %v323, 0
      %v652 = vsel %vm490, %v324, 0
      %v654 = vsel %vm490, %v325, 0
      %v656 = vsel %vm490, %v326, 0
      %v658 = vsel %vm490, %v327, 0
      %v660 = vsel %vm490, %v328, 0
      %v662 = vsel %vm490, %v329, 0
      %v664 = vsel %vm490, %v330, 0
      %v666 = vsel %vm490, %v331, 0
      %v668 = vsel %vm490, %v332, 0
      %v670 = vsel %vm490, %v333, 0
      %v672 = vsel %vm490, %v334, 0
      %v674 = vsel %vm490, %v335, 0
      %v676 = vsel %vm490, %v336, 0
      %v678 = vsel %vm490, %v337, 0
      %v680 = vsel %vm490, %v338, 0
      %v682 = vsel %vm490, %v339, 0
      %v685 = vsel %vm545, %v244, 0
      %687 = vmatpush.bf16.msra.mxu0 0
      %688 = vmatpush.bf16.msra.mxu0 0
      %689 = vmatpush.bf16.msra.mxu0 0
      %690 = vmatpush.bf16.msra.mxu0 0
      %691 = vmatpush.bf16.msra.mxu0 0
      %692 = vmatpush.bf16.msra.mxu0 0
      %693 = vmatpush.bf16.msra.mxu0 0
      %694 = vmatpush.bf16.msra.mxu0 %v685
      %695 = vmatmul.bf16.gmra.mxu0 %v648
      %v696 = vpop.f32.mrf.mxu0
      %v697 = vadd.f32 %v559, %v696
      %v698 = vpop.f32.mrf.mxu0
      %v699 = vadd.f32 %v561, %v698
      %700 = vmatmul.bf16.gmra.mxu0 %v650
      %v701 = vpop.f32.mrf.mxu0
      %v702 = vadd.f32 %v564, %v701
      %v703 = vpop.f32.mrf.mxu0
      %v704 = vadd.f32 %v566, %v703
      %705 = vmatmul.bf16.gmra.mxu0 %v652
      %v706 = vpop.f32.mrf.mxu0
      %v707 = vadd.f32 %v569, %v706
      %v708 = vpop.f32.mrf.mxu0
      %v709 = vadd.f32 %v571, %v708
      %710 = vmatmul.bf16.gmra.mxu0 %v654
      %v711 = vpop.f32.mrf.mxu0
      %v712 = vadd.f32 %v574, %v711
      %v713 = vpop.f32.mrf.mxu0
      %v714 = vadd.f32 %v576, %v713
      %715 = vmatmul.bf16.gmra.mxu0 %v656
      %v716 = vpop.f32.mrf.mxu0
      %v717 = vadd.f32 %v579, %v716
      %v718 = vpop.f32.mrf.mxu0
      %v719 = vadd.f32 %v581, %v718
      %720 = vmatmul.bf16.gmra.mxu0 %v658
      %v721 = vpop.f32.mrf.mxu0
      %v722 = vadd.f32 %v584, %v721
      %v723 = vpop.f32.mrf.mxu0
      %v724 = vadd.f32 %v586, %v723
      %725 = vmatmul.bf16.gmra.mxu0 %v660
      %v726 = vpop.f32.mrf.mxu0
      %v727 = vadd.f32 %v589, %v726
      %v728 = vpop.f32.mrf.mxu0
      %v729 = vadd.f32 %v591, %v728
      %730 = vmatmul.bf16.gmra.mxu0 %v662
      %v731 = vpop.f32.mrf.mxu0
      %v732 = vadd.f32 %v594, %v731
      %v733 = vpop.f32.mrf.mxu0
      %v734 = vadd.f32 %v596, %v733
      %735 = vmatmul.bf16.gmra.mxu0 %v664
      %v736 = vpop.f32.mrf.mxu0
      %v737 = vadd.f32 %v599, %v736
      %v738 = vpop.f32.mrf.mxu0
      %v739 = vadd.f32 %v601, %v738
      %740 = vmatmul.bf16.gmra.mxu0 %v666
      %v741 = vpop.f32.mrf.mxu0
      %v742 = vadd.f32 %v604, %v741
      %v743 = vpop.f32.mrf.mxu0
      %v744 = vadd.f32 %v606, %v743
      %745 = vmatmul.bf16.gmra.mxu0 %v668
      %v746 = vpop.f32.mrf.mxu0
      %v747 = vadd.f32 %v609, %v746
      %v748 = vpop.f32.mrf.mxu0
      %v749 = vadd.f32 %v611, %v748
      %750 = vmatmul.bf16.gmra.mxu0 %v670
      %v751 = vpop.f32.mrf.mxu0
      %v752 = vadd.f32 %v614, %v751
      %v753 = vpop.f32.mrf.mxu0
      %v754 = vadd.f32 %v616, %v753
      %755 = vmatmul.bf16.gmra.mxu0 %v672
      %v756 = vpop.f32.mrf.mxu0
      %v757 = vadd.f32 %v619, %v756
      %v758 = vpop.f32.mrf.mxu0
      %v759 = vadd.f32 %v621, %v758
      %760 = vmatmul.bf16.gmra.mxu0 %v674
      %v761 = vpop.f32.mrf.mxu0
      %v762 = vadd.f32 %v624, %v761
      %v763 = vpop.f32.mrf.mxu0
      %v764 = vadd.f32 %v626, %v763
      %765 = vmatmul.bf16.gmra.mxu0 %v676
      %v766 = vpop.f32.mrf.mxu0
      %v767 = vadd.f32 %v629, %v766
      %v768 = vpop.f32.mrf.mxu0
      %v769 = vadd.f32 %v631, %v768
      %770 = vmatmul.bf16.gmra.mxu0 %v678
      %v771 = vpop.f32.mrf.mxu0
      %v772 = vadd.f32 %v634, %v771
      %v773 = vpop.f32.mrf.mxu0
      %v774 = vadd.f32 %v636, %v773
      %775 = vmatmul.bf16.gmra.mxu0 %v680
      %v776 = vpop.f32.mrf.mxu0
      %v777 = vadd.f32 %v639, %v776
      %v778 = vpop.f32.mrf.mxu0
      %v779 = vadd.f32 %v641, %v778
      %780 = vmatmul.bf16.gmra.mxu0 %v682
      %v781 = vpop.f32.mrf.mxu0
      %v782 = vadd.f32 %v644, %v781
      %v783 = vpop.f32.mrf.mxu0
      %v784 = vadd.f32 %v646, %v783
      %785 = vdwg.mxu0
      %v786 = vld [vmem:[%s197] sm:$0xe]
      %s787 = scalar_lea.vmem %s1, 4
      %v788 = vld [vmem:[%s787] sm:$0x3]
      %v790 = vunpack.c.l.b16 %v786
      %v791 = vpack.c.b16 %v286, %v790
      %vm792 = vcmask 1046528
      %v793 = vrot.slane %v791, 1
      %v794 = vrot.slane %v323, 1
      %v795 = vsel %vm792, %v793, %v794
      %v796 = vrot.slane %v324, 1
      %v797 = vsel %vm792, %v794, %v796
      %v798 = vrot.slane %v325, 1
      %v799 = vsel %vm792, %v796, %v798
      %v800 = vrot.slane %v326, 1
      %v801 = vsel %vm792, %v798, %v800
      %v802 = vrot.slane %v327, 1
      %v803 = vsel %vm792, %v800, %v802
      %v804 = vrot.slane %v328, 1
      %v805 = vsel %vm792, %v802, %v804
      %v806 = vrot.slane %v329, 1
      %v807 = vsel %vm792, %v804, %v806
      %v808 = vrot.slane %v330, 1
      %v809 = vsel %vm792, %v806, %v808
      %v810 = vrot.slane %v331, 1
      %v811 = vsel %vm792, %v808, %v810
      %v812 = vrot.slane %v332, 1
      %v813 = vsel %vm792, %v810, %v812
      %v814 = vrot.slane %v333, 1
      %v815 = vsel %vm792, %v812, %v814
      %v816 = vrot.slane %v334, 1
      %v817 = vsel %vm792, %v814, %v816
      %v818 = vrot.slane %v335, 1
      %v819 = vsel %vm792, %v816, %v818
      %v820 = vrot.slane %v336, 1
      %v821 = vsel %vm792, %v818, %v820
      %v822 = vrot.slane %v337, 1
      %v823 = vsel %vm792, %v820, %v822
      %v824 = vrot.slane %v338, 1
      %v825 = vsel %vm792, %v822, %v824
      %v826 = vrot.slane %v339, 1
      %v827 = vsel %vm792, %v824, %v826
      %v828 = vrot.slane %v340, 1
      %v829 = vsel %vm792, %v826, %v828
      %v831 = vsel %vm490, %v795, 0
      %v834 = vsel %vm490, %v797, 0
      %v837 = vsel %vm490, %v799, 0
      %v840 = vsel %vm490, %v801, 0
      %v843 = vsel %vm490, %v803, 0
      %v846 = vsel %vm490, %v805, 0
      %v849 = vsel %vm490, %v807, 0
      %v852 = vsel %vm490, %v809, 0
      %v855 = vsel %vm490, %v811, 0
      %v858 = vsel %vm490, %v813, 0
      %v861 = vsel %vm490, %v815, 0
      %v864 = vsel %vm490, %v817, 0
      %v867 = vsel %vm490, %v819, 0
      %v870 = vsel %vm490, %v821, 0
      %v873 = vsel %vm490, %v823, 0
      %v876 = vsel %vm490, %v825, 0
      %v879 = vsel %vm490, %v827, 0
      %v882 = vsel %vm490, %v829, 0
      %v885 = vsel %vm545, %v788, 0
      %887 = vmatpush.bf16.msra.mxu0 0
      %888 = vmatpush.bf16.msra.mxu0 0
      %889 = vmatpush.bf16.msra.mxu0 0
      %890 = vmatpush.bf16.msra.mxu0 0
      %891 = vmatpush.bf16.msra.mxu0 0
      %892 = vmatpush.bf16.msra.mxu0 0
      %893 = vmatpush.bf16.msra.mxu0 0
      %894 = vmatpush.bf16.msra.mxu0 %v885
      %895 = vmatmul.bf16.gmra.mxu0 %v831
      %v896 = vpop.f32.mrf.mxu0
      %v897 = vadd.f32 0.0, %v896
      %v898 = vpop.f32.mrf.mxu0
      %v899 = vadd.f32 0.0, %v898
      %900 = vmatmul.bf16.gmra.mxu0 %v834
      %v901 = vpop.f32.mrf.mxu0
      %v902 = vadd.f32 0.0, %v901
      %v903 = vpop.f32.mrf.mxu0
      %v904 = vadd.f32 0.0, %v903
      %905 = vmatmul.bf16.gmra.mxu0 %v837
      %v906 = vpop.f32.mrf.mxu0
      %v907 = vadd.f32 0.0, %v906
      %v908 = vpop.f32.mrf.mxu0
      %v909 = vadd.f32 0.0, %v908
      %910 = vmatmul.bf16.gmra.mxu0 %v840
      %v911 = vpop.f32.mrf.mxu0
      %v912 = vadd.f32 0.0, %v911
      %v913 = vpop.f32.mrf.mxu0
      %v914 = vadd.f32 0.0, %v913
      %915 = vmatmul.bf16.gmra.mxu0 %v843
      %v916 = vpop.f32.mrf.mxu0
      %v917 = vadd.f32 0.0, %v916
      %v918 = vpop.f32.mrf.mxu0
      %v919 = vadd.f32 0.0, %v918
      %920 = vmatmul.bf16.gmra.mxu0 %v846
      %v921 = vpop.f32.mrf.mxu0
      %v922 = vadd.f32 0.0, %v921
      %v923 = vpop.f32.mrf.mxu0
      %v924 = vadd.f32 0.0, %v923
      %925 = vmatmul.bf16.gmra.mxu0 %v849
      %v926 = vpop.f32.mrf.mxu0
      %v927 = vadd.f32 0.0, %v926
      %v928 = vpop.f32.mrf.mxu0
      %v929 = vadd.f32 0.0, %v928
      %930 = vmatmul.bf16.gmra.mxu0 %v852
      %v931 = vpop.f32.mrf.mxu0
      %v932 = vadd.f32 0.0, %v931
      %v933 = vpop.f32.mrf.mxu0
      %v934 = vadd.f32 0.0, %v933
      %935 = vmatmul.bf16.gmra.mxu0 %v855
      %v936 = vpop.f32.mrf.mxu0
      %v937 = vadd.f32 0.0, %v936
      %v938 = vpop.f32.mrf.mxu0
      %v939 = vadd.f32 0.0, %v938
      %940 = vmatmul.bf16.gmra.mxu0 %v858
      %v941 = vpop.f32.mrf.mxu0
      %v942 = vadd.f32 0.0, %v941
      %v943 = vpop.f32.mrf.mxu0
      %v944 = vadd.f32 0.0, %v943
      %945 = vmatmul.bf16.gmra.mxu0 %v861
      %v946 = vpop.f32.mrf.mxu0
      %v947 = vadd.f32 0.0, %v946
      %v948 = vpop.f32.mrf.mxu0
      %v949 = vadd.f32 0.0, %v948
      %950 = vmatmul.bf16.gmra.mxu0 %v864
      %v951 = vpop.f32.mrf.mxu0
      %v952 = vadd.f32 0.0, %v951
      %v953 = vpop.f32.mrf.mxu0
      %v954 = vadd.f32 0.0, %v953
      %955 = vmatmul.bf16.gmra.mxu0 %v867
      %v956 = vpop.f32.mrf.mxu0
      %v957 = vadd.f32 0.0, %v956
      %v958 = vpop.f32.mrf.mxu0
      %v959 = vadd.f32 0.0, %v958
      %960 = vmatmul.bf16.gmra.mxu0 %v870
      %v961 = vpop.f32.mrf.mxu0
      %v962 = vadd.f32 0.0, %v961
      %v963 = vpop.f32.mrf.mxu0
      %v964 = vadd.f32 0.0, %v963
      %965 = vmatmul.bf16.gmra.mxu0 %v873
      %v966 = vpop.f32.mrf.mxu0
      %v967 = vadd.f32 0.0, %v966
      %v968 = vpop.f32.mrf.mxu0
      %v969 = vadd.f32 0.0, %v968
      %970 = vmatmul.bf16.gmra.mxu0 %v876
      %v971 = vpop.f32.mrf.mxu0
      %v972 = vadd.f32 0.0, %v971
      %v973 = vpop.f32.mrf.mxu0
      %v974 = vadd.f32 0.0, %v973
      %975 = vmatmul.bf16.gmra.mxu0 %v879
      %v976 = vpop.f32.mrf.mxu0
      %v977 = vadd.f32 0.0, %v976
      %v978 = vpop.f32.mrf.mxu0
      %v979 = vadd.f32 0.0, %v978
      %980 = vmatmul.bf16.gmra.mxu0 %v882
      %v981 = vpop.f32.mrf.mxu0
      %v982 = vadd.f32 0.0, %v981
      %v983 = vpop.f32.mrf.mxu0
      %v984 = vadd.f32 0.0, %v983
      %985 = vdwg.mxu0
      %v986 = vadd.f32 %v697, %v897
      %v987 = vadd.f32 %v699, %v899
      %v988 = vadd.f32 %v702, %v902
      %v989 = vadd.f32 %v704, %v904
      %v990 = vadd.f32 %v707, %v907
      %v991 = vadd.f32 %v709, %v909
      %v992 = vadd.f32 %v712, %v912
      %v993 = vadd.f32 %v714, %v914
      %v994 = vadd.f32 %v717, %v917
      %v995 = vadd.f32 %v719, %v919
      %v996 = vadd.f32 %v722, %v922
      %v997 = vadd.f32 %v724, %v924
      %v998 = vadd.f32 %v727, %v927
      %v999 = vadd.f32 %v729, %v929
      %v1000 = vadd.f32 %v732, %v932
      %v1001 = vadd.f32 %v734, %v934
      %v1002 = vadd.f32 %v737, %v937
      %v1003 = vadd.f32 %v739, %v939
      %v1004 = vadd.f32 %v742, %v942
      %v1005 = vadd.f32 %v744, %v944
      %v1006 = vadd.f32 %v747, %v947
      %v1007 = vadd.f32 %v749, %v949
      %v1008 = vadd.f32 %v752, %v952
      %v1009 = vadd.f32 %v754, %v954
      %v1010 = vadd.f32 %v757, %v957
      %v1011 = vadd.f32 %v759, %v959
      %v1012 = vadd.f32 %v762, %v962
      %v1013 = vadd.f32 %v764, %v964
      %v1014 = vadd.f32 %v767, %v967
      %v1015 = vadd.f32 %v769, %v969
      %v1016 = vadd.f32 %v772, %v972
      %v1017 = vadd.f32 %v774, %v974
      %v1018 = vadd.f32 %v777, %v977
      %v1019 = vadd.f32 %v779, %v979
      %v1020 = vadd.f32 %v782, %v982
      %v1021 = vadd.f32 %v784, %v984
      %v1022 = vld [vmem:[%s197 + $0x8] sm:$0xe]
      %v1023 = vld [vmem:[%s197 + $0xc] sm:$0xf]
      %v1024 = vld [vmem:[%s197 + $0x10] sm:$0xf]
      %v1025 = vld [vmem:[%s197 + $0x14] sm:$0xf]
      %v1026 = vld [vmem:[%s197 + $0x18] sm:$0xf]
      %v1027 = vld [vmem:[%s197 + $0x1c] sm:$0xf]
      %v1028 = vld [vmem:[%s197 + $0x20] sm:$0xf]
      %v1029 = vld [vmem:[%s197 + $0x24] sm:$0xf]
      %v1030 = vld [vmem:[%s197 + $0x28] sm:$0xf]
      %v1031 = vld [vmem:[%s197 + $0x2c] sm:$0xf]
      %v1032 = vld [vmem:[%s197 + $0x30] sm:$0xf]
      %v1033 = vld [vmem:[%s197 + $0x34] sm:$0xf]
      %v1034 = vld [vmem:[%s197 + $0x38] sm:$0xf]
      %v1035 = vld [vmem:[%s197 + $0x3c] sm:$0xf]
      %v1036 = vld [vmem:[%s197 + $0x40] sm:$0xf]
      %v1037 = vld [vmem:[%s197 + $0x44] sm:$0xf]
      %v1038 = vld [vmem:[%s197 + $0x48] sm:$0xf]
      %v1039 = vld [vmem:[%s197 + $0x4c] sm:$0xf]
      %v1040 = vld [vmem:[%s197 + $0x50] sm:$0xf]
      %v1041 = vld [vmem:[%s197 + $0x54] sm:$0xf]
      %v1042 = vld [vmem:[%s197 + $0x58] sm:$0xf]
      %v1043 = vld [vmem:[%s197 + $0x5c] sm:$0xf]
      %v1044 = vld [vmem:[%s197 + $0x60] sm:$0xf]
      %v1045 = vld [vmem:[%s197 + $0x64] sm:$0xf]
      %v1046 = vld [vmem:[%s197 + $0x68] sm:$0xf]
      %v1047 = vld [vmem:[%s197 + $0x6c] sm:$0xf]
      %v1048 = vld [vmem:[%s197 + $0x70] sm:$0xf]
      %v1049 = vld [vmem:[%s197 + $0x74] sm:$0xf]
      %v1050 = vld [vmem:[%s197 + $0x78] sm:$0xf]
      %v1051 = vld [vmem:[%s197 + $0x7c] sm:$0xf]
      %v1052 = vld [vmem:[%s197 + $0x80] sm:$0xf]
      %v1053 = vld [vmem:[%s197 + $0x84] sm:$0xf]
      %v1054 = vld [vmem:[%s197 + $0x88] sm:$0xf]
      %v1055 = vld [vmem:[%s197 + $0x8c] sm:$0xf]
      %v1056 = vld [vmem:[%s197 + $0x90] sm:$0xf]
      %v1057 = vld [vmem:[%s197 + $0x94] sm:$0xf]
      %v1058 = vld [vmem:[%s197 + $0x98] sm:$0x1]
      %s1059 = scalar_lea.vmem %s1, 6
      %v1060 = vld [vmem:[%s1059] sm:$0x3]
      %v1098 = vunpack.c.l.b16 %v1022
      %v1099 = vunpack.c.l.b16 %v1023
      %v1100 = vunpack.c.l.b16 %v1024
      %v1101 = vunpack.c.l.b16 %v1025
      %v1102 = vunpack.c.l.b16 %v1026
      %v1103 = vunpack.c.l.b16 %v1027
      %v1104 = vunpack.c.l.b16 %v1028
      %v1105 = vunpack.c.l.b16 %v1029
      %v1106 = vunpack.c.l.b16 %v1030
      %v1107 = vunpack.c.l.b16 %v1031
      %v1108 = vunpack.c.l.b16 %v1032
      %v1109 = vunpack.c.l.b16 %v1033
      %v1110 = vunpack.c.l.b16 %v1034
      %v1111 = vunpack.c.l.b16 %v1035
      %v1112 = vunpack.c.l.b16 %v1036
      %v1113 = vunpack.c.l.b16 %v1037
      %v1114 = vunpack.c.l.b16 %v1038
      %v1115 = vunpack.c.l.b16 %v1039
      %v1116 = vunpack.c.l.b16 %v1040
      %v1117 = vunpack.c.l.b16 %v1041
      %v1118 = vunpack.c.l.b16 %v1042
      %v1119 = vunpack.c.l.b16 %v1043
      %v1120 = vunpack.c.l.b16 %v1044
      %v1121 = vunpack.c.l.b16 %v1045
      %v1122 = vunpack.c.l.b16 %v1046
      %v1123 = vunpack.c.l.b16 %v1047
      %v1124 = vunpack.c.l.b16 %v1048
      %v1125 = vunpack.c.l.b16 %v1049
      %v1126 = vunpack.c.l.b16 %v1050
      %v1127 = vunpack.c.l.b16 %v1051
      %v1128 = vunpack.c.l.b16 %v1052
      %v1129 = vunpack.c.l.b16 %v1053
      %v1130 = vunpack.c.l.b16 %v1054
      %v1131 = vunpack.c.l.b16 %v1055
      %v1132 = vunpack.c.l.b16 %v1056
      %v1133 = vunpack.c.l.b16 %v1057
      %v1134 = vunpack.c.l.b16 %v1058
      %v1135 = vpack.c.b16 %v1099, %v1098
      %v1136 = vpack.c.b16 %v1101, %v1100
      %v1137 = vpack.c.b16 %v1103, %v1102
      %v1138 = vpack.c.b16 %v1105, %v1104
      %v1139 = vpack.c.b16 %v1107, %v1106
      %v1140 = vpack.c.b16 %v1109, %v1108
      %v1141 = vpack.c.b16 %v1111, %v1110
      %v1142 = vpack.c.b16 %v1113, %v1112
      %v1143 = vpack.c.b16 %v1115, %v1114
      %v1144 = vpack.c.b16 %v1117, %v1116
      %v1145 = vpack.c.b16 %v1119, %v1118
      %v1146 = vpack.c.b16 %v1121, %v1120
      %v1147 = vpack.c.b16 %v1123, %v1122
      %v1148 = vpack.c.b16 %v1125, %v1124
      %v1149 = vpack.c.b16 %v1127, %v1126
      %v1150 = vpack.c.b16 %v1129, %v1128
      %v1151 = vpack.c.b16 %v1131, %v1130
      %v1152 = vpack.c.b16 %v1133, %v1132
      %v1153 = vpack.c.b16 %v1134, %v1134
      %v1154 = vrot.slane %v1135, 1
      %v1155 = vrot.slane %v1136, 1
      %v1156 = vsel %vm792, %v1154, %v1155
      %v1157 = vrot.slane %v1137, 1
      %v1158 = vsel %vm792, %v1155, %v1157
      %v1159 = vrot.slane %v1138, 1
      %v1160 = vsel %vm792, %v1157, %v1159
      %v1161 = vrot.slane %v1139, 1
      %v1162 = vsel %vm792, %v1159, %v1161
      %v1163 = vrot.slane %v1140, 1
      %v1164 = vsel %vm792, %v1161, %v1163
      %v1165 = vrot.slane %v1141, 1
      %v1166 = vsel %vm792, %v1163, %v1165
      %v1167 = vrot.slane %v1142, 1
      %v1168 = vsel %vm792, %v1165, %v1167
      %v1169 = vrot.slane %v1143, 1
      %v1170 = vsel %vm792, %v1167, %v1169
      %v1171 = vrot.slane %v1144, 1
      %v1172 = vsel %vm792, %v1169, %v1171
      %v1173 = vrot.slane %v1145, 1
      %v1174 = vsel %vm792, %v1171, %v1173
      %v1175 = vrot.slane %v1146, 1
      %v1176 = vsel %vm792, %v1173, %v1175
      %v1177 = vrot.slane %v1147, 1
      %v1178 = vsel %vm792, %v1175, %v1177
      %v1179 = vrot.slane %v1148, 1
      %v1180 = vsel %vm792, %v1177, %v1179
      %v1181 = vrot.slane %v1149, 1
      %v1182 = vsel %vm792, %v1179, %v1181
      %v1183 = vrot.slane %v1150, 1
      %v1184 = vsel %vm792, %v1181, %v1183
      %v1185 = vrot.slane %v1151, 1
      %v1186 = vsel %vm792, %v1183, %v1185
      %v1187 = vrot.slane %v1152, 1
      %v1188 = vsel %vm792, %v1185, %v1187
      %v1189 = vrot.slane %v1153, 1
      %v1190 = vsel %vm792, %v1187, %v1189
      %v1192 = vsel %vm490, %v1156, 0
      %v1195 = vsel %vm490, %v1158, 0
      %v1198 = vsel %vm490, %v1160, 0
      %v1201 = vsel %vm490, %v1162, 0
      %v1204 = vsel %vm490, %v1164, 0
      %v1207 = vsel %vm490, %v1166, 0
      %v1210 = vsel %vm490, %v1168, 0
      %v1213 = vsel %vm490, %v1170, 0
      %v1216 = vsel %vm490, %v1172, 0
      %v1219 = vsel %vm490, %v1174, 0
      %v1222 = vsel %vm490, %v1176, 0
      %v1225 = vsel %vm490, %v1178, 0
      %v1228 = vsel %vm490, %v1180, 0
      %v1231 = vsel %vm490, %v1182, 0
      %v1234 = vsel %vm490, %v1184, 0
      %v1237 = vsel %vm490, %v1186, 0
      %v1240 = vsel %vm490, %v1188, 0
      %v1243 = vsel %vm490, %v1190, 0
      %v1246 = vsel %vm545, %v1060, 0
      %1248 = vmatpush.bf16.msra.mxu0 0
      %1249 = vmatpush.bf16.msra.mxu0 0
      %1250 = vmatpush.bf16.msra.mxu0 0
      %1251 = vmatpush.bf16.msra.mxu0 0
      %1252 = vmatpush.bf16.msra.mxu0 0
      %1253 = vmatpush.bf16.msra.mxu0 0
      %1254 = vmatpush.bf16.msra.mxu0 0
      %1255 = vmatpush.bf16.msra.mxu0 %v1246
      %1256 = vmatmul.bf16.gmra.mxu0 %v1192
      %v1257 = vpop.f32.mrf.mxu0
      %v1258 = vadd.f32 0.0, %v1257
      %v1259 = vpop.f32.mrf.mxu0
      %v1260 = vadd.f32 0.0, %v1259
      %1261 = vmatmul.bf16.gmra.mxu0 %v1195
      %v1262 = vpop.f32.mrf.mxu0
      %v1263 = vadd.f32 0.0, %v1262
      %v1264 = vpop.f32.mrf.mxu0
      %v1265 = vadd.f32 0.0, %v1264
      %1266 = vmatmul.bf16.gmra.mxu0 %v1198
      %v1267 = vpop.f32.mrf.mxu0
      %v1268 = vadd.f32 0.0, %v1267
      %v1269 = vpop.f32.mrf.mxu0
      %v1270 = vadd.f32 0.0, %v1269
      %1271 = vmatmul.bf16.gmra.mxu0 %v1201
      %v1272 = vpop.f32.mrf.mxu0
      %v1273 = vadd.f32 0.0, %v1272
      %v1274 = vpop.f32.mrf.mxu0
      %v1275 = vadd.f32 0.0, %v1274
      %1276 = vmatmul.bf16.gmra.mxu0 %v1204
      %v1277 = vpop.f32.mrf.mxu0
      %v1278 = vadd.f32 0.0, %v1277
      %v1279 = vpop.f32.mrf.mxu0
      %v1280 = vadd.f32 0.0, %v1279
      %1281 = vmatmul.bf16.gmra.mxu0 %v1207
      %v1282 = vpop.f32.mrf.mxu0
      %v1283 = vadd.f32 0.0, %v1282
      %v1284 = vpop.f32.mrf.mxu0
      %v1285 = vadd.f32 0.0, %v1284
      %1286 = vmatmul.bf16.gmra.mxu0 %v1210
      %v1287 = vpop.f32.mrf.mxu0
      %v1288 = vadd.f32 0.0, %v1287
      %v1289 = vpop.f32.mrf.mxu0
      %v1290 = vadd.f32 0.0, %v1289
      %1291 = vmatmul.bf16.gmra.mxu0 %v1213
      %v1292 = vpop.f32.mrf.mxu0
      %v1293 = vadd.f32 0.0, %v1292
      %v1294 = vpop.f32.mrf.mxu0
      %v1295 = vadd.f32 0.0, %v1294
      %1296 = vmatmul.bf16.gmra.mxu0 %v1216
      %v1297 = vpop.f32.mrf.mxu0
      %v1298 = vadd.f32 0.0, %v1297
      %v1299 = vpop.f32.mrf.mxu0
      %v1300 = vadd.f32 0.0, %v1299
      %1301 = vmatmul.bf16.gmra.mxu0 %v1219
      %v1302 = vpop.f32.mrf.mxu0
      %v1303 = vadd.f32 0.0, %v1302
      %v1304 = vpop.f32.mrf.mxu0
      %v1305 = vadd.f32 0.0, %v1304
      %1306 = vmatmul.bf16.gmra.mxu0 %v1222
      %v1307 = vpop.f32.mrf.mxu0
      %v1308 = vadd.f32 0.0, %v1307
      %v1309 = vpop.f32.mrf.mxu0
      %v1310 = vadd.f32 0.0, %v1309
      %1311 = vmatmul.bf16.gmra.mxu0 %v1225
      %v1312 = vpop.f32.mrf.mxu0
      %v1313 = vadd.f32 0.0, %v1312
      %v1314 = vpop.f32.mrf.mxu0
      %v1315 = vadd.f32 0.0, %v1314
      %1316 = vmatmul.bf16.gmra.mxu0 %v1228
      %v1317 = vpop.f32.mrf.mxu0
      %v1318 = vadd.f32 0.0, %v1317
      %v1319 = vpop.f32.mrf.mxu0
      %v1320 = vadd.f32 0.0, %v1319
      %1321 = vmatmul.bf16.gmra.mxu0 %v1231
      %v1322 = vpop.f32.mrf.mxu0
      %v1323 = vadd.f32 0.0, %v1322
      %v1324 = vpop.f32.mrf.mxu0
      %v1325 = vadd.f32 0.0, %v1324
      %1326 = vmatmul.bf16.gmra.mxu0 %v1234
      %v1327 = vpop.f32.mrf.mxu0
      %v1328 = vadd.f32 0.0, %v1327
      %v1329 = vpop.f32.mrf.mxu0
      %v1330 = vadd.f32 0.0, %v1329
      %1331 = vmatmul.bf16.gmra.mxu0 %v1237
      %v1332 = vpop.f32.mrf.mxu0
      %v1333 = vadd.f32 0.0, %v1332
      %v1334 = vpop.f32.mrf.mxu0
      %v1335 = vadd.f32 0.0, %v1334
      %1336 = vmatmul.bf16.gmra.mxu0 %v1240
      %v1337 = vpop.f32.mrf.mxu0
      %v1338 = vadd.f32 0.0, %v1337
      %v1339 = vpop.f32.mrf.mxu0
      %v1340 = vadd.f32 0.0, %v1339
      %1341 = vmatmul.bf16.gmra.mxu0 %v1243
      %v1342 = vpop.f32.mrf.mxu0
      %v1343 = vadd.f32 0.0, %v1342
      %v1344 = vpop.f32.mrf.mxu0
      %v1345 = vadd.f32 0.0, %v1344
      %1346 = vdwg.mxu0
      %v1347 = vadd.f32 %v986, %v1258
      %v1348 = vadd.f32 %v987, %v1260
      %v1349 = vadd.f32 %v988, %v1263
      %v1350 = vadd.f32 %v989, %v1265
      %v1351 = vadd.f32 %v990, %v1268
      %v1352 = vadd.f32 %v991, %v1270
      %v1353 = vadd.f32 %v992, %v1273
      %v1354 = vadd.f32 %v993, %v1275
      %v1355 = vadd.f32 %v994, %v1278
      %v1356 = vadd.f32 %v995, %v1280
      %v1357 = vadd.f32 %v996, %v1283
      %v1358 = vadd.f32 %v997, %v1285
      %v1359 = vadd.f32 %v998, %v1288
      %v1360 = vadd.f32 %v999, %v1290
      %v1361 = vadd.f32 %v1000, %v1293
      %v1362 = vadd.f32 %v1001, %v1295
      %v1363 = vadd.f32 %v1002, %v1298
      %v1364 = vadd.f32 %v1003, %v1300
      %v1365 = vadd.f32 %v1004, %v1303
      %v1366 = vadd.f32 %v1005, %v1305
      %v1367 = vadd.f32 %v1006, %v1308
      %v1368 = vadd.f32 %v1007, %v1310
      %v1369 = vadd.f32 %v1008, %v1313
      %v1370 = vadd.f32 %v1009, %v1315
      %v1371 = vadd.f32 %v1010, %v1318
      %v1372 = vadd.f32 %v1011, %v1320
      %v1373 = vadd.f32 %v1012, %v1323
      %v1374 = vadd.f32 %v1013, %v1325
      %v1375 = vadd.f32 %v1014, %v1328
      %v1376 = vadd.f32 %v1015, %v1330
      %v1377 = vadd.f32 %v1016, %v1333
      %v1378 = vadd.f32 %v1017, %v1335
      %v1379 = vadd.f32 %v1018, %v1338
      %v1380 = vadd.f32 %v1019, %v1340
      %v1381 = vadd.f32 %v1020, %v1343
      %v1382 = vadd.f32 %v1021, %v1345
      %v1383 = vld [vmem:[%s197 + $0x98] sm:$0x3]
      %s1384 = scalar_lea.vmem %s1, 8
      %v1385 = vld [vmem:[%s1384] sm:$0x3]
      %v1387 = vunpack.c.l.b16 %v1383
      %v1388 = vpack.c.b16 %v1387, %v1387
      %vm1389 = vsmask.f32 6400
      %v1391 = vshrl.u32 %v1135, 16
      %v1393 = vrot.slane %v1391, 1
      %v1394 = vshll.u32 %v1135, 16
      %v1396 = vrot.slane %v1394, 2
      %v1397 = vor.u32 %v1393, %v1396
      %v1399 = vshrl.u32 %v1136, 16
      %v1401 = vrot.slane %v1399, 1
      %v1402 = vshll.u32 %v1136, 16
      %v1404 = vrot.slane %v1402, 2
      %v1405 = vor.u32 %v1401, %v1404
      %v1406 = vsel %vm1389, %v1397, %v1405
      %v1408 = vshrl.u32 %v1137, 16
      %v1410 = vrot.slane %v1408, 1
      %v1411 = vshll.u32 %v1137, 16
      %v1413 = vrot.slane %v1411, 2
      %v1414 = vor.u32 %v1410, %v1413
      %v1415 = vsel %vm1389, %v1405, %v1414
      %v1417 = vshrl.u32 %v1138, 16
      %v1419 = vrot.slane %v1417, 1
      %v1420 = vshll.u32 %v1138, 16
      %v1422 = vrot.slane %v1420, 2
      %v1423 = vor.u32 %v1419, %v1422
      %v1424 = vsel %vm1389, %v1414, %v1423
      %v1426 = vshrl.u32 %v1139, 16
      %v1428 = vrot.slane %v1426, 1
      %v1429 = vshll.u32 %v1139, 16
      %v1431 = vrot.slane %v1429, 2
      %v1432 = vor.u32 %v1428, %v1431
      %v1433 = vsel %vm1389, %v1423, %v1432
      %v1435 = vshrl.u32 %v1140, 16
      %v1437 = vrot.slane %v1435, 1
      %v1438 = vshll.u32 %v1140, 16
      %v1440 = vrot.slane %v1438, 2
      %v1441 = vor.u32 %v1437, %v1440
      %v1442 = vsel %vm1389, %v1432, %v1441
      %v1444 = vshrl.u32 %v1141, 16
      %v1446 = vrot.slane %v1444, 1
      %v1447 = vshll.u32 %v1141, 16
      %v1449 = vrot.slane %v1447, 2
      %v1450 = vor.u32 %v1446, %v1449
      %v1451 = vsel %vm1389, %v1441, %v1450
      %v1453 = vshrl.u32 %v1142, 16
      %v1455 = vrot.slane %v1453, 1
      %v1456 = vshll.u32 %v1142, 16
      %v1458 = vrot.slane %v1456, 2
      %v1459 = vor.u32 %v1455, %v1458
      %v1460 = vsel %vm1389, %v1450, %v1459
      %v1462 = vshrl.u32 %v1143, 16
      %v1464 = vrot.slane %v1462, 1
      %v1465 = vshll.u32 %v1143, 16
      %v1467 = vrot.slane %v1465, 2
      %v1468 = vor.u32 %v1464, %v1467
      %v1469 = vsel %vm1389, %v1459, %v1468
      %v1471 = vshrl.u32 %v1144, 16
      %v1473 = vrot.slane %v1471, 1
      %v1474 = vshll.u32 %v1144, 16
      %v1476 = vrot.slane %v1474, 2
      %v1477 = vor.u32 %v1473, %v1476
      %v1478 = vsel %vm1389, %v1468, %v1477
      %v1480 = vshrl.u32 %v1145, 16
      %v1482 = vrot.slane %v1480, 1
      %v1483 = vshll.u32 %v1145, 16
      %v1485 = vrot.slane %v1483, 2
      %v1486 = vor.u32 %v1482, %v1485
      %v1487 = vsel %vm1389, %v1477, %v1486
      %v1489 = vshrl.u32 %v1146, 16
      %v1491 = vrot.slane %v1489, 1
      %v1492 = vshll.u32 %v1146, 16
      %v1494 = vrot.slane %v1492, 2
      %v1495 = vor.u32 %v1491, %v1494
      %v1496 = vsel %vm1389, %v1486, %v1495
      %v1498 = vshrl.u32 %v1147, 16
      %v1500 = vrot.slane %v1498, 1
      %v1501 = vshll.u32 %v1147, 16
      %v1503 = vrot.slane %v1501, 2
      %v1504 = vor.u32 %v1500, %v1503
      %v1505 = vsel %vm1389, %v1495, %v1504
      %v1507 = vshrl.u32 %v1148, 16
      %v1509 = vrot.slane %v1507, 1
      %v1510 = vshll.u32 %v1148, 16
      %v1512 = vrot.slane %v1510, 2
      %v1513 = vor.u32 %v1509, %v1512
      %v1514 = vsel %vm1389, %v1504, %v1513
      %v1516 = vshrl.u32 %v1149, 16
      %v1518 = vrot.slane %v1516, 1
      %v1519 = vshll.u32 %v1149, 16
      %v1521 = vrot.slane %v1519, 2
      %v1522 = vor.u32 %v1518, %v1521
      %v1523 = vsel %vm1389, %v1513, %v1522
      %v1525 = vshrl.u32 %v1150, 16
      %v1527 = vrot.slane %v1525, 1
      %v1528 = vshll.u32 %v1150, 16
      %v1530 = vrot.slane %v1528, 2
      %v1531 = vor.u32 %v1527, %v1530
      %v1532 = vsel %vm1389, %v1522, %v1531
      %v1534 = vshrl.u32 %v1151, 16
      %v1536 = vrot.slane %v1534, 1
      %v1537 = vshll.u32 %v1151, 16
      %v1539 = vrot.slane %v1537, 2
      %v1540 = vor.u32 %v1536, %v1539
      %v1541 = vsel %vm1389, %v1531, %v1540
      %v1543 = vshrl.u32 %v1152, 16
      %v1545 = vrot.slane %v1543, 1
      %v1546 = vshll.u32 %v1152, 16
      %v1548 = vrot.slane %v1546, 2
      %v1549 = vor.u32 %v1545, %v1548
      %v1550 = vsel %vm1389, %v1540, %v1549
      %v1552 = vshrl.u32 %v1388, 16
      %v1554 = vrot.slane %v1552, 1
      %v1555 = vshll.u32 %v1388, 16
      %v1557 = vrot.slane %v1555, 2
      %v1558 = vor.u32 %v1554, %v1557
      %v1559 = vsel %vm1389, %v1549, %v1558
      %v1561 = vsel %vm490, %v1406, 0
      %v1564 = vsel %vm490, %v1415, 0
      %v1567 = vsel %vm490, %v1424, 0
      %v1570 = vsel %vm490, %v1433, 0
      %v1573 = vsel %vm490, %v1442, 0
      %v1576 = vsel %vm490, %v1451, 0
      %v1579 = vsel %vm490, %v1460, 0
      %v1582 = vsel %vm490, %v1469, 0
      %v1585 = vsel %vm490, %v1478, 0
      %v1588 = vsel %vm490, %v1487, 0
      %v1591 = vsel %vm490, %v1496, 0
      %v1594 = vsel %vm490, %v1505, 0
      %v1597 = vsel %vm490, %v1514, 0
      %v1600 = vsel %vm490, %v1523, 0
      %v1603 = vsel %vm490, %v1532, 0
      %v1606 = vsel %vm490, %v1541, 0
      %v1609 = vsel %vm490, %v1550, 0
      %v1612 = vsel %vm490, %v1559, 0
      %v1615 = vsel %vm545, %v1385, 0
      %1617 = vmatpush.bf16.msra.mxu0 0
      %1618 = vmatpush.bf16.msra.mxu0 0
      %1619 = vmatpush.bf16.msra.mxu0 0
      %1620 = vmatpush.bf16.msra.mxu0 0
      %1621 = vmatpush.bf16.msra.mxu0 0
      %1622 = vmatpush.bf16.msra.mxu0 0
      %1623 = vmatpush.bf16.msra.mxu0 0
      %1624 = vmatpush.bf16.msra.mxu0 %v1615
      %1625 = vmatmul.bf16.gmra.mxu0 %v1561
      %v1626 = vpop.f32.mrf.mxu0
      %v1627 = vadd.f32 0.0, %v1626
      %v1628 = vpop.f32.mrf.mxu0
      %v1629 = vadd.f32 0.0, %v1628
      %1630 = vmatmul.bf16.gmra.mxu0 %v1564
      %v1631 = vpop.f32.mrf.mxu0
      %v1632 = vadd.f32 0.0, %v1631
      %v1633 = vpop.f32.mrf.mxu0
      %v1634 = vadd.f32 0.0, %v1633
      %1635 = vmatmul.bf16.gmra.mxu0 %v1567
      %v1636 = vpop.f32.mrf.mxu0
      %v1637 = vadd.f32 0.0, %v1636
      %v1638 = vpop.f32.mrf.mxu0
      %v1639 = vadd.f32 0.0, %v1638
      %1640 = vmatmul.bf16.gmra.mxu0 %v1570
      %v1641 = vpop.f32.mrf.mxu0
      %v1642 = vadd.f32 0.0, %v1641
      %v1643 = vpop.f32.mrf.mxu0
      %v1644 = vadd.f32 0.0, %v1643
      %1645 = vmatmul.bf16.gmra.mxu0 %v1573
      %v1646 = vpop.f32.mrf.mxu0
      %v1647 = vadd.f32 0.0, %v1646
      %v1648 = vpop.f32.mrf.mxu0
      %v1649 = vadd.f32 0.0, %v1648
      %1650 = vmatmul.bf16.gmra.mxu0 %v1576
      %v1651 = vpop.f32.mrf.mxu0
      %v1652 = vadd.f32 0.0, %v1651
      %v1653 = vpop.f32.mrf.mxu0
      %v1654 = vadd.f32 0.0, %v1653
      %1655 = vmatmul.bf16.gmra.mxu0 %v1579
      %v1656 = vpop.f32.mrf.mxu0
      %v1657 = vadd.f32 0.0, %v1656
      %v1658 = vpop.f32.mrf.mxu0
      %v1659 = vadd.f32 0.0, %v1658
      %1660 = vmatmul.bf16.gmra.mxu0 %v1582
      %v1661 = vpop.f32.mrf.mxu0
      %v1662 = vadd.f32 0.0, %v1661
      %v1663 = vpop.f32.mrf.mxu0
      %v1664 = vadd.f32 0.0, %v1663
      %1665 = vmatmul.bf16.gmra.mxu0 %v1585
      %v1666 = vpop.f32.mrf.mxu0
      %v1667 = vadd.f32 0.0, %v1666
      %v1668 = vpop.f32.mrf.mxu0
      %v1669 = vadd.f32 0.0, %v1668
      %1670 = vmatmul.bf16.gmra.mxu0 %v1588
      %v1671 = vpop.f32.mrf.mxu0
      %v1672 = vadd.f32 0.0, %v1671
      %v1673 = vpop.f32.mrf.mxu0
      %v1674 = vadd.f32 0.0, %v1673
      %1675 = vmatmul.bf16.gmra.mxu0 %v1591
      %v1676 = vpop.f32.mrf.mxu0
      %v1677 = vadd.f32 0.0, %v1676
      %v1678 = vpop.f32.mrf.mxu0
      %v1679 = vadd.f32 0.0, %v1678
      %1680 = vmatmul.bf16.gmra.mxu0 %v1594
      %v1681 = vpop.f32.mrf.mxu0
      %v1682 = vadd.f32 0.0, %v1681
      %v1683 = vpop.f32.mrf.mxu0
      %v1684 = vadd.f32 0.0, %v1683
      %1685 = vmatmul.bf16.gmra.mxu0 %v1597
      %v1686 = vpop.f32.mrf.mxu0
      %v1687 = vadd.f32 0.0, %v1686
      %v1688 = vpop.f32.mrf.mxu0
      %v1689 = vadd.f32 0.0, %v1688
      %1690 = vmatmul.bf16.gmra.mxu0 %v1600
      %v1691 = vpop.f32.mrf.mxu0
      %v1692 = vadd.f32 0.0, %v1691
      %v1693 = vpop.f32.mrf.mxu0
      %v1694 = vadd.f32 0.0, %v1693
      %1695 = vmatmul.bf16.gmra.mxu0 %v1603
      %v1696 = vpop.f32.mrf.mxu0
      %v1697 = vadd.f32 0.0, %v1696
      %v1698 = vpop.f32.mrf.mxu0
      %v1699 = vadd.f32 0.0, %v1698
      %1700 = vmatmul.bf16.gmra.mxu0 %v1606
      %v1701 = vpop.f32.mrf.mxu0
      %v1702 = vadd.f32 0.0, %v1701
      %v1703 = vpop.f32.mrf.mxu0
      %v1704 = vadd.f32 0.0, %v1703
      %1705 = vmatmul.bf16.gmra.mxu0 %v1609
      %v1706 = vpop.f32.mrf.mxu0
      %v1707 = vadd.f32 0.0, %v1706
      %v1708 = vpop.f32.mrf.mxu0
      %v1709 = vadd.f32 0.0, %v1708
      %1710 = vmatmul.bf16.gmra.mxu0 %v1612
      %v1711 = vpop.f32.mrf.mxu0
      %v1712 = vadd.f32 0.0, %v1711
      %v1713 = vpop.f32.mrf.mxu0
      %v1714 = vadd.f32 0.0, %v1713
      %1715 = vdwg.mxu0
      %v1716 = vadd.f32 %v1347, %v1627
      %v1717 = vadd.f32 %v1348, %v1629
      %v1718 = vadd.f32 %v1349, %v1632
      %v1719 = vadd.f32 %v1350, %v1634
      %v1720 = vadd.f32 %v1351, %v1637
      %v1721 = vadd.f32 %v1352, %v1639
      %v1722 = vadd.f32 %v1353, %v1642
      %v1723 = vadd.f32 %v1354, %v1644
      %v1724 = vadd.f32 %v1355, %v1647
      %v1725 = vadd.f32 %v1356, %v1649
      %v1726 = vadd.f32 %v1357, %v1652
      %v1727 = vadd.f32 %v1358, %v1654
      %v1728 = vadd.f32 %v1359, %v1657
      %v1729 = vadd.f32 %v1360, %v1659
      %v1730 = vadd.f32 %v1361, %v1662
      %v1731 = vadd.f32 %v1362, %v1664
      %v1732 = vadd.f32 %v1363, %v1667
      %v1733 = vadd.f32 %v1364, %v1669
      %v1734 = vadd.f32 %v1365, %v1672
      %v1735 = vadd.f32 %v1366, %v1674
      %v1736 = vadd.f32 %v1367, %v1677
      %v1737 = vadd.f32 %v1368, %v1679
      %v1738 = vadd.f32 %v1369, %v1682
      %v1739 = vadd.f32 %v1370, %v1684
      %v1740 = vadd.f32 %v1371, %v1687
      %v1741 = vadd.f32 %v1372, %v1689
      %v1742 = vadd.f32 %v1373, %v1692
      %v1743 = vadd.f32 %v1374, %v1694
      %v1744 = vadd.f32 %v1375, %v1697
      %v1745 = vadd.f32 %v1376, %v1699
      %v1746 = vadd.f32 %v1377, %v1702
      %v1747 = vadd.f32 %v1378, %v1704
      %v1748 = vadd.f32 %v1379, %v1707
      %v1749 = vadd.f32 %v1380, %v1709
      %v1750 = vadd.f32 %v1381, %v1712
      %v1751 = vadd.f32 %v1382, %v1714
      %v1752 = vld [vmem:[%s197 + $0x8] sm:$0xc]
      %s1753 = scalar_lea.vmem %s1, 10
      %v1754 = vld [vmem:[%s1753] sm:$0x3]
      %v1756 = vunpack.c.l.b16 %v1752
      %v1757 = vpack.c.b16 %v1099, %v1756
      %vm1758 = vcmask 1045504
      %v1759 = vrot.slane %v1757, 2
      %v1760 = vrot.slane %v1136, 2
      %v1761 = vsel %vm1758, %v1759, %v1760
      %v1762 = vrot.slane %v1137, 2
      %v1763 = vsel %vm1758, %v1760, %v1762
      %v1764 = vrot.slane %v1138, 2
      %v1765 = vsel %vm1758, %v1762, %v1764
      %v1766 = vrot.slane %v1139, 2
      %v1767 = vsel %vm1758, %v1764, %v1766
      %v1768 = vrot.slane %v1140, 2
      %v1769 = vsel %vm1758, %v1766, %v1768
      %v1770 = vrot.slane %v1141, 2
      %v1771 = vsel %vm1758, %v1768, %v1770
      %v1772 = vrot.slane %v1142, 2
      %v1773 = vsel %vm1758, %v1770, %v1772
      %v1774 = vrot.slane %v1143, 2
      %v1775 = vsel %vm1758, %v1772, %v1774
      %v1776 = vrot.slane %v1144, 2
      %v1777 = vsel %vm1758, %v1774, %v1776
      %v1778 = vrot.slane %v1145, 2
      %v1779 = vsel %vm1758, %v1776, %v1778
      %v1780 = vrot.slane %v1146, 2
      %v1781 = vsel %vm1758, %v1778, %v1780
      %v1782 = vrot.slane %v1147, 2
      %v1783 = vsel %vm1758, %v1780, %v1782
      %v1784 = vrot.slane %v1148, 2
      %v1785 = vsel %vm1758, %v1782, %v1784
      %v1786 = vrot.slane %v1149, 2
      %v1787 = vsel %vm1758, %v1784, %v1786
      %v1788 = vrot.slane %v1150, 2
      %v1789 = vsel %vm1758, %v1786, %v1788
      %v1790 = vrot.slane %v1151, 2
      %v1791 = vsel %vm1758, %v1788, %v1790
      %v1792 = vrot.slane %v1152, 2
      %v1793 = vsel %vm1758, %v1790, %v1792
      %v1794 = vrot.slane %v1388, 2
      %v1795 = vsel %vm1758, %v1792, %v1794
      %v1797 = vsel %vm490, %v1761, 0
      %v1800 = vsel %vm490, %v1763, 0
      %v1803 = vsel %vm490, %v1765, 0
      %v1806 = vsel %vm490, %v1767, 0
      %v1809 = vsel %vm490, %v1769, 0
      %v1812 = vsel %vm490, %v1771, 0
      %v1815 = vsel %vm490, %v1773, 0
      %v1818 = vsel %vm490, %v1775, 0
      %v1821 = vsel %vm490, %v1777, 0
      %v1824 = vsel %vm490, %v1779, 0
      %v1827 = vsel %vm490, %v1781, 0
      %v1830 = vsel %vm490, %v1783, 0
      %v1833 = vsel %vm490, %v1785, 0
      %v1836 = vsel %vm490, %v1787, 0
      %v1839 = vsel %vm490, %v1789, 0
      %v1842 = vsel %vm490, %v1791, 0
      %v1845 = vsel %vm490, %v1793, 0
      %v1848 = vsel %vm490, %v1795, 0
      %v1851 = vsel %vm545, %v1754, 0
      %1853 = vmatpush.bf16.msra.mxu0 0
      %1854 = vmatpush.bf16.msra.mxu0 0
      %1855 = vmatpush.bf16.msra.mxu0 0
      %1856 = vmatpush.bf16.msra.mxu0 0
      %1857 = vmatpush.bf16.msra.mxu0 0
      %1858 = vmatpush.bf16.msra.mxu0 0
      %1859 = vmatpush.bf16.msra.mxu0 0
      %1860 = vmatpush.bf16.msra.mxu0 %v1851
      %1861 = vmatmul.bf16.gmra.mxu0 %v1797
      %v1862 = vpop.f32.mrf.mxu0
      %v1863 = vadd.f32 0.0, %v1862
      %v1864 = vpop.f32.mrf.mxu0
      %v1865 = vadd.f32 0.0, %v1864
      %1866 = vmatmul.bf16.gmra.mxu0 %v1800
      %v1867 = vpop.f32.mrf.mxu0
      %v1868 = vadd.f32 0.0, %v1867
      %v1869 = vpop.f32.mrf.mxu0
      %v1870 = vadd.f32 0.0, %v1869
      %1871 = vmatmul.bf16.gmra.mxu0 %v1803
      %v1872 = vpop.f32.mrf.mxu0
      %v1873 = vadd.f32 0.0, %v1872
      %v1874 = vpop.f32.mrf.mxu0
      %v1875 = vadd.f32 0.0, %v1874
      %1876 = vmatmul.bf16.gmra.mxu0 %v1806
      %v1877 = vpop.f32.mrf.mxu0
      %v1878 = vadd.f32 0.0, %v1877
      %v1879 = vpop.f32.mrf.mxu0
      %v1880 = vadd.f32 0.0, %v1879
      %1881 = vmatmul.bf16.gmra.mxu0 %v1809
      %v1882 = vpop.f32.mrf.mxu0
      %v1883 = vadd.f32 0.0, %v1882
      %v1884 = vpop.f32.mrf.mxu0
      %v1885 = vadd.f32 0.0, %v1884
      %1886 = vmatmul.bf16.gmra.mxu0 %v1812
      %v1887 = vpop.f32.mrf.mxu0
      %v1888 = vadd.f32 0.0, %v1887
      %v1889 = vpop.f32.mrf.mxu0
      %v1890 = vadd.f32 0.0, %v1889
      %1891 = vmatmul.bf16.gmra.mxu0 %v1815
      %v1892 = vpop.f32.mrf.mxu0
      %v1893 = vadd.f32 0.0, %v1892
      %v1894 = vpop.f32.mrf.mxu0
      %v1895 = vadd.f32 0.0, %v1894
      %1896 = vmatmul.bf16.gmra.mxu0 %v1818
      %v1897 = vpop.f32.mrf.mxu0
      %v1898 = vadd.f32 0.0, %v1897
      %v1899 = vpop.f32.mrf.mxu0
      %v1900 = vadd.f32 0.0, %v1899
      %1901 = vmatmul.bf16.gmra.mxu0 %v1821
      %v1902 = vpop.f32.mrf.mxu0
      %v1903 = vadd.f32 0.0, %v1902
      %v1904 = vpop.f32.mrf.mxu0
      %v1905 = vadd.f32 0.0, %v1904
      %1906 = vmatmul.bf16.gmra.mxu0 %v1824
      %v1907 = vpop.f32.mrf.mxu0
      %v1908 = vadd.f32 0.0, %v1907
      %v1909 = vpop.f32.mrf.mxu0
      %v1910 = vadd.f32 0.0, %v1909
      %1911 = vmatmul.bf16.gmra.mxu0 %v1827
      %v1912 = vpop.f32.mrf.mxu0
      %v1913 = vadd.f32 0.0, %v1912
      %v1914 = vpop.f32.mrf.mxu0
      %v1915 = vadd.f32 0.0, %v1914
      %1916 = vmatmul.bf16.gmra.mxu0 %v1830
      %v1917 = vpop.f32.mrf.mxu0
      %v1918 = vadd.f32 0.0, %v1917
      %v1919 = vpop.f32.mrf.mxu0
      %v1920 = vadd.f32 0.0, %v1919
      %1921 = vmatmul.bf16.gmra.mxu0 %v1833
      %v1922 = vpop.f32.mrf.mxu0
      %v1923 = vadd.f32 0.0, %v1922
      %v1924 = vpop.f32.mrf.mxu0
      %v1925 = vadd.f32 0.0, %v1924
      %1926 = vmatmul.bf16.gmra.mxu0 %v1836
      %v1927 = vpop.f32.mrf.mxu0
      %v1928 = vadd.f32 0.0, %v1927
      %v1929 = vpop.f32.mrf.mxu0
      %v1930 = vadd.f32 0.0, %v1929
      %1931 = vmatmul.bf16.gmra.mxu0 %v1839
      %v1932 = vpop.f32.mrf.mxu0
      %v1933 = vadd.f32 0.0, %v1932
      %v1934 = vpop.f32.mrf.mxu0
      %v1935 = vadd.f32 0.0, %v1934
      %1936 = vmatmul.bf16.gmra.mxu0 %v1842
      %v1937 = vpop.f32.mrf.mxu0
      %v1938 = vadd.f32 0.0, %v1937
      %v1939 = vpop.f32.mrf.mxu0
      %v1940 = vadd.f32 0.0, %v1939
      %1941 = vmatmul.bf16.gmra.mxu0 %v1845
      %v1942 = vpop.f32.mrf.mxu0
      %v1943 = vadd.f32 0.0, %v1942
      %v1944 = vpop.f32.mrf.mxu0
      %v1945 = vadd.f32 0.0, %v1944
      %1946 = vmatmul.bf16.gmra.mxu0 %v1848
      %v1947 = vpop.f32.mrf.mxu0
      %v1948 = vadd.f32 0.0, %v1947
      %v1949 = vpop.f32.mrf.mxu0
      %v1950 = vadd.f32 0.0, %v1949
      %1951 = vdwg.mxu0
      %v1952 = vadd.f32 %v1716, %v1863
      %v1953 = vadd.f32 %v1717, %v1865
      %v1954 = vadd.f32 %v1718, %v1868
      %v1955 = vadd.f32 %v1719, %v1870
      %v1956 = vadd.f32 %v1720, %v1873
      %v1957 = vadd.f32 %v1721, %v1875
      %v1958 = vadd.f32 %v1722, %v1878
      %v1959 = vadd.f32 %v1723, %v1880
      %v1960 = vadd.f32 %v1724, %v1883
      %v1961 = vadd.f32 %v1725, %v1885
      %v1962 = vadd.f32 %v1726, %v1888
      %v1963 = vadd.f32 %v1727, %v1890
      %v1964 = vadd.f32 %v1728, %v1893
      %v1965 = vadd.f32 %v1729, %v1895
      %v1966 = vadd.f32 %v1730, %v1898
      %v1967 = vadd.f32 %v1731, %v1900
      %v1968 = vadd.f32 %v1732, %v1903
      %v1969 = vadd.f32 %v1733, %v1905
      %v1970 = vadd.f32 %v1734, %v1908
      %v1971 = vadd.f32 %v1735, %v1910
      %v1972 = vadd.f32 %v1736, %v1913
      %v1973 = vadd.f32 %v1737, %v1915
      %v1974 = vadd.f32 %v1738, %v1918
      %v1975 = vadd.f32 %v1739, %v1920
      %v1976 = vadd.f32 %v1740, %v1923
      %v1977 = vadd.f32 %v1741, %v1925
      %v1978 = vadd.f32 %v1742, %v1928
      %v1979 = vadd.f32 %v1743, %v1930
      %v1980 = vadd.f32 %v1744, %v1933
      %v1981 = vadd.f32 %v1745, %v1935
      %v1982 = vadd.f32 %v1746, %v1938
      %v1983 = vadd.f32 %v1747, %v1940
      %v1984 = vadd.f32 %v1748, %v1943
      %v1985 = vadd.f32 %v1749, %v1945
      %v1986 = vadd.f32 %v1750, %v1948
      %v1987 = vadd.f32 %v1751, %v1950
      %v1988 = vld [vmem:[%s197 + $0x10] sm:$0xc]
      %v1989 = vld [vmem:[%s197 + $0x14] sm:$0xf]
      %v1990 = vld [vmem:[%s197 + $0x18] sm:$0xf]
      %v1991 = vld [vmem:[%s197 + $0x1c] sm:$0xf]
      %v1992 = vld [vmem:[%s197 + $0x20] sm:$0xf]
      %v1993 = vld [vmem:[%s197 + $0x24] sm:$0xf]
      %v1994 = vld [vmem:[%s197 + $0x28] sm:$0xf]
      %v1995 = vld [vmem:[%s197 + $0x2c] sm:$0xf]
      %v1996 = vld [vmem:[%s197 + $0x30] sm:$0xf]
      %v1997 = vld [vmem:[%s197 + $0x34] sm:$0xf]
      %v1998 = vld [vmem:[%s197 + $0x38] sm:$0xf]
      %v1999 = vld [vmem:[%s197 + $0x3c] sm:$0xf]
      %v2000 = vld [vmem:[%s197 + $0x40] sm:$0xf]
      %v2001 = vld [vmem:[%s197 + $0x44] sm:$0xf]
      %v2002 = vld [vmem:[%s197 + $0x48] sm:$0xf]
      %v2003 = vld [vmem:[%s197 + $0x4c] sm:$0xf]
      %v2004 = vld [vmem:[%s197 + $0x50] sm:$0xf]
      %v2005 = vld [vmem:[%s197 + $0x54] sm:$0xf]
      %v2006 = vld [vmem:[%s197 + $0x58] sm:$0xf]
      %v2007 = vld [vmem:[%s197 + $0x5c] sm:$0xf]
      %v2008 = vld [vmem:[%s197 + $0x60] sm:$0xf]
      %v2009 = vld [vmem:[%s197 + $0x64] sm:$0xf]
      %v2010 = vld [vmem:[%s197 + $0x68] sm:$0xf]
      %v2011 = vld [vmem:[%s197 + $0x6c] sm:$0xf]
      %v2012 = vld [vmem:[%s197 + $0x70] sm:$0xf]
      %v2013 = vld [vmem:[%s197 + $0x74] sm:$0xf]
      %v2014 = vld [vmem:[%s197 + $0x78] sm:$0xf]
      %v2015 = vld [vmem:[%s197 + $0x7c] sm:$0xf]
      %v2016 = vld [vmem:[%s197 + $0x80] sm:$0xf]
      %v2017 = vld [vmem:[%s197 + $0x84] sm:$0xf]
      %v2018 = vld [vmem:[%s197 + $0x88] sm:$0xf]
      %v2019 = vld [vmem:[%s197 + $0x8c] sm:$0xf]
      %v2020 = vld [vmem:[%s197 + $0x90] sm:$0xf]
      %v2021 = vld [vmem:[%s197 + $0x94] sm:$0xf]
      %v2022 = vld [vmem:[%s197 + $0x98] sm:$0xf]
      %v2023 = vld [vmem:[%s197 + $0x9c] sm:$0xf]
      %v2024 = vld [vmem:[%s197 + $0xa0] sm:$0x3]
      %s2025 = scalar_lea.vmem %s1, 12
      %v2026 = vld [vmem:[%s2025] sm:$0x3]
      %v2064 = vunpack.c.l.b16 %v1988
      %v2065 = vunpack.c.l.b16 %v1989
      %v2066 = vunpack.c.l.b16 %v1990
      %v2067 = vunpack.c.l.b16 %v1991
      %v2068 = vunpack.c.l.b16 %v1992
      %v2069 = vunpack.c.l.b16 %v1993
      %v2070 = vunpack.c.l.b16 %v1994
      %v2071 = vunpack.c.l.b16 %v1995
      %v2072 = vunpack.c.l.b16 %v1996
      %v2073 = vunpack.c.l.b16 %v1997
      %v2074 = vunpack.c.l.b16 %v1998
      %v2075 = vunpack.c.l.b16 %v1999
      %v2076 = vunpack.c.l.b16 %v2000
      %v2077 = vunpack.c.l.b16 %v2001
      %v2078 = vunpack.c.l.b16 %v2002
      %v2079 = vunpack.c.l.b16 %v2003
      %v2080 = vunpack.c.l.b16 %v2004
      %v2081 = vunpack.c.l.b16 %v2005
      %v2082 = vunpack.c.l.b16 %v2006
      %v2083 = vunpack.c.l.b16 %v2007
      %v2084 = vunpack.c.l.b16 %v2008
      %v2085 = vunpack.c.l.b16 %v2009
      %v2086 = vunpack.c.l.b16 %v2010
      %v2087 = vunpack.c.l.b16 %v2011
      %v2088 = vunpack.c.l.b16 %v2012
      %v2089 = vunpack.c.l.b16 %v2013
      %v2090 = vunpack.c.l.b16 %v2014
      %v2091 = vunpack.c.l.b16 %v2015
      %v2092 = vunpack.c.l.b16 %v2016
      %v2093 = vunpack.c.l.b16 %v2017
      %v2094 = vunpack.c.l.b16 %v2018
      %v2095 = vunpack.c.l.b16 %v2019
      %v2096 = vunpack.c.l.b16 %v2020
      %v2097 = vunpack.c.l.b16 %v2021
      %v2098 = vunpack.c.l.b16 %v2022
      %v2099 = vunpack.c.l.b16 %v2023
      %v2100 = vunpack.c.l.b16 %v2024
      %v2101 = vpack.c.b16 %v2065, %v2064
      %v2102 = vpack.c.b16 %v2067, %v2066
      %v2103 = vpack.c.b16 %v2069, %v2068
      %v2104 = vpack.c.b16 %v2071, %v2070
      %v2105 = vpack.c.b16 %v2073, %v2072
      %v2106 = vpack.c.b16 %v2075, %v2074
      %v2107 = vpack.c.b16 %v2077, %v2076
      %v2108 = vpack.c.b16 %v2079, %v2078
      %v2109 = vpack.c.b16 %v2081, %v2080
      %v2110 = vpack.c.b16 %v2083, %v2082
      %v2111 = vpack.c.b16 %v2085, %v2084
      %v2112 = vpack.c.b16 %v2087, %v2086
      %v2113 = vpack.c.b16 %v2089, %v2088
      %v2114 = vpack.c.b16 %v2091, %v2090
      %v2115 = vpack.c.b16 %v2093, %v2092
      %v2116 = vpack.c.b16 %v2095, %v2094
      %v2117 = vpack.c.b16 %v2097, %v2096
      %v2118 = vpack.c.b16 %v2099, %v2098
      %v2119 = vpack.c.b16 %v2100, %v2100
      %v2120 = vrot.slane %v2101, 2
      %v2121 = vrot.slane %v2102, 2
      %v2122 = vsel %vm1758, %v2120, %v2121
      %v2123 = vrot.slane %v2103, 2
      %v2124 = vsel %vm1758, %v2121, %v2123
      %v2125 = vrot.slane %v2104, 2
      %v2126 = vsel %vm1758, %v2123, %v2125
      %v2127 = vrot.slane %v2105, 2
      %v2128 = vsel %vm1758, %v2125, %v2127
      %v2129 = vrot.slane %v2106, 2
      %v2130 = vsel %vm1758, %v2127, %v2129
      %v2131 = vrot.slane %v2107, 2
      %v2132 = vsel %vm1758, %v2129, %v2131
      %v2133 = vrot.slane %v2108, 2
      %v2134 = vsel %vm1758, %v2131, %v2133
      %v2135 = vrot.slane %v2109, 2
      %v2136 = vsel %vm1758, %v2133, %v2135
      %v2137 = vrot.slane %v2110, 2
      %v2138 = vsel %vm1758, %v2135, %v2137
      %v2139 = vrot.slane %v2111, 2
      %v2140 = vsel %vm1758, %v2137, %v2139
      %v2141 = vrot.slane %v2112, 2
      %v2142 = vsel %vm1758, %v2139, %v2141
      %v2143 = vrot.slane %v2113, 2
      %v2144 = vsel %vm1758, %v2141, %v2143
      %v2145 = vrot.slane %v2114, 2
      %v2146 = vsel %vm1758, %v2143, %v2145
      %v2147 = vrot.slane %v2115, 2
      %v2148 = vsel %vm1758, %v2145, %v2147
      %v2149 = vrot.slane %v2116, 2
      %v2150 = vsel %vm1758, %v2147, %v2149
      %v2151 = vrot.slane %v2117, 2
      %v2152 = vsel %vm1758, %v2149, %v2151
      %v2153 = vrot.slane %v2118, 2
      %v2154 = vsel %vm1758, %v2151, %v2153
      %v2155 = vrot.slane %v2119, 2
      %v2156 = vsel %vm1758, %v2153, %v2155
      %v2158 = vsel %vm490, %v2122, 0
      %v2161 = vsel %vm490, %v2124, 0
      %v2164 = vsel %vm490, %v2126, 0
      %v2167 = vsel %vm490, %v2128, 0
      %v2170 = vsel %vm490, %v2130, 0
      %v2173 = vsel %vm490, %v2132, 0
      %v2176 = vsel %vm490, %v2134, 0
      %v2179 = vsel %vm490, %v2136, 0
      %v2182 = vsel %vm490, %v2138, 0
      %v2185 = vsel %vm490, %v2140, 0
      %v2188 = vsel %vm490, %v2142, 0
      %v2191 = vsel %vm490, %v2144, 0
      %v2194 = vsel %vm490, %v2146, 0
      %v2197 = vsel %vm490, %v2148, 0
      %v2200 = vsel %vm490, %v2150, 0
      %v2203 = vsel %vm490, %v2152, 0
      %v2206 = vsel %vm490, %v2154, 0
      %v2209 = vsel %vm490, %v2156, 0
      %v2212 = vsel %vm545, %v2026, 0
      %2214 = vmatpush.bf16.msra.mxu0 0
      %2215 = vmatpush.bf16.msra.mxu0 0
      %2216 = vmatpush.bf16.msra.mxu0 0
      %2217 = vmatpush.bf16.msra.mxu0 0
      %2218 = vmatpush.bf16.msra.mxu0 0
      %2219 = vmatpush.bf16.msra.mxu0 0
      %2220 = vmatpush.bf16.msra.mxu0 0
      %2221 = vmatpush.bf16.msra.mxu0 %v2212
      %2222 = vmatmul.bf16.gmra.mxu0 %v2158
      %v2223 = vpop.f32.mrf.mxu0
      %v2224 = vadd.f32 0.0, %v2223
      %v2225 = vpop.f32.mrf.mxu0
      %v2226 = vadd.f32 0.0, %v2225
      %2227 = vmatmul.bf16.gmra.mxu0 %v2161
      %v2228 = vpop.f32.mrf.mxu0
      %v2229 = vadd.f32 0.0, %v2228
      %v2230 = vpop.f32.mrf.mxu0
      %v2231 = vadd.f32 0.0, %v2230
      %2232 = vmatmul.bf16.gmra.mxu0 %v2164
      %v2233 = vpop.f32.mrf.mxu0
      %v2234 = vadd.f32 0.0, %v2233
      %v2235 = vpop.f32.mrf.mxu0
      %v2236 = vadd.f32 0.0, %v2235
      %2237 = vmatmul.bf16.gmra.mxu0 %v2167
      %v2238 = vpop.f32.mrf.mxu0
      %v2239 = vadd.f32 0.0, %v2238
      %v2240 = vpop.f32.mrf.mxu0
      %v2241 = vadd.f32 0.0, %v2240
      %2242 = vmatmul.bf16.gmra.mxu0 %v2170
      %v2243 = vpop.f32.mrf.mxu0
      %v2244 = vadd.f32 0.0, %v2243
      %v2245 = vpop.f32.mrf.mxu0
      %v2246 = vadd.f32 0.0, %v2245
      %2247 = vmatmul.bf16.gmra.mxu0 %v2173
      %v2248 = vpop.f32.mrf.mxu0
      %v2249 = vadd.f32 0.0, %v2248
      %v2250 = vpop.f32.mrf.mxu0
      %v2251 = vadd.f32 0.0, %v2250
      %2252 = vmatmul.bf16.gmra.mxu0 %v2176
      %v2253 = vpop.f32.mrf.mxu0
      %v2254 = vadd.f32 0.0, %v2253
      %v2255 = vpop.f32.mrf.mxu0
      %v2256 = vadd.f32 0.0, %v2255
      %2257 = vmatmul.bf16.gmra.mxu0 %v2179
      %v2258 = vpop.f32.mrf.mxu0
      %v2259 = vadd.f32 0.0, %v2258
      %v2260 = vpop.f32.mrf.mxu0
      %v2261 = vadd.f32 0.0, %v2260
      %2262 = vmatmul.bf16.gmra.mxu0 %v2182
      %v2263 = vpop.f32.mrf.mxu0
      %v2264 = vadd.f32 0.0, %v2263
      %v2265 = vpop.f32.mrf.mxu0
      %v2266 = vadd.f32 0.0, %v2265
      %2267 = vmatmul.bf16.gmra.mxu0 %v2185
      %v2268 = vpop.f32.mrf.mxu0
      %v2269 = vadd.f32 0.0, %v2268
      %v2270 = vpop.f32.mrf.mxu0
      %v2271 = vadd.f32 0.0, %v2270
      %2272 = vmatmul.bf16.gmra.mxu0 %v2188
      %v2273 = vpop.f32.mrf.mxu0
      %v2274 = vadd.f32 0.0, %v2273
      %v2275 = vpop.f32.mrf.mxu0
      %v2276 = vadd.f32 0.0, %v2275
      %2277 = vmatmul.bf16.gmra.mxu0 %v2191
      %v2278 = vpop.f32.mrf.mxu0
      %v2279 = vadd.f32 0.0, %v2278
      %v2280 = vpop.f32.mrf.mxu0
      %v2281 = vadd.f32 0.0, %v2280
      %2282 = vmatmul.bf16.gmra.mxu0 %v2194
      %v2283 = vpop.f32.mrf.mxu0
      %v2284 = vadd.f32 0.0, %v2283
      %v2285 = vpop.f32.mrf.mxu0
      %v2286 = vadd.f32 0.0, %v2285
      %2287 = vmatmul.bf16.gmra.mxu0 %v2197
      %v2288 = vpop.f32.mrf.mxu0
      %v2289 = vadd.f32 0.0, %v2288
      %v2290 = vpop.f32.mrf.mxu0
      %v2291 = vadd.f32 0.0, %v2290
      %2292 = vmatmul.bf16.gmra.mxu0 %v2200
      %v2293 = vpop.f32.mrf.mxu0
      %v2294 = vadd.f32 0.0, %v2293
      %v2295 = vpop.f32.mrf.mxu0
      %v2296 = vadd.f32 0.0, %v2295
      %2297 = vmatmul.bf16.gmra.mxu0 %v2203
      %v2298 = vpop.f32.mrf.mxu0
      %v2299 = vadd.f32 0.0, %v2298
      %v2300 = vpop.f32.mrf.mxu0
      %v2301 = vadd.f32 0.0, %v2300
      %2302 = vmatmul.bf16.gmra.mxu0 %v2206
      %v2303 = vpop.f32.mrf.mxu0
      %v2304 = vadd.f32 0.0, %v2303
      %v2305 = vpop.f32.mrf.mxu0
      %v2306 = vadd.f32 0.0, %v2305
      %2307 = vmatmul.bf16.gmra.mxu0 %v2209
      %v2308 = vpop.f32.mrf.mxu0
      %v2309 = vadd.f32 0.0, %v2308
      %v2310 = vpop.f32.mrf.mxu0
      %v2311 = vadd.f32 0.0, %v2310
      %2312 = vdwg.mxu0
      %v2313 = vadd.f32 %v1952, %v2224
      %v2314 = vadd.f32 %v1953, %v2226
      %v2315 = vadd.f32 %v1954, %v2229
      %v2316 = vadd.f32 %v1955, %v2231
      %v2317 = vadd.f32 %v1956, %v2234
      %v2318 = vadd.f32 %v1957, %v2236
      %v2319 = vadd.f32 %v1958, %v2239
      %v2320 = vadd.f32 %v1959, %v2241
      %v2321 = vadd.f32 %v1960, %v2244
      %v2322 = vadd.f32 %v1961, %v2246
      %v2323 = vadd.f32 %v1962, %v2249
      %v2324 = vadd.f32 %v1963, %v2251
      %v2325 = vadd.f32 %v1964, %v2254
      %v2326 = vadd.f32 %v1965, %v2256
      %v2327 = vadd.f32 %v1966, %v2259
      %v2328 = vadd.f32 %v1967, %v2261
      %v2329 = vadd.f32 %v1968, %v2264
      %v2330 = vadd.f32 %v1969, %v2266
      %v2331 = vadd.f32 %v1970, %v2269
      %v2332 = vadd.f32 %v1971, %v2271
      %v2333 = vadd.f32 %v1972, %v2274
      %v2334 = vadd.f32 %v1973, %v2276
      %v2335 = vadd.f32 %v1974, %v2279
      %v2336 = vadd.f32 %v1975, %v2281
      %v2337 = vadd.f32 %v1976, %v2284
      %v2338 = vadd.f32 %v1977, %v2286
      %v2339 = vadd.f32 %v1978, %v2289
      %v2340 = vadd.f32 %v1979, %v2291
      %v2341 = vadd.f32 %v1980, %v2294
      %v2342 = vadd.f32 %v1981, %v2296
      %v2343 = vadd.f32 %v1982, %v2299
      %v2344 = vadd.f32 %v1983, %v2301
      %v2345 = vadd.f32 %v1984, %v2304
      %v2346 = vadd.f32 %v1985, %v2306
      %v2347 = vadd.f32 %v1986, %v2309
      %v2348 = vadd.f32 %v1987, %v2311
      %v2349 = vld [vmem:[%s197 + $0xa0] sm:$0x7]
      %s2350 = scalar_lea.vmem %s1, 14
      %v2351 = vld [vmem:[%s2350] sm:$0x3]
      %v2353 = vunpack.c.l.b16 %v2349
      %v2354 = vpack.c.b16 %v2353, %v2353
      %vm2355 = vsmask.f32 5376
      %v2357 = vshrl.u32 %v2101, 16
      %v2359 = vrot.slane %v2357, 2
      %v2360 = vshll.u32 %v2101, 16
      %v2362 = vrot.slane %v2360, 3
      %v2363 = vor.u32 %v2359, %v2362
      %v2365 = vshrl.u32 %v2102, 16
      %v2367 = vrot.slane %v2365, 2
      %v2368 = vshll.u32 %v2102, 16
      %v2370 = vrot.slane %v2368, 3
      %v2371 = vor.u32 %v2367, %v2370
      %v2372 = vsel %vm2355, %v2363, %v2371
      %v2374 = vshrl.u32 %v2103, 16
      %v2376 = vrot.slane %v2374, 2
      %v2377 = vshll.u32 %v2103, 16
      %v2379 = vrot.slane %v2377, 3
      %v2380 = vor.u32 %v2376, %v2379
      %v2381 = vsel %vm2355, %v2371, %v2380
      %v2383 = vshrl.u32 %v2104, 16
      %v2385 = vrot.slane %v2383, 2
      %v2386 = vshll.u32 %v2104, 16
      %v2388 = vrot.slane %v2386, 3
      %v2389 = vor.u32 %v2385, %v2388
      %v2390 = vsel %vm2355, %v2380, %v2389
      %v2392 = vshrl.u32 %v2105, 16
      %v2394 = vrot.slane %v2392, 2
      %v2395 = vshll.u32 %v2105, 16
      %v2397 = vrot.slane %v2395, 3
      %v2398 = vor.u32 %v2394, %v2397
      %v2399 = vsel %vm2355, %v2389, %v2398
      %v2401 = vshrl.u32 %v2106, 16
      %v2403 = vrot.slane %v2401, 2
      %v2404 = vshll.u32 %v2106, 16
      %v2406 = vrot.slane %v2404, 3
      %v2407 = vor.u32 %v2403, %v2406
      %v2408 = vsel %vm2355, %v2398, %v2407
      %v2410 = vshrl.u32 %v2107, 16
      %v2412 = vrot.slane %v2410, 2
      %v2413 = vshll.u32 %v2107, 16
      %v2415 = vrot.slane %v2413, 3
      %v2416 = vor.u32 %v2412, %v2415
      %v2417 = vsel %vm2355, %v2407, %v2416
      %v2419 = vshrl.u32 %v2108, 16
      %v2421 = vrot.slane %v2419, 2
      %v2422 = vshll.u32 %v2108, 16
      %v2424 = vrot.slane %v2422, 3
      %v2425 = vor.u32 %v2421, %v2424
      %v2426 = vsel %vm2355, %v2416, %v2425
      %v2428 = vshrl.u32 %v2109, 16
      %v2430 = vrot.slane %v2428, 2
      %v2431 = vshll.u32 %v2109, 16
      %v2433 = vrot.slane %v2431, 3
      %v2434 = vor.u32 %v2430, %v2433
      %v2435 = vsel %vm2355, %v2425, %v2434
      %v2437 = vshrl.u32 %v2110, 16
      %v2439 = vrot.slane %v2437, 2
      %v2440 = vshll.u32 %v2110, 16
      %v2442 = vrot.slane %v2440, 3
      %v2443 = vor.u32 %v2439, %v2442
      %v2444 = vsel %vm2355, %v2434, %v2443
      %v2446 = vshrl.u32 %v2111, 16
      %v2448 = vrot.slane %v2446, 2
      %v2449 = vshll.u32 %v2111, 16
      %v2451 = vrot.slane %v2449, 3
      %v2452 = vor.u32 %v2448, %v2451
      %v2453 = vsel %vm2355, %v2443, %v2452
      %v2455 = vshrl.u32 %v2112, 16
      %v2457 = vrot.slane %v2455, 2
      %v2458 = vshll.u32 %v2112, 16
      %v2460 = vrot.slane %v2458, 3
      %v2461 = vor.u32 %v2457, %v2460
      %v2462 = vsel %vm2355, %v2452, %v2461
      %v2464 = vshrl.u32 %v2113, 16
      %v2466 = vrot.slane %v2464, 2
      %v2467 = vshll.u32 %v2113, 16
      %v2469 = vrot.slane %v2467, 3
      %v2470 = vor.u32 %v2466, %v2469
      %v2471 = vsel %vm2355, %v2461, %v2470
      %v2473 = vshrl.u32 %v2114, 16
      %v2475 = vrot.slane %v2473, 2
      %v2476 = vshll.u32 %v2114, 16
      %v2478 = vrot.slane %v2476, 3
      %v2479 = vor.u32 %v2475, %v2478
      %v2480 = vsel %vm2355, %v2470, %v2479
      %v2482 = vshrl.u32 %v2115, 16
      %v2484 = vrot.slane %v2482, 2
      %v2485 = vshll.u32 %v2115, 16
      %v2487 = vrot.slane %v2485, 3
      %v2488 = vor.u32 %v2484, %v2487
      %v2489 = vsel %vm2355, %v2479, %v2488
      %v2491 = vshrl.u32 %v2116, 16
      %v2493 = vrot.slane %v2491, 2
      %v2494 = vshll.u32 %v2116, 16
      %v2496 = vrot.slane %v2494, 3
      %v2497 = vor.u32 %v2493, %v2496
      %v2498 = vsel %vm2355, %v2488, %v2497
      %v2500 = vshrl.u32 %v2117, 16
      %v2502 = vrot.slane %v2500, 2
      %v2503 = vshll.u32 %v2117, 16
      %v2505 = vrot.slane %v2503, 3
      %v2506 = vor.u32 %v2502, %v2505
      %v2507 = vsel %vm2355, %v2497, %v2506
      %v2509 = vshrl.u32 %v2118, 16
      %v2511 = vrot.slane %v2509, 2
      %v2512 = vshll.u32 %v2118, 16
      %v2514 = vrot.slane %v2512, 3
      %v2515 = vor.u32 %v2511, %v2514
      %v2516 = vsel %vm2355, %v2506, %v2515
      %v2518 = vshrl.u32 %v2354, 16
      %v2520 = vrot.slane %v2518, 2
      %v2521 = vshll.u32 %v2354, 16
      %v2523 = vrot.slane %v2521, 3
      %v2524 = vor.u32 %v2520, %v2523
      %v2525 = vsel %vm2355, %v2515, %v2524
      %v2527 = vsel %vm490, %v2372, 0
      %v2530 = vsel %vm490, %v2381, 0
      %v2533 = vsel %vm490, %v2390, 0
      %v2536 = vsel %vm490, %v2399, 0
      %v2539 = vsel %vm490, %v2408, 0
      %v2542 = vsel %vm490, %v2417, 0
      %v2545 = vsel %vm490, %v2426, 0
      %v2548 = vsel %vm490, %v2435, 0
      %v2551 = vsel %vm490, %v2444, 0
      %v2554 = vsel %vm490, %v2453, 0
      %v2557 = vsel %vm490, %v2462, 0
      %v2560 = vsel %vm490, %v2471, 0
      %v2563 = vsel %vm490, %v2480, 0
      %v2566 = vsel %vm490, %v2489, 0
      %v2569 = vsel %vm490, %v2498, 0
      %v2572 = vsel %vm490, %v2507, 0
      %v2575 = vsel %vm490, %v2516, 0
      %v2578 = vsel %vm490, %v2525, 0
      %v2581 = vsel %vm545, %v2351, 0
      %2583 = vmatpush.bf16.msra.mxu0 0
      %2584 = vmatpush.bf16.msra.mxu0 0
      %2585 = vmatpush.bf16.msra.mxu0 0
      %2586 = vmatpush.bf16.msra.mxu0 0
      %2587 = vmatpush.bf16.msra.mxu0 0
      %2588 = vmatpush.bf16.msra.mxu0 0
      %2589 = vmatpush.bf16.msra.mxu0 0
      %2590 = vmatpush.bf16.msra.mxu0 %v2581
      %2591 = vmatmul.bf16.gmra.mxu0 %v2527
      %v2592 = vpop.f32.mrf.mxu0
      %v2593 = vadd.f32 0.0, %v2592
      %v2594 = vpop.f32.mrf.mxu0
      %v2595 = vadd.f32 0.0, %v2594
      %2596 = vmatmul.bf16.gmra.mxu0 %v2530
      %v2597 = vpop.f32.mrf.mxu0
      %v2598 = vadd.f32 0.0, %v2597
      %v2599 = vpop.f32.mrf.mxu0
      %v2600 = vadd.f32 0.0, %v2599
      %2601 = vmatmul.bf16.gmra.mxu0 %v2533
      %v2602 = vpop.f32.mrf.mxu0
      %v2603 = vadd.f32 0.0, %v2602
      %v2604 = vpop.f32.mrf.mxu0
      %v2605 = vadd.f32 0.0, %v2604
      %2606 = vmatmul.bf16.gmra.mxu0 %v2536
      %v2607 = vpop.f32.mrf.mxu0
      %v2608 = vadd.f32 0.0, %v2607
      %v2609 = vpop.f32.mrf.mxu0
      %v2610 = vadd.f32 0.0, %v2609
      %2611 = vmatmul.bf16.gmra.mxu0 %v2539
      %v2612 = vpop.f32.mrf.mxu0
      %v2613 = vadd.f32 0.0, %v2612
      %v2614 = vpop.f32.mrf.mxu0
      %v2615 = vadd.f32 0.0, %v2614
      %2616 = vmatmul.bf16.gmra.mxu0 %v2542
      %v2617 = vpop.f32.mrf.mxu0
      %v2618 = vadd.f32 0.0, %v2617
      %v2619 = vpop.f32.mrf.mxu0
      %v2620 = vadd.f32 0.0, %v2619
      %2621 = vmatmul.bf16.gmra.mxu0 %v2545
      %v2622 = vpop.f32.mrf.mxu0
      %v2623 = vadd.f32 0.0, %v2622
      %v2624 = vpop.f32.mrf.mxu0
      %v2625 = vadd.f32 0.0, %v2624
      %2626 = vmatmul.bf16.gmra.mxu0 %v2548
      %v2627 = vpop.f32.mrf.mxu0
      %v2628 = vadd.f32 0.0, %v2627
      %v2629 = vpop.f32.mrf.mxu0
      %v2630 = vadd.f32 0.0, %v2629
      %2631 = vmatmul.bf16.gmra.mxu0 %v2551
      %v2632 = vpop.f32.mrf.mxu0
      %v2633 = vadd.f32 0.0, %v2632
      %v2634 = vpop.f32.mrf.mxu0
      %v2635 = vadd.f32 0.0, %v2634
      %2636 = vmatmul.bf16.gmra.mxu0 %v2554
      %v2637 = vpop.f32.mrf.mxu0
      %v2638 = vadd.f32 0.0, %v2637
      %v2639 = vpop.f32.mrf.mxu0
      %v2640 = vadd.f32 0.0, %v2639
      %2641 = vmatmul.bf16.gmra.mxu0 %v2557
      %v2642 = vpop.f32.mrf.mxu0
      %v2643 = vadd.f32 0.0, %v2642
      %v2644 = vpop.f32.mrf.mxu0
      %v2645 = vadd.f32 0.0, %v2644
      %2646 = vmatmul.bf16.gmra.mxu0 %v2560
      %v2647 = vpop.f32.mrf.mxu0
      %v2648 = vadd.f32 0.0, %v2647
      %v2649 = vpop.f32.mrf.mxu0
      %v2650 = vadd.f32 0.0, %v2649
      %2651 = vmatmul.bf16.gmra.mxu0 %v2563
      %v2652 = vpop.f32.mrf.mxu0
      %v2653 = vadd.f32 0.0, %v2652
      %v2654 = vpop.f32.mrf.mxu0
      %v2655 = vadd.f32 0.0, %v2654
      %2656 = vmatmul.bf16.gmra.mxu0 %v2566
      %v2657 = vpop.f32.mrf.mxu0
      %v2658 = vadd.f32 0.0, %v2657
      %v2659 = vpop.f32.mrf.mxu0
      %v2660 = vadd.f32 0.0, %v2659
      %2661 = vmatmul.bf16.gmra.mxu0 %v2569
      %v2662 = vpop.f32.mrf.mxu0
      %v2663 = vadd.f32 0.0, %v2662
      %v2664 = vpop.f32.mrf.mxu0
      %v2665 = vadd.f32 0.0, %v2664
      %2666 = vmatmul.bf16.gmra.mxu0 %v2572
      %v2667 = vpop.f32.mrf.mxu0
      %v2668 = vadd.f32 0.0, %v2667
      %v2669 = vpop.f32.mrf.mxu0
      %v2670 = vadd.f32 0.0, %v2669
      %2671 = vmatmul.bf16.gmra.mxu0 %v2575
      %v2672 = vpop.f32.mrf.mxu0
      %v2673 = vadd.f32 0.0, %v2672
      %v2674 = vpop.f32.mrf.mxu0
      %v2675 = vadd.f32 0.0, %v2674
      %2676 = vmatmul.bf16.gmra.mxu0 %v2578
      %v2677 = vpop.f32.mrf.mxu0
      %v2678 = vadd.f32 0.0, %v2677
      %v2679 = vpop.f32.mrf.mxu0
      %v2680 = vadd.f32 0.0, %v2679
      %2681 = vdwg.mxu0
      %v2682 = vadd.f32 %v2313, %v2593
      %v2683 = vadd.f32 %v2314, %v2595
      %v2684 = vadd.f32 %v2315, %v2598
      %v2685 = vadd.f32 %v2316, %v2600
      %v2686 = vadd.f32 %v2317, %v2603
      %v2687 = vadd.f32 %v2318, %v2605
      %v2688 = vadd.f32 %v2319, %v2608
      %v2689 = vadd.f32 %v2320, %v2610
      %v2690 = vadd.f32 %v2321, %v2613
      %v2691 = vadd.f32 %v2322, %v2615
      %v2692 = vadd.f32 %v2323, %v2618
      %v2693 = vadd.f32 %v2324, %v2620
      %v2694 = vadd.f32 %v2325, %v2623
      %v2695 = vadd.f32 %v2326, %v2625
      %v2696 = vadd.f32 %v2327, %v2628
      %v2697 = vadd.f32 %v2328, %v2630
      %v2698 = vadd.f32 %v2329, %v2633
      %v2699 = vadd.f32 %v2330, %v2635
      %v2700 = vadd.f32 %v2331, %v2638
      %v2701 = vadd.f32 %v2332, %v2640
      %v2702 = vadd.f32 %v2333, %v2643
      %v2703 = vadd.f32 %v2334, %v2645
      %v2704 = vadd.f32 %v2335, %v2648
      %v2705 = vadd.f32 %v2336, %v2650
      %v2706 = vadd.f32 %v2337, %v2653
      %v2707 = vadd.f32 %v2338, %v2655
      %v2708 = vadd.f32 %v2339, %v2658
      %v2709 = vadd.f32 %v2340, %v2660
      %v2710 = vadd.f32 %v2341, %v2663
      %v2711 = vadd.f32 %v2342, %v2665
      %v2712 = vadd.f32 %v2343, %v2668
      %v2713 = vadd.f32 %v2344, %v2670
      %v2714 = vadd.f32 %v2345, %v2673
      %v2715 = vadd.f32 %v2346, %v2675
      %v2716 = vadd.f32 %v2347, %v2678
      %v2717 = vadd.f32 %v2348, %v2680
      %v2718 = vld [vmem:[%s197 + $0x10] sm:$0x8]
      %s2719 = scalar_lea.vmem %s1, 16
      %v2720 = vld [vmem:[%s2719] sm:$0x3]
      %v2722 = vunpack.c.l.b16 %v2718
      %v2723 = vpack.c.b16 %v2065, %v2722
      %vm2724 = vcmask 1044480
      %v2725 = vrot.slane %v2723, 3
      %v2726 = vrot.slane %v2102, 3
      %v2727 = vsel %vm2724, %v2725, %v2726
      %v2728 = vrot.slane %v2103, 3
      %v2729 = vsel %vm2724, %v2726, %v2728
      %v2730 = vrot.slane %v2104, 3
      %v2731 = vsel %vm2724, %v2728, %v2730
      %v2732 = vrot.slane %v2105, 3
      %v2733 = vsel %vm2724, %v2730, %v2732
      %v2734 = vrot.slane %v2106, 3
      %v2735 = vsel %vm2724, %v2732, %v2734
      %v2736 = vrot.slane %v2107, 3
      %v2737 = vsel %vm2724, %v2734, %v2736
      %v2738 = vrot.slane %v2108, 3
      %v2739 = vsel %vm2724, %v2736, %v2738
      %v2740 = vrot.slane %v2109, 3
      %v2741 = vsel %vm2724, %v2738, %v2740
      %v2742 = vrot.slane %v2110, 3
      %v2743 = vsel %vm2724, %v2740, %v2742
      %v2744 = vrot.slane %v2111, 3
      %v2745 = vsel %vm2724, %v2742, %v2744
      %v2746 = vrot.slane %v2112, 3
      %v2747 = vsel %vm2724, %v2744, %v2746
      %v2748 = vrot.slane %v2113, 3
      %v2749 = vsel %vm2724, %v2746, %v2748
      %v2750 = vrot.slane %v2114, 3
      %v2751 = vsel %vm2724, %v2748, %v2750
      %v2752 = vrot.slane %v2115, 3
      %v2753 = vsel %vm2724, %v2750, %v2752
      %v2754 = vrot.slane %v2116, 3
      %v2755 = vsel %vm2724, %v2752, %v2754
      %v2756 = vrot.slane %v2117, 3
      %v2757 = vsel %vm2724, %v2754, %v2756
      %v2758 = vrot.slane %v2118, 3
      %v2759 = vsel %vm2724, %v2756, %v2758
      %v2760 = vrot.slane %v2354, 3
      %v2761 = vsel %vm2724, %v2758, %v2760
      %v2763 = vsel %vm490, %v2727, 0
      %v2766 = vsel %vm490, %v2729, 0
      %v2769 = vsel %vm490, %v2731, 0
      %v2772 = vsel %vm490, %v2733, 0
      %v2775 = vsel %vm490, %v2735, 0
      %v2778 = vsel %vm490, %v2737, 0
      %v2781 = vsel %vm490, %v2739, 0
      %v2784 = vsel %vm490, %v2741, 0
      %v2787 = vsel %vm490, %v2743, 0
      %v2790 = vsel %vm490, %v2745, 0
      %v2793 = vsel %vm490, %v2747, 0
      %v2796 = vsel %vm490, %v2749, 0
      %v2799 = vsel %vm490, %v2751, 0
      %v2802 = vsel %vm490, %v2753, 0
      %v2805 = vsel %vm490, %v2755, 0
      %v2808 = vsel %vm490, %v2757, 0
      %v2811 = vsel %vm490, %v2759, 0
      %v2814 = vsel %vm490, %v2761, 0
      %v2817 = vsel %vm545, %v2720, 0
      %2819 = vmatpush.bf16.msra.mxu0 0
      %2820 = vmatpush.bf16.msra.mxu0 0
      %2821 = vmatpush.bf16.msra.mxu0 0
      %2822 = vmatpush.bf16.msra.mxu0 0
      %2823 = vmatpush.bf16.msra.mxu0 0
      %2824 = vmatpush.bf16.msra.mxu0 0
      %2825 = vmatpush.bf16.msra.mxu0 0
      %2826 = vmatpush.bf16.msra.mxu0 %v2817
      %2827 = vmatmul.bf16.gmra.mxu0 %v2763
      %v2828 = vpop.f32.mrf.mxu0
      %v2829 = vadd.f32 0.0, %v2828
      %v2830 = vpop.f32.mrf.mxu0
      %v2831 = vadd.f32 0.0, %v2830
      %2832 = vmatmul.bf16.gmra.mxu0 %v2766
      %v2833 = vpop.f32.mrf.mxu0
      %v2834 = vadd.f32 0.0, %v2833
      %v2835 = vpop.f32.mrf.mxu0
      %v2836 = vadd.f32 0.0, %v2835
      %2837 = vmatmul.bf16.gmra.mxu0 %v2769
      %v2838 = vpop.f32.mrf.mxu0
      %v2839 = vadd.f32 0.0, %v2838
      %v2840 = vpop.f32.mrf.mxu0
      %v2841 = vadd.f32 0.0, %v2840
      %2842 = vmatmul.bf16.gmra.mxu0 %v2772
      %v2843 = vpop.f32.mrf.mxu0
      %v2844 = vadd.f32 0.0, %v2843
      %v2845 = vpop.f32.mrf.mxu0
      %v2846 = vadd.f32 0.0, %v2845
      %2847 = vmatmul.bf16.gmra.mxu0 %v2775
      %v2848 = vpop.f32.mrf.mxu0
      %v2849 = vadd.f32 0.0, %v2848
      %v2850 = vpop.f32.mrf.mxu0
      %v2851 = vadd.f32 0.0, %v2850
      %2852 = vmatmul.bf16.gmra.mxu0 %v2778
      %v2853 = vpop.f32.mrf.mxu0
      %v2854 = vadd.f32 0.0, %v2853
      %v2855 = vpop.f32.mrf.mxu0
      %v2856 = vadd.f32 0.0, %v2855
      %2857 = vmatmul.bf16.gmra.mxu0 %v2781
      %v2858 = vpop.f32.mrf.mxu0
      %v2859 = vadd.f32 0.0, %v2858
      %v2860 = vpop.f32.mrf.mxu0
      %v2861 = vadd.f32 0.0, %v2860
      %2862 = vmatmul.bf16.gmra.mxu0 %v2784
      %v2863 = vpop.f32.mrf.mxu0
      %v2864 = vadd.f32 0.0, %v2863
      %v2865 = vpop.f32.mrf.mxu0
      %v2866 = vadd.f32 0.0, %v2865
      %2867 = vmatmul.bf16.gmra.mxu0 %v2787
      %v2868 = vpop.f32.mrf.mxu0
      %v2869 = vadd.f32 0.0, %v2868
      %v2870 = vpop.f32.mrf.mxu0
      %v2871 = vadd.f32 0.0, %v2870
      %2872 = vmatmul.bf16.gmra.mxu0 %v2790
      %v2873 = vpop.f32.mrf.mxu0
      %v2874 = vadd.f32 0.0, %v2873
      %v2875 = vpop.f32.mrf.mxu0
      %v2876 = vadd.f32 0.0, %v2875
      %2877 = vmatmul.bf16.gmra.mxu0 %v2793
      %v2878 = vpop.f32.mrf.mxu0
      %v2879 = vadd.f32 0.0, %v2878
      %v2880 = vpop.f32.mrf.mxu0
      %v2881 = vadd.f32 0.0, %v2880
      %2882 = vmatmul.bf16.gmra.mxu0 %v2796
      %v2883 = vpop.f32.mrf.mxu0
      %v2884 = vadd.f32 0.0, %v2883
      %v2885 = vpop.f32.mrf.mxu0
      %v2886 = vadd.f32 0.0, %v2885
      %2887 = vmatmul.bf16.gmra.mxu0 %v2799
      %v2888 = vpop.f32.mrf.mxu0
      %v2889 = vadd.f32 0.0, %v2888
      %v2890 = vpop.f32.mrf.mxu0
      %v2891 = vadd.f32 0.0, %v2890
      %2892 = vmatmul.bf16.gmra.mxu0 %v2802
      %v2893 = vpop.f32.mrf.mxu0
      %v2894 = vadd.f32 0.0, %v2893
      %v2895 = vpop.f32.mrf.mxu0
      %v2896 = vadd.f32 0.0, %v2895
      %2897 = vmatmul.bf16.gmra.mxu0 %v2805
      %v2898 = vpop.f32.mrf.mxu0
      %v2899 = vadd.f32 0.0, %v2898
      %v2900 = vpop.f32.mrf.mxu0
      %v2901 = vadd.f32 0.0, %v2900
      %2902 = vmatmul.bf16.gmra.mxu0 %v2808
      %v2903 = vpop.f32.mrf.mxu0
      %v2904 = vadd.f32 0.0, %v2903
      %v2905 = vpop.f32.mrf.mxu0
      %v2906 = vadd.f32 0.0, %v2905
      %2907 = vmatmul.bf16.gmra.mxu0 %v2811
      %v2908 = vpop.f32.mrf.mxu0
      %v2909 = vadd.f32 0.0, %v2908
      %v2910 = vpop.f32.mrf.mxu0
      %v2911 = vadd.f32 0.0, %v2910
      %2912 = vmatmul.bf16.gmra.mxu0 %v2814
      %v2913 = vpop.f32.mrf.mxu0
      %v2914 = vadd.f32 0.0, %v2913
      %v2915 = vpop.f32.mrf.mxu0
      %v2916 = vadd.f32 0.0, %v2915
      %2917 = vdwg.mxu0
      %v2918 = vadd.f32 %v2682, %v2829
      %v2919 = vadd.f32 %v2683, %v2831
      %v2920 = vadd.f32 %v2684, %v2834
      %v2921 = vadd.f32 %v2685, %v2836
      %v2922 = vadd.f32 %v2686, %v2839
      %v2923 = vadd.f32 %v2687, %v2841
      %v2924 = vadd.f32 %v2688, %v2844
      %v2925 = vadd.f32 %v2689, %v2846
      %v2926 = vadd.f32 %v2690, %v2849
      %v2927 = vadd.f32 %v2691, %v2851
      %v2928 = vadd.f32 %v2692, %v2854
      %v2929 = vadd.f32 %v2693, %v2856
      %v2930 = vadd.f32 %v2694, %v2859
      %v2931 = vadd.f32 %v2695, %v2861
      %v2932 = vadd.f32 %v2696, %v2864
      %v2933 = vadd.f32 %v2697, %v2866
      %v2934 = vadd.f32 %v2698, %v2869
      %v2935 = vadd.f32 %v2699, %v2871
      %v2936 = vadd.f32 %v2700, %v2874
      %v2937 = vadd.f32 %v2701, %v2876
      %v2938 = vadd.f32 %v2702, %v2879
      %v2939 = vadd.f32 %v2703, %v2881
      %v2940 = vadd.f32 %v2704, %v2884
      %v2941 = vadd.f32 %v2705, %v2886
      %v2942 = vadd.f32 %v2706, %v2889
      %v2943 = vadd.f32 %v2707, %v2891
      %v2944 = vadd.f32 %v2708, %v2894
      %v2945 = vadd.f32 %v2709, %v2896
      %v2946 = vadd.f32 %v2710, %v2899
      %v2947 = vadd.f32 %v2711, %v2901
      %v2948 = vadd.f32 %v2712, %v2904
      %v2949 = vadd.f32 %v2713, %v2906
      %v2950 = vadd.f32 %v2714, %v2909
      %v2951 = vadd.f32 %v2715, %v2911
      %v2952 = vadd.f32 %v2716, %v2914
      %v2953 = vadd.f32 %v2717, %v2916
      %v2954 = vld [vmem:[%s2] sm:$0x1]
      %v2955 = vld [vmem:[%s2 + $0x1] sm:$0x1]
      %v2956 = vperm.slane %v2954, 0
      %v2957 = vmul.f32 %v2918, %v2956
      %v2958 = vmul.f32 %v2919, %v2956
      %v2959 = vmul.f32 %v2920, %v2956
      %v2960 = vmul.f32 %v2921, %v2956
      %v2961 = vmul.f32 %v2922, %v2956
      %v2962 = vmul.f32 %v2923, %v2956
      %v2963 = vmul.f32 %v2924, %v2956
      %v2964 = vmul.f32 %v2925, %v2956
      %v2965 = vmul.f32 %v2926, %v2956
      %v2966 = vmul.f32 %v2927, %v2956
      %v2967 = vmul.f32 %v2928, %v2956
      %v2968 = vmul.f32 %v2929, %v2956
      %v2969 = vmul.f32 %v2930, %v2956
      %v2970 = vmul.f32 %v2931, %v2956
      %v2971 = vmul.f32 %v2932, %v2956
      %v2972 = vmul.f32 %v2933, %v2956
      %v2973 = vmul.f32 %v2934, %v2956
      %v2974 = vmul.f32 %v2935, %v2956
      %v2975 = vmul.f32 %v2936, %v2956
      %v2976 = vmul.f32 %v2937, %v2956
      %v2977 = vmul.f32 %v2938, %v2956
      %v2978 = vmul.f32 %v2939, %v2956
      %v2979 = vmul.f32 %v2940, %v2956
      %v2980 = vmul.f32 %v2941, %v2956
      %v2981 = vmul.f32 %v2942, %v2956
      %v2982 = vmul.f32 %v2943, %v2956
      %v2983 = vmul.f32 %v2944, %v2956
      %v2984 = vmul.f32 %v2945, %v2956
      %v2985 = vmul.f32 %v2946, %v2956
      %v2986 = vmul.f32 %v2947, %v2956
      %v2987 = vmul.f32 %v2948, %v2956
      %v2988 = vmul.f32 %v2949, %v2956
      %v2989 = vmul.f32 %v2950, %v2956
      %v2990 = vmul.f32 %v2951, %v2956
      %v2991 = vmul.f32 %v2952, %v2956
      %v2992 = vmul.f32 %v2953, %v2956
      %v2993 = vperm.slane %v2955, 0
      %v2994 = vadd.f32 %v2957, %v2993
      %v2995 = vadd.f32 %v2958, %v2993
      %v2996 = vadd.f32 %v2959, %v2993
      %v2997 = vadd.f32 %v2960, %v2993
      %v2998 = vadd.f32 %v2961, %v2993
      %v2999 = vadd.f32 %v2962, %v2993
      %v3000 = vadd.f32 %v2963, %v2993
      %v3001 = vadd.f32 %v2964, %v2993
      %v3002 = vadd.f32 %v2965, %v2993
      %v3003 = vadd.f32 %v2966, %v2993
      %v3004 = vadd.f32 %v2967, %v2993
      %v3005 = vadd.f32 %v2968, %v2993
      %v3006 = vadd.f32 %v2969, %v2993
      %v3007 = vadd.f32 %v2970, %v2993
      %v3008 = vadd.f32 %v2971, %v2993
      %v3009 = vadd.f32 %v2972, %v2993
      %v3010 = vadd.f32 %v2973, %v2993
      %v3011 = vadd.f32 %v2974, %v2993
      %v3012 = vadd.f32 %v2975, %v2993
      %v3013 = vadd.f32 %v2976, %v2993
      %v3014 = vadd.f32 %v2977, %v2993
      %v3015 = vadd.f32 %v2978, %v2993
      %v3016 = vadd.f32 %v2979, %v2993
      %v3017 = vadd.f32 %v2980, %v2993
      %v3018 = vadd.f32 %v2981, %v2993
      %v3019 = vadd.f32 %v2982, %v2993
      %v3020 = vadd.f32 %v2983, %v2993
      %v3021 = vadd.f32 %v2984, %v2993
      %v3022 = vadd.f32 %v2985, %v2993
      %v3023 = vadd.f32 %v2986, %v2993
      %v3024 = vadd.f32 %v2987, %v2993
      %v3025 = vadd.f32 %v2988, %v2993
      %v3026 = vadd.f32 %v2989, %v2993
      %v3027 = vadd.f32 %v2990, %v2993
      %v3028 = vadd.f32 %v2991, %v2993
      %v3029 = vadd.f32 %v2992, %v2993
      %v3030 = vmax.f32 %v2994, 0.0
      %v3031 = vmax.f32 %v2995, 0.0
      %v3032 = vmax.f32 %v2996, 0.0
      %v3033 = vmax.f32 %v2997, 0.0
      %v3034 = vmax.f32 %v2998, 0.0
      %v3035 = vmax.f32 %v2999, 0.0
      %v3036 = vmax.f32 %v3000, 0.0
      %v3037 = vmax.f32 %v3001, 0.0
      %v3038 = vmax.f32 %v3002, 0.0
      %v3039 = vmax.f32 %v3003, 0.0
      %v3040 = vmax.f32 %v3004, 0.0
      %v3041 = vmax.f32 %v3005, 0.0
      %v3042 = vmax.f32 %v3006, 0.0
      %v3043 = vmax.f32 %v3007, 0.0
      %v3044 = vmax.f32 %v3008, 0.0
      %v3045 = vmax.f32 %v3009, 0.0
      %v3046 = vmax.f32 %v3010, 0.0
      %v3047 = vmax.f32 %v3011, 0.0
      %v3048 = vmax.f32 %v3012, 0.0
      %v3049 = vmax.f32 %v3013, 0.0
      %v3050 = vmax.f32 %v3014, 0.0
      %v3051 = vmax.f32 %v3015, 0.0
      %v3052 = vmax.f32 %v3016, 0.0
      %v3053 = vmax.f32 %v3017, 0.0
      %v3054 = vmax.f32 %v3018, 0.0
      %v3055 = vmax.f32 %v3019, 0.0
      %v3056 = vmax.f32 %v3020, 0.0
      %v3057 = vmax.f32 %v3021, 0.0
      %v3058 = vmax.f32 %v3022, 0.0
      %v3059 = vmax.f32 %v3023, 0.0
      %v3060 = vmax.f32 %v3024, 0.0
      %v3061 = vmax.f32 %v3025, 0.0
      %v3062 = vmax.f32 %v3026, 0.0
      %v3063 = vmax.f32 %v3027, 0.0
      %v3064 = vmax.f32 %v3028, 0.0
      %v3065 = vmax.f32 %v3029, 0.0
      %v3066 = vpack.c.bf16 %v3030, %v3030
      %v3067 = vpack.c.bf16 %v3031, %v3031
      %v3068 = vpack.c.bf16 %v3032, %v3032
      %v3069 = vpack.c.bf16 %v3033, %v3033
      %v3070 = vpack.c.bf16 %v3034, %v3034
      %v3071 = vpack.c.bf16 %v3035, %v3035
      %v3072 = vpack.c.bf16 %v3036, %v3036
      %v3073 = vpack.c.bf16 %v3037, %v3037
      %v3074 = vpack.c.bf16 %v3038, %v3038
      %v3075 = vpack.c.bf16 %v3039, %v3039
      %v3076 = vpack.c.bf16 %v3040, %v3040
      %v3077 = vpack.c.bf16 %v3041, %v3041
      %v3078 = vpack.c.bf16 %v3042, %v3042
      %v3079 = vpack.c.bf16 %v3043, %v3043
      %v3080 = vpack.c.bf16 %v3044, %v3044
      %v3081 = vpack.c.bf16 %v3045, %v3045
      %v3082 = vpack.c.bf16 %v3046, %v3046
      %v3083 = vpack.c.bf16 %v3047, %v3047
      %v3084 = vpack.c.bf16 %v3048, %v3048
      %v3085 = vpack.c.bf16 %v3049, %v3049
      %v3086 = vpack.c.bf16 %v3050, %v3050
      %v3087 = vpack.c.bf16 %v3051, %v3051
      %v3088 = vpack.c.bf16 %v3052, %v3052
      %v3089 = vpack.c.bf16 %v3053, %v3053
      %v3090 = vpack.c.bf16 %v3054, %v3054
      %v3091 = vpack.c.bf16 %v3055, %v3055
      %v3092 = vpack.c.bf16 %v3056, %v3056
      %v3093 = vpack.c.bf16 %v3057, %v3057
      %v3094 = vpack.c.bf16 %v3058, %v3058
      %v3095 = vpack.c.bf16 %v3059, %v3059
      %v3096 = vpack.c.bf16 %v3060, %v3060
      %v3097 = vpack.c.bf16 %v3061, %v3061
      %v3098 = vpack.c.bf16 %v3062, %v3062
      %v3099 = vpack.c.bf16 %v3063, %v3063
      %v3100 = vpack.c.bf16 %v3064, %v3064
      %v3101 = vpack.c.bf16 %v3065, %v3065
      %3102 = vst [vmem:[%s206] sm:$0xf] %v3066
      %3103 = vst [vmem:[%s206 + $0x4] sm:$0xf] %v3067
      %3104 = vst [vmem:[%s206 + $0x8] sm:$0xf] %v3068
      %3105 = vst [vmem:[%s206 + $0xc] sm:$0xf] %v3069
      %3106 = vst [vmem:[%s206 + $0x10] sm:$0xf] %v3070
      %3107 = vst [vmem:[%s206 + $0x14] sm:$0xf] %v3071
      %3108 = vst [vmem:[%s206 + $0x18] sm:$0xf] %v3072
      %3109 = vst [vmem:[%s206 + $0x1c] sm:$0xf] %v3073
      %3110 = vst [vmem:[%s206 + $0x20] sm:$0xf] %v3074
      %3111 = vst [vmem:[%s206 + $0x24] sm:$0xf] %v3075
      %3112 = vst [vmem:[%s206 + $0x28] sm:$0xf] %v3076
      %3113 = vst [vmem:[%s206 + $0x2c] sm:$0xf] %v3077
      %3114 = vst [vmem:[%s206 + $0x30] sm:$0xf] %v3078
      %3115 = vst [vmem:[%s206 + $0x34] sm:$0xf] %v3079
      %3116 = vst [vmem:[%s206 + $0x38] sm:$0xf] %v3080
      %3117 = vst [vmem:[%s206 + $0x3c] sm:$0xf] %v3081
      %3118 = vst [vmem:[%s206 + $0x40] sm:$0xf] %v3082
      %3119 = vst [vmem:[%s206 + $0x44] sm:$0xf] %v3083
      %3120 = vst [vmem:[%s206 + $0x48] sm:$0xf] %v3084
      %3121 = vst [vmem:[%s206 + $0x4c] sm:$0xf] %v3085
      %3122 = vst [vmem:[%s206 + $0x50] sm:$0xf] %v3086
      %3123 = vst [vmem:[%s206 + $0x54] sm:$0xf] %v3087
      %3124 = vst [vmem:[%s206 + $0x58] sm:$0xf] %v3088
      %3125 = vst [vmem:[%s206 + $0x5c] sm:$0xf] %v3089
      %3126 = vst [vmem:[%s206 + $0x60] sm:$0xf] %v3090
      %3127 = vst [vmem:[%s206 + $0x64] sm:$0xf] %v3091
      %3128 = vst [vmem:[%s206 + $0x68] sm:$0xf] %v3092
      %3129 = vst [vmem:[%s206 + $0x6c] sm:$0xf] %v3093
      %3130 = vst [vmem:[%s206 + $0x70] sm:$0xf] %v3094
      %3131 = vst [vmem:[%s206 + $0x74] sm:$0xf] %v3095
      %3132 = vst [vmem:[%s206 + $0x78] sm:$0xf] %v3096
      %3133 = vst [vmem:[%s206 + $0x7c] sm:$0xf] %v3097
      %3134 = vst [vmem:[%s206 + $0x80] sm:$0xf] %v3098
      %3135 = vst [vmem:[%s206 + $0x84] sm:$0xf] %v3099
      %3136 = vst [vmem:[%s206 + $0x88] sm:$0xf] %v3100
      %3137 = vst [vmem:[%s206 + $0x8c] sm:$0xf] %v3101
      %p3138 = scmp.lt.s32.totalorder %s18, 1
      %s3139 = scalar_select %p3138, %s18, 1
      %p3140 = scmp.lt.s32.totalorder %s19, 0
      %s3141 = scalar_select %p3140, %s19, 0
      %s3142 = smul.addr %s3141, 36
      %s3143 = smul.addr %s3139, 36
      %s3144 = sadd.s32 %s3142, %s3143
      %s3145 = smul.addr %s3144, 4
      %s3146 = scalar_lea.vmem %s3, %s3145
      // Predicated region
      $region33: #{conv_layer_forward.3} parent=31 // pred_check
        %p3147 = pneg %p116
      $region34: #{conv_layer_forward.3} parent=31 // pred_check_branch
        %3149 = sbr.rel (%p3147) target = $region36
      $region35: #{conv_layer_forward.3} parent=31 // pred_region
        _
      $region36: #{conv_layer_forward.3} parent=31 // pred_fallthru
        _
    $region32: #{conv_layer_forward.3} parent=5 // pred_fallthru
      _
    %p3150 = scmp.le.s32.totalorder 2, %s9
    // Predicated region
    $region37: #{conv_layer_forward.3} parent=5 // pred_check
      %p3151 = pneg %p3150
    $region38: #{conv_layer_forward.3} parent=5 // pred_check_branch
      %3153 = sbr.rel (%p3151) target = $region40
    $region39: #{conv_layer_forward.3} parent=5 // pred_region
      %s3154 = ssub.s32 %s9, 2
      // Predicated region
      $region41: #{conv_layer_forward.3} parent=39 // pred_check
        %p3155 = pneg %p122
      $region42: #{conv_layer_forward.3} parent=39 // pred_check_branch
        %3157 = sbr.rel (%p3155) target = $region44
      $region43: #{conv_layer_forward.3} parent=39 // pred_region
        %p3158 = scmp.lt.s32.totalorder %s20, 1
        %s3159 = scalar_select %p3158, %s20, 1
        %p3160 = scmp.lt.s32.totalorder %s21, 0
        %s3161 = scalar_select %p3160, %s21, 0
        %s3162 = smul.addr %s3161, 36
        %s3163 = smul.addr %s3159, 36
        %s3164 = sadd.s32 %s3162, %s3163
        %s3165 = smul.addr %s3164, 4
        %s3166 = scalar_lea.vmem %s3, %s3165
      $region44: #{conv_layer_forward.3} parent=39 // pred_fallthru
        _
    $region40: #{conv_layer_forward.3} parent=5 // pred_fallthru
      _
  $region6: #{conv_layer_forward.3} parent=0 // loop_footer
    %s13 = sadd.s32 1, %s9
  $region7: #{conv_layer_forward.3} parent=0 // loop_footer_branch
    %8 = sbr.rel target = $region3
  $region8: #{conv_layer_forward.3} parent=0 // loop_exit
    _

// kernel: conv_layer_forward.2
$region0: #{conv_layer_forward.2}
  #allocation0 [shape = 'u32[]', space=smem, size = 0x4, offset = 0x4, fixed_abs, tag = 'smem constant byte address 0x4 - core index']
  #allocation1 [shape = 'u32[72,128]{1,0:T(1,128)}', space=vmem, size = 0x9000, scoped, tag = 'internal scratch']
  %s0 = inlined_call_operand.vmem [shape: bf16[2,1,326,4], index: 0, kind: input, shape index: {}]
  %s1 = inlined_call_operand.vmem [shape: bf16[9,4,128], index: 1, kind: input, shape index: {}]
  %s2 = inlined_call_operand.vmem [shape: f32[1,288,1], index: 2, kind: input, shape index: {}]
  %s3 = inlined_call_operand.vmem [shape: f32[2,1,2,128], index: 3, kind: output, shape index: {}]
  %s4 = sld [smem:[#allocation0]]
  $region45: #{conv_layer_forward.2} parent=0
    _
  %s6 = ssub.s32 1, %s4
  %s7 = scalar_select 0, %s6, %s4
  loop: start=0, step=1, limit=4
  $region2: #{conv_layer_forward.2} parent=0 // loop_pre_header
    _
  $region3: #{conv_layer_forward.2} parent=0 // loop_header
    %s9 = sphi 0, %s13
    %p10 = scmp.ge.s32.totalorder %s9, 4
    %s16 = sphi 0, %s28
    %s17 = sphi 0, %s24
    %s18 = sphi 0, %s16
    %s19 = sphi 0, %s17
    %s20 = sphi 0, %s18
    %s21 = sphi 0, %s19
    %s33 = sphi 0, %s35
    %s36 = sphi 0, %s33
    %s37 = sphi 0, %s36
    %s53 = sphi 0, %s37
    %s57 = sphi 0, %s57
    %s59 = sphi 0, %s57
    %s60 = sphi 0, %s59
    %s74 = sphi 0, %s60
    %s80 = sphi 0, %s82
    %s83 = sphi 0, %s80
    %s84 = sphi 0, %s83
    %s100 = sphi 0, %s84
    %s108 = sphi 0, %s110
    %s111 = sphi 0, %s108
    %s112 = sphi 0, %s111
    %s128 = sphi 0, %s112
  $region4: #{conv_layer_forward.2} parent=0 // loop_header_branch
    %12 = sbr.rel (%p10) target = $region8
  $region5: #{conv_layer_forward.2} parent=0 // loop_body
    %s14 = ssub.s32 %s9, 1
    %s15 = ssub.s32 %s9, 2
    %s22 = sadd.s32 1, %s17
    %p23 = scmp.ge.s32.totalorder %s22, 1
    %s24 = scalar_select %p23, 0, %s22
    %s25 = sadd.s32 1, %s16
    %s26 = scalar_select %p23, %s25, %s16
    %p27 = scmp.ge.s32.totalorder %s26, 2
    %s28 = scalar_select %p27, 0, %s26
    %s29 = ssub.s32 %s16, %s28
    %s30 = ssub.s32 %s17, %s24
    %s31 = sor.u32 %s29, %s30
    %p32 = scmp.eq.s32.totalorder %s31, 0
    %s34 = sadd.s32 %s33, 1
    %s35 = scalar_select %p32, %s33, %s34
    %p38 = pneg %p32
    %p39 = scmp.eq.s32.totalorder %s9, 1
    %p40 = por %p38, %p39
    %p41 = scmp.ne.s32.totalorder %s33, %s36
    %p42 = scmp.eq.s32.totalorder %s9, 0
    %p43 = por %p41, %p42
    %p44 = scmp.ne.s32.totalorder %s33, %s36
    %p45 = scmp.eq.s32.totalorder %s14, 1
    %p46 = por %p44, %p45
    %p47 = scmp.ne.s32.totalorder %s36, %s37
    %p48 = scmp.eq.s32.totalorder %s14, 0
    %p49 = por %p47, %p48
    %p50 = scmp.ne.s32.totalorder %s36, %s37
    %p51 = scmp.eq.s32.totalorder %s15, 1
    %p52 = por %p50, %p51
    %p54 = scmp.ne.s32.totalorder %s37, %s53
    %p55 = scmp.eq.s32.totalorder %s15, 0
    %p56 = por %p54, %p55
    %s58 = sadd.s32 %s57, 1
    %p61 = scmp.eq.s32.totalorder %s9, 1
    %p62 = scmp.ne.s32.totalorder %s57, %s59
    %p63 = scmp.eq.s32.totalorder %s9, 0
    %p64 = por %p62, %p63
    %p65 = scmp.ne.s32.totalorder %s57, %s59
    %p66 = scmp.eq.s32.totalorder %s14, 1
    %p67 = por %p65, %p66
    %p68 = scmp.ne.s32.totalorder %s59, %s60
    %p69 = scmp.eq.s32.totalorder %s14, 0
    %p70 = por %p68, %p69
    %p71 = scmp.ne.s32.totalorder %s59, %s60
    %p72 = scmp.eq.s32.totalorder %s15, 1
    %p73 = por %p71, %p72
    %p75 = scmp.ne.s32.totalorder %s60, %s74
    %p76 = scmp.eq.s32.totalorder %s15, 0
    %p77 = por %p75, %p76
    %s78 = ssub.s32 %s17, %s24
    %p79 = scmp.eq.s32.totalorder %s78, 0
    %s81 = sadd.s32 %s80, 1
    %s82 = scalar_select %p79, %s80, %s81
    %p85 = pneg %p79
    %p86 = scmp.eq.s32.totalorder %s9, 1
    %p87 = por %p85, %p86
    %p88 = scmp.ne.s32.totalorder %s80, %s83
    %p89 = scmp.eq.s32.totalorder %s9, 0
    %p90 = por %p88, %p89
    %p91 = scmp.ne.s32.totalorder %s80, %s83
    %p92 = scmp.eq.s32.totalorder %s14, 1
    %p93 = por %p91, %p92
    %p94 = scmp.ne.s32.totalorder %s83, %s84
    %p95 = scmp.eq.s32.totalorder %s14, 0
    %p96 = por %p94, %p95
    %p97 = scmp.ne.s32.totalorder %s83, %s84
    %p98 = scmp.eq.s32.totalorder %s15, 1
    %p99 = por %p97, %p98
    %p101 = scmp.ne.s32.totalorder %s84, %s100
    %p102 = scmp.eq.s32.totalorder %s15, 0
    %p103 = por %p101, %p102
    %s104 = ssub.s32 %s16, %s28
    %s105 = ssub.s32 %s17, %s24
    %s106 = sor.u32 %s104, %s105
    %p107 = scmp.eq.s32.totalorder %s106, 0
    %s109 = sadd.s32 %s108, 1
    %s110 = scalar_select %p107, %s108, %s109
    %p113 = pneg %p107
    %p114 = scmp.eq.s32.totalorder %s9, 1
    %p115 = por %p113, %p114
    %p116 = scmp.ne.s32.totalorder %s108, %s111
    %p117 = scmp.eq.s32.totalorder %s9, 0
    %p118 = por %p116, %p117
    %p119 = scmp.ne.s32.totalorder %s108, %s111
    %p120 = scmp.eq.s32.totalorder %s14, 1
    %p121 = por %p119, %p120
    %p122 = scmp.ne.s32.totalorder %s111, %s112
    %p123 = scmp.eq.s32.totalorder %s14, 0
    %p124 = por %p122, %p123
    %p125 = scmp.ne.s32.totalorder %s111, %s112
    %p126 = scmp.eq.s32.totalorder %s15, 1
    %p127 = por %p125, %p126
    %p129 = scmp.ne.s32.totalorder %s112, %s128
    %p130 = scmp.eq.s32.totalorder %s15, 0
    %p131 = por %p129, %p130
    %p132 = scmp.le.s32.totalorder 1, %s9
    %p133 = scmp.lt.s32.totalorder %s9, 3
    %p134 = pnand %p132, %p133
    %p135 = pneg %p134
    // Predicated region
    $region9: #{conv_layer_forward.2} parent=5 // pred_check
      _
    $region10: #{conv_layer_forward.2} parent=5 // pred_check_branch
      %137 = sbr.rel (%p134) target = $region12
    $region11: #{conv_layer_forward.2} parent=5 // pred_region
      %s138 = ssub.s32 %s9, 1
      // Predicated region
      $region13: #{conv_layer_forward.2} parent=11 // pred_check
        %p139 = pneg %p70
      $region14: #{conv_layer_forward.2} parent=11 // pred_check_branch
        %141 = sbr.rel (%p139) target = $region16
      $region15: #{conv_layer_forward.2} parent=11 // pred_region
        _
      $region16: #{conv_layer_forward.2} parent=11 // pred_fallthru
        _
      // Predicated region
      $region17: #{conv_layer_forward.2} parent=11 // pred_check
        %p142 = pneg %p96
      $region18: #{conv_layer_forward.2} parent=11 // pred_check_branch
        %144 = sbr.rel (%p142) target = $region20
      $region19: #{conv_layer_forward.2} parent=11 // pred_region
        %p145 = scmp.lt.s32.totalorder %s19, 0
        %s146 = scalar_select %p145, %s19, 0
        %s147 = smul.addr %s146, 36
        %s148 = smul.addr %s147, 8
        %s149 = scalar_lea.vmem %s2, %s148
      $region20: #{conv_layer_forward.2} parent=11 // pred_fallthru
        _
    $region12: #{conv_layer_forward.2} parent=5 // pred_fallthru
      _
    %p150 = scmp.lt.s32.totalorder %s9, 2
    // Predicated region
    $region21: #{conv_layer_forward.2} parent=5 // pred_check
      %p151 = pneg %p150
    $region22: #{conv_layer_forward.2} parent=5 // pred_check_branch
      %153 = sbr.rel (%p151) target = $region24
    $region23: #{conv_layer_forward.2} parent=5 // pred_region
      // Predicated region
      $region25: #{conv_layer_forward.2} parent=23 // pred_check
        %p154 = pneg %p43
      $region26: #{conv_layer_forward.2} parent=23 // pred_check_branch
        %156 = sbr.rel (%p154) target = $region28
      $region27: #{conv_layer_forward.2} parent=23 // pred_region
        %p157 = scmp.lt.s32.totalorder %s16, 1
        %s158 = scalar_select %p157, %s16, 1
        %p159 = scmp.lt.s32.totalorder %s17, 0
        %s160 = scalar_select %p159, %s17, 0
        %s161 = smul.addr %s160, 41
        %s162 = smul.addr %s158, 41
        %s163 = sadd.s32 %s161, %s162
        %s164 = smul.addr %s163, 4
        %s165 = scalar_lea.vmem %s0, %s164
      $region28: #{conv_layer_forward.2} parent=23 // pred_fallthru
        _
    $region24: #{conv_layer_forward.2} parent=5 // pred_fallthru
      _
    %p166 = scmp.le.s32.totalorder 1, %s9
    %p167 = scmp.lt.s32.totalorder %s9, 3
    %p168 = pnand %p166, %p167
    %p169 = pneg %p168
    // Predicated region
    $region29: #{conv_layer_forward.2} parent=5 // pred_check
      _
    $region30: #{conv_layer_forward.2} parent=5 // pred_check_branch
      %171 = sbr.rel (%p168) target = $region32
    $region31: #{conv_layer_forward.2} parent=5 // pred_region
      %s172 = ssub.s32 %s9, 1
      %p173 = scmp.lt.s32.totalorder %s18, 1
      %s174 = scalar_select %p173, %s18, 1
      %p175 = scmp.lt.s32.totalorder %s19, 0
      %s176 = scalar_select %p175, %s19, 0
      %s177 = smul.addr %s176, 41
      %s178 = smul.addr %s174, 41
      %s179 = sadd.s32 %s177, %s178
      %s180 = smul.addr %s179, 4
      %s181 = scalar_lea.vmem %s0, %s180
      %p182 = pneg %p49
      %p183 = pneg %p46
      %p184 = pneg %p70
      %p185 = pneg %p67
      %p186 = scmp.lt.s32.totalorder %s19, 0
      %s187 = scalar_select %p186, %s19, 0
      %s188 = smul.addr %s187, 36
      %s189 = smul.addr %s188, 8
      %s190 = scalar_lea.vmem %s2, %s189
      %p191 = pneg %p96
      %p192 = pneg %p93
      %p193 = pneg %p124
      %p194 = pneg %p121
      %p195 = scmp.lt.s32.totalorder %s18, 1
      %s196 = scalar_select %p195, %s18, 1
      %p197 = scmp.lt.s32.totalorder %s19, 0
      %s198 = scalar_select %p197, %s19, 0
      %s199 = sadd.s32 %s198, %s196
      %s200 = smul.addr %s199, 2
      %s201 = scalar_lea.vmem %s3, %s200
      %p202 = scmp.lt.s32.totalorder %s18, 1
      %s203 = scalar_select %p202, %s18, 1
      %p204 = scmp.lt.s32.totalorder %s19, 0
      %s205 = scalar_select %p204, %s19, 0
      %s206 = smul.addr %s205, 41
      %s207 = smul.addr %s203, 41
      %s208 = sadd.s32 %s206, %s207
      %s209 = smul.addr %s208, 4
      %s210 = scalar_lea.vmem %s0, %s209
      %p211 = scmp.lt.s32.totalorder %s19, 0
      %s212 = scalar_select %p211, %s19, 0
      %s213 = smul.addr %s212, 36
      %s214 = smul.addr %s213, 8
      %s215 = scalar_lea.vmem %s2, %s214
      %p216 = scmp.lt.s32.totalorder %s18, 1
      %s217 = scalar_select %p216, %s18, 1
      %p218 = scmp.lt.s32.totalorder %s19, 0
      %s219 = scalar_select %p218, %s19, 0
      %s220 = sadd.s32 %s219, %s217
      %s221 = smul.addr %s220, 2
      %s222 = scalar_lea.vmem %s3, %s221
      %v224 = vld [vmem:[%s210] sm:$0xf]
      %v225 = vld [vmem:[%s210 + $0x4] sm:$0xf]
      %v226 = vld [vmem:[%s210 + $0x8] sm:$0xf]
      %v227 = vld [vmem:[%s210 + $0xc] sm:$0xf]
      %v228 = vld [vmem:[%s210 + $0x10] sm:$0xf]
      %v229 = vld [vmem:[%s210 + $0x14] sm:$0xf]
      %v230 = vld [vmem:[%s210 + $0x18] sm:$0xf]
      %v231 = vld [vmem:[%s210 + $0x1c] sm:$0xf]
      %v232 = vld [vmem:[%s210 + $0x20] sm:$0xf]
      %v233 = vld [vmem:[%s210 + $0x24] sm:$0xf]
      %v234 = vld [vmem:[%s210 + $0x28] sm:$0xf]
      %v235 = vld [vmem:[%s210 + $0x2c] sm:$0xf]
      %v236 = vld [vmem:[%s210 + $0x30] sm:$0xf]
      %v237 = vld [vmem:[%s210 + $0x34] sm:$0xf]
      %v238 = vld [vmem:[%s210 + $0x38] sm:$0xf]
      %v239 = vld [vmem:[%s210 + $0x3c] sm:$0xf]
      %v240 = vld [vmem:[%s210 + $0x40] sm:$0xf]
      %v241 = vld [vmem:[%s210 + $0x44] sm:$0xf]
      %v242 = vld [vmem:[%s210 + $0x48] sm:$0xf]
      %v243 = vld [vmem:[%s210 + $0x4c] sm:$0xf]
      %v244 = vld [vmem:[%s210 + $0x50] sm:$0xf]
      %v245 = vld [vmem:[%s210 + $0x54] sm:$0xf]
      %v246 = vld [vmem:[%s210 + $0x58] sm:$0xf]
      %v247 = vld [vmem:[%s210 + $0x5c] sm:$0xf]
      %v248 = vld [vmem:[%s210 + $0x60] sm:$0xf]
      %v249 = vld [vmem:[%s210 + $0x64] sm:$0xf]
      %v250 = vld [vmem:[%s210 + $0x68] sm:$0xf]
      %v251 = vld [vmem:[%s210 + $0x6c] sm:$0xf]
      %v252 = vld [vmem:[%s210 + $0x70] sm:$0xf]
      %v253 = vld [vmem:[%s210 + $0x74] sm:$0xf]
      %v254 = vld [vmem:[%s210 + $0x78] sm:$0xf]
      %v255 = vld [vmem:[%s210 + $0x7c] sm:$0xf]
      %v256 = vld [vmem:[%s210 + $0x80] sm:$0xf]
      %v257 = vld [vmem:[%s210 + $0x84] sm:$0xf]
      %v258 = vld [vmem:[%s210 + $0x88] sm:$0xf]
      %v259 = vld [vmem:[%s210 + $0x8c] sm:$0xf]
      %v260 = vld [vmem:[%s1] sm:$0x3]
      %v261 = vld [vmem:[%s210 + $0x90] sm:$0x1]
      %s262 = scalar_lea.vmem %s1, 2
      %v263 = vld [vmem:[%s262] sm:$0x3]
      %v301 = vunpack.c.l.b16 %v224
      %v302 = vunpack.c.l.b16 %v225
      %v303 = vunpack.c.l.b16 %v226
      %v304 = vunpack.c.l.b16 %v227
      %v305 = vunpack.c.l.b16 %v228
      %v306 = vunpack.c.l.b16 %v229
      %v307 = vunpack.c.l.b16 %v230
      %v308 = vunpack.c.l.b16 %v231
      %v309 = vunpack.c.l.b16 %v232
      %v310 = vunpack.c.l.b16 %v233
      %v311 = vunpack.c.l.b16 %v234
      %v312 = vunpack.c.l.b16 %v235
      %v313 = vunpack.c.l.b16 %v236
      %v314 = vunpack.c.l.b16 %v237
      %v315 = vunpack.c.l.b16 %v238
      %v316 = vunpack.c.l.b16 %v239
      %v317 = vunpack.c.l.b16 %v240
      %v318 = vunpack.c.l.b16 %v241
      %v319 = vunpack.c.l.b16 %v242
      %v320 = vunpack.c.l.b16 %v243
      %v321 = vunpack.c.l.b16 %v244
      %v322 = vunpack.c.l.b16 %v245
      %v323 = vunpack.c.l.b16 %v246
      %v324 = vunpack.c.l.b16 %v247
      %v325 = vunpack.c.l.b16 %v248
      %v326 = vunpack.c.l.b16 %v249
      %v327 = vunpack.c.l.b16 %v250
      %v328 = vunpack.c.l.b16 %v251
      %v329 = vunpack.c.l.b16 %v252
      %v330 = vunpack.c.l.b16 %v253
      %v331 = vunpack.c.l.b16 %v254
      %v332 = vunpack.c.l.b16 %v255
      %v333 = vunpack.c.l.b16 %v256
      %v334 = vunpack.c.l.b16 %v257
      %v335 = vunpack.c.l.b16 %v258
      %v336 = vunpack.c.l.b16 %v259
      %v337 = vunpack.c.l.b16 %v261
      %v338 = vpack.c.b16 %v302, %v301
      %v339 = vpack.c.b16 %v304, %v303
      %v340 = vpack.c.b16 %v306, %v305
      %v341 = vpack.c.b16 %v308, %v307
      %v342 = vpack.c.b16 %v310, %v309
      %v343 = vpack.c.b16 %v312, %v311
      %v344 = vpack.c.b16 %v314, %v313
      %v345 = vpack.c.b16 %v316, %v315
      %v346 = vpack.c.b16 %v318, %v317
      %v347 = vpack.c.b16 %v320, %v319
      %v348 = vpack.c.b16 %v322, %v321
      %v349 = vpack.c.b16 %v324, %v323
      %v350 = vpack.c.b16 %v326, %v325
      %v351 = vpack.c.b16 %v328, %v327
      %v352 = vpack.c.b16 %v330, %v329
      %v353 = vpack.c.b16 %v332, %v331
      %v354 = vpack.c.b16 %v334, %v333
      %v355 = vpack.c.b16 %v336, %v335
      %v356 = vpack.c.b16 %v337, %v337
      %vm357 = vsmask.f32 7424
      %v359 = vshrl.u32 %v338, 16
      %v361 = vshll.u32 %v338, 16
      %v363 = vrot.slane %v361, 1
      %v364 = vor.u32 %v359, %v363
      %v366 = vshll.u32 %v339, 16
      %v368 = vrot.slane %v366, 1
      %v369 = vsel %vm357, %v364, %v368
      %v370 = vshrl.u32 %v339, 16
      %v372 = vor.u32 %v370, %v368
      %v374 = vshll.u32 %v340, 16
      %v376 = vrot.slane %v374, 1
      %v377 = vsel %vm357, %v372, %v376
      %v378 = vshrl.u32 %v340, 16
      %v380 = vor.u32 %v378, %v376
      %v382 = vshll.u32 %v341, 16
      %v384 = vrot.slane %v382, 1
      %v385 = vsel %vm357, %v380, %v384
      %v386 = vshrl.u32 %v341, 16
      %v388 = vor.u32 %v386, %v384
      %v390 = vshll.u32 %v342, 16
      %v392 = vrot.slane %v390, 1
      %v393 = vsel %vm357, %v388, %v392
      %v394 = vshrl.u32 %v342, 16
      %v396 = vor.u32 %v394, %v392
      %v398 = vshll.u32 %v343, 16
      %v400 = vrot.slane %v398, 1
      %v401 = vsel %vm357, %v396, %v400
      %v402 = vshrl.u32 %v343, 16
      %v404 = vor.u32 %v402, %v400
      %v406 = vshll.u32 %v344, 16
      %v408 = vrot.slane %v406, 1
      %v409 = vsel %vm357, %v404, %v408
      %v410 = vshrl.u32 %v344, 16
      %v412 = vor.u32 %v410, %v408
      %v414 = vshll.u32 %v345, 16
      %v416 = vrot.slane %v414, 1
      %v417 = vsel %vm357, %v412, %v416
      %v418 = vshrl.u32 %v345, 16
      %v420 = vor.u32 %v418, %v416
      %v422 = vshll.u32 %v346, 16
      %v424 = vrot.slane %v422, 1
      %v425 = vsel %vm357, %v420, %v424
      %v426 = vshrl.u32 %v346, 16
      %v428 = vor.u32 %v426, %v424
      %v430 = vshll.u32 %v347, 16
      %v432 = vrot.slane %v430, 1
      %v433 = vsel %vm357, %v428, %v432
      %v434 = vshrl.u32 %v347, 16
      %v436 = vor.u32 %v434, %v432
      %v438 = vshll.u32 %v348, 16
      %v440 = vrot.slane %v438, 1
      %v441 = vsel %vm357, %v436, %v440
      %v442 = vshrl.u32 %v348, 16
      %v444 = vor.u32 %v442, %v440
      %v446 = vshll.u32 %v349, 16
      %v448 = vrot.slane %v446, 1
      %v449 = vsel %vm357, %v444, %v448
      %v450 = vshrl.u32 %v349, 16
      %v452 = vor.u32 %v450, %v448
      %v454 = vshll.u32 %v350, 16
      %v456 = vrot.slane %v454, 1
      %v457 = vsel %vm357, %v452, %v456
      %v458 = vshrl.u32 %v350, 16
      %v460 = vor.u32 %v458, %v456
      %v462 = vshll.u32 %v351, 16
      %v464 = vrot.slane %v462, 1
      %v465 = vsel %vm357, %v460, %v464
      %v466 = vshrl.u32 %v351, 16
      %v468 = vor.u32 %v466, %v464
      %v470 = vshll.u32 %v352, 16
      %v472 = vrot.slane %v470, 1
      %v473 = vsel %vm357, %v468, %v472
      %v474 = vshrl.u32 %v352, 16
      %v476 = vor.u32 %v474, %v472
      %v478 = vshll.u32 %v353, 16
      %v480 = vrot.slane %v478, 1
      %v481 = vsel %vm357, %v476, %v480
      %v482 = vshrl.u32 %v353, 16
      %v484 = vor.u32 %v482, %v480
      %v486 = vshll.u32 %v354, 16
      %v488 = vrot.slane %v486, 1
      %v489 = vsel %vm357, %v484, %v488
      %v490 = vshrl.u32 %v354, 16
      %v492 = vor.u32 %v490, %v488
      %v494 = vshll.u32 %v355, 16
      %v496 = vrot.slane %v494, 1
      %v497 = vsel %vm357, %v492, %v496
      %v498 = vshrl.u32 %v355, 16
      %v500 = vor.u32 %v498, %v496
      %v502 = vshll.u32 %v356, 16
      %v504 = vrot.slane %v502, 1
      %v505 = vsel %vm357, %v500, %v504
      %vm506 = vcmask 31744
      %v508 = vsel %vm506, %v369, 0
      %v511 = vsel %vm506, %v377, 0
      %v514 = vsel %vm506, %v385, 0
      %v517 = vsel %vm506, %v393, 0
      %v520 = vsel %vm506, %v401, 0
      %v523 = vsel %vm506, %v409, 0
      %v526 = vsel %vm506, %v417, 0
      %v529 = vsel %vm506, %v425, 0
      %v532 = vsel %vm506, %v433, 0
      %v535 = vsel %vm506, %v441, 0
      %v538 = vsel %vm506, %v449, 0
      %v541 = vsel %vm506, %v457, 0
      %v544 = vsel %vm506, %v465, 0
      %v547 = vsel %vm506, %v473, 0
      %v550 = vsel %vm506, %v481, 0
      %v553 = vsel %vm506, %v489, 0
      %v556 = vsel %vm506, %v497, 0
      %v559 = vsel %vm506, %v505, 0
      %vm561 = vcmask 1041408
      %v563 = vsel %vm561, %v263, 0
      %565 = vmatpush.bf16.msra.mxu0 0
      %566 = vmatpush.bf16.msra.mxu0 0
      %567 = vmatpush.bf16.msra.mxu0 0
      %568 = vmatpush.bf16.msra.mxu0 0
      %569 = vmatpush.bf16.msra.mxu0 0
      %570 = vmatpush.bf16.msra.mxu0 0
      %571 = vmatpush.bf16.msra.mxu0 0
      %572 = vmatpush.bf16.msra.mxu0 %v563
      %573 = vmatmul.bf16.gmra.mxu0 %v508
      %v574 = vpop.f32.mrf.mxu0
      %v575 = vadd.f32 0.0, %v574
      %v576 = vpop.f32.mrf.mxu0
      %v577 = vadd.f32 0.0, %v576
      %578 = vmatmul.bf16.gmra.mxu0 %v511
      %v579 = vpop.f32.mrf.mxu0
      %v580 = vadd.f32 0.0, %v579
      %v581 = vpop.f32.mrf.mxu0
      %v582 = vadd.f32 0.0, %v581
      %583 = vmatmul.bf16.gmra.mxu0 %v514
      %v584 = vpop.f32.mrf.mxu0
      %v585 = vadd.f32 0.0, %v584
      %v586 = vpop.f32.mrf.mxu0
      %v587 = vadd.f32 0.0, %v586
      %588 = vmatmul.bf16.gmra.mxu0 %v517
      %v589 = vpop.f32.mrf.mxu0
      %v590 = vadd.f32 0.0, %v589
      %v591 = vpop.f32.mrf.mxu0
      %v592 = vadd.f32 0.0, %v591
      %593 = vmatmul.bf16.gmra.mxu0 %v520
      %v594 = vpop.f32.mrf.mxu0
      %v595 = vadd.f32 0.0, %v594
      %v596 = vpop.f32.mrf.mxu0
      %v597 = vadd.f32 0.0, %v596
      %598 = vmatmul.bf16.gmra.mxu0 %v523
      %v599 = vpop.f32.mrf.mxu0
      %v600 = vadd.f32 0.0, %v599
      %v601 = vpop.f32.mrf.mxu0
      %v602 = vadd.f32 0.0, %v601
      %603 = vmatmul.bf16.gmra.mxu0 %v526
      %v604 = vpop.f32.mrf.mxu0
      %v605 = vadd.f32 0.0, %v604
      %v606 = vpop.f32.mrf.mxu0
      %v607 = vadd.f32 0.0, %v606
      %608 = vmatmul.bf16.gmra.mxu0 %v529
      %v609 = vpop.f32.mrf.mxu0
      %v610 = vadd.f32 0.0, %v609
      %v611 = vpop.f32.mrf.mxu0
      %v612 = vadd.f32 0.0, %v611
      %613 = vmatmul.bf16.gmra.mxu0 %v532
      %v614 = vpop.f32.mrf.mxu0
      %v615 = vadd.f32 0.0, %v614
      %v616 = vpop.f32.mrf.mxu0
      %v617 = vadd.f32 0.0, %v616
      %618 = vmatmul.bf16.gmra.mxu0 %v535
      %v619 = vpop.f32.mrf.mxu0
      %v620 = vadd.f32 0.0, %v619
      %v621 = vpop.f32.mrf.mxu0
      %v622 = vadd.f32 0.0, %v621
      %623 = vmatmul.bf16.gmra.mxu0 %v538
      %v624 = vpop.f32.mrf.mxu0
      %v625 = vadd.f32 0.0, %v624
      %v626 = vpop.f32.mrf.mxu0
      %v627 = vadd.f32 0.0, %v626
      %628 = vmatmul.bf16.gmra.mxu0 %v541
      %v629 = vpop.f32.mrf.mxu0
      %v630 = vadd.f32 0.0, %v629
      %v631 = vpop.f32.mrf.mxu0
      %v632 = vadd.f32 0.0, %v631
      %633 = vmatmul.bf16.gmra.mxu0 %v544
      %v634 = vpop.f32.mrf.mxu0
      %v635 = vadd.f32 0.0, %v634
      %v636 = vpop.f32.mrf.mxu0
      %v637 = vadd.f32 0.0, %v636
      %638 = vmatmul.bf16.gmra.mxu0 %v547
      %v639 = vpop.f32.mrf.mxu0
      %v640 = vadd.f32 0.0, %v639
      %v641 = vpop.f32.mrf.mxu0
      %v642 = vadd.f32 0.0, %v641
      %643 = vmatmul.bf16.gmra.mxu0 %v550
      %v644 = vpop.f32.mrf.mxu0
      %v645 = vadd.f32 0.0, %v644
      %v646 = vpop.f32.mrf.mxu0
      %v647 = vadd.f32 0.0, %v646
      %648 = vmatmul.bf16.gmra.mxu0 %v553
      %v649 = vpop.f32.mrf.mxu0
      %v650 = vadd.f32 0.0, %v649
      %v651 = vpop.f32.mrf.mxu0
      %v652 = vadd.f32 0.0, %v651
      %653 = vmatmul.bf16.gmra.mxu0 %v556
      %v654 = vpop.f32.mrf.mxu0
      %v655 = vadd.f32 0.0, %v654
      %v656 = vpop.f32.mrf.mxu0
      %v657 = vadd.f32 0.0, %v656
      %658 = vmatmul.bf16.gmra.mxu0 %v559
      %v659 = vpop.f32.mrf.mxu0
      %v660 = vadd.f32 0.0, %v659
      %v661 = vpop.f32.mrf.mxu0
      %v662 = vadd.f32 0.0, %v661
      %663 = vdwg.mxu0
      %v664 = vsel %vm506, %v338, 0
      %v666 = vsel %vm506, %v339, 0
      %v668 = vsel %vm506, %v340, 0
      %v670 = vsel %vm506, %v341, 0
      %v672 = vsel %vm506, %v342, 0
      %v674 = vsel %vm506, %v343, 0
      %v676 = vsel %vm506, %v344, 0
      %v678 = vsel %vm506, %v345, 0
      %v680 = vsel %vm506, %v346, 0
      %v682 = vsel %vm506, %v347, 0
      %v684 = vsel %vm506, %v348, 0
      %v686 = vsel %vm506, %v349, 0
      %v688 = vsel %vm506, %v350, 0
      %v690 = vsel %vm506, %v351, 0
      %v692 = vsel %vm506, %v352, 0
      %v694 = vsel %vm506, %v353, 0
      %v696 = vsel %vm506, %v354, 0
      %v698 = vsel %vm506, %v355, 0
      %v701 = vsel %vm561, %v260, 0
      %703 = vmatpush.bf16.msra.mxu0 0
      %704 = vmatpush.bf16.msra.mxu0 0
      %705 = vmatpush.bf16.msra.mxu0 0
      %706 = vmatpush.bf16.msra.mxu0 0
      %707 = vmatpush.bf16.msra.mxu0 0
      %708 = vmatpush.bf16.msra.mxu0 0
      %709 = vmatpush.bf16.msra.mxu0 0
      %710 = vmatpush.bf16.msra.mxu0 %v701
      %711 = vmatmul.bf16.gmra.mxu0 %v664
      %v712 = vpop.f32.mrf.mxu0
      %v713 = vadd.f32 %v575, %v712
      %v714 = vpop.f32.mrf.mxu0
      %v715 = vadd.f32 %v577, %v714
      %716 = vmatmul.bf16.gmra.mxu0 %v666
      %v717 = vpop.f32.mrf.mxu0
      %v718 = vadd.f32 %v580, %v717
      %v719 = vpop.f32.mrf.mxu0
      %v720 = vadd.f32 %v582, %v719
      %721 = vmatmul.bf16.gmra.mxu0 %v668
      %v722 = vpop.f32.mrf.mxu0
      %v723 = vadd.f32 %v585, %v722
      %v724 = vpop.f32.mrf.mxu0
      %v725 = vadd.f32 %v587, %v724
      %726 = vmatmul.bf16.gmra.mxu0 %v670
      %v727 = vpop.f32.mrf.mxu0
      %v728 = vadd.f32 %v590, %v727
      %v729 = vpop.f32.mrf.mxu0
      %v730 = vadd.f32 %v592, %v729
      %731 = vmatmul.bf16.gmra.mxu0 %v672
      %v732 = vpop.f32.mrf.mxu0
      %v733 = vadd.f32 %v595, %v732
      %v734 = vpop.f32.mrf.mxu0
      %v735 = vadd.f32 %v597, %v734
      %736 = vmatmul.bf16.gmra.mxu0 %v674
      %v737 = vpop.f32.mrf.mxu0
      %v738 = vadd.f32 %v600, %v737
      %v739 = vpop.f32.mrf.mxu0
      %v740 = vadd.f32 %v602, %v739
      %741 = vmatmul.bf16.gmra.mxu0 %v676
      %v742 = vpop.f32.mrf.mxu0
      %v743 = vadd.f32 %v605, %v742
      %v744 = vpop.f32.mrf.mxu0
      %v745 = vadd.f32 %v607, %v744
      %746 = vmatmul.bf16.gmra.mxu0 %v678
      %v747 = vpop.f32.mrf.mxu0
      %v748 = vadd.f32 %v610, %v747
      %v749 = vpop.f32.mrf.mxu0
      %v750 = vadd.f32 %v612, %v749
      %751 = vmatmul.bf16.gmra.mxu0 %v680
      %v752 = vpop.f32.mrf.mxu0
      %v753 = vadd.f32 %v615, %v752
      %v754 = vpop.f32.mrf.mxu0
      %v755 = vadd.f32 %v617, %v754
      %756 = vmatmul.bf16.gmra.mxu0 %v682
      %v757 = vpop.f32.mrf.mxu0
      %v758 = vadd.f32 %v620, %v757
      %v759 = vpop.f32.mrf.mxu0
      %v760 = vadd.f32 %v622, %v759
      %761 = vmatmul.bf16.gmra.mxu0 %v684
      %v762 = vpop.f32.mrf.mxu0
      %v763 = vadd.f32 %v625, %v762
      %v764 = vpop.f32.mrf.mxu0
      %v765 = vadd.f32 %v627, %v764
      %766 = vmatmul.bf16.gmra.mxu0 %v686
      %v767 = vpop.f32.mrf.mxu0
      %v768 = vadd.f32 %v630, %v767
      %v769 = vpop.f32.mrf.mxu0
      %v770 = vadd.f32 %v632, %v769
      %771 = vmatmul.bf16.gmra.mxu0 %v688
      %v772 = vpop.f32.mrf.mxu0
      %v773 = vadd.f32 %v635, %v772
      %v774 = vpop.f32.mrf.mxu0
      %v775 = vadd.f32 %v637, %v774
      %776 = vmatmul.bf16.gmra.mxu0 %v690
      %v777 = vpop.f32.mrf.mxu0
      %v778 = vadd.f32 %v640, %v777
      %v779 = vpop.f32.mrf.mxu0
      %v780 = vadd.f32 %v642, %v779
      %781 = vmatmul.bf16.gmra.mxu0 %v692
      %v782 = vpop.f32.mrf.mxu0
      %v783 = vadd.f32 %v645, %v782
      %v784 = vpop.f32.mrf.mxu0
      %v785 = vadd.f32 %v647, %v784
      %786 = vmatmul.bf16.gmra.mxu0 %v694
      %v787 = vpop.f32.mrf.mxu0
      %v788 = vadd.f32 %v650, %v787
      %v789 = vpop.f32.mrf.mxu0
      %v790 = vadd.f32 %v652, %v789
      %791 = vmatmul.bf16.gmra.mxu0 %v696
      %v792 = vpop.f32.mrf.mxu0
      %v793 = vadd.f32 %v655, %v792
      %v794 = vpop.f32.mrf.mxu0
      %v795 = vadd.f32 %v657, %v794
      %796 = vmatmul.bf16.gmra.mxu0 %v698
      %v797 = vpop.f32.mrf.mxu0
      %v798 = vadd.f32 %v660, %v797
      %v799 = vpop.f32.mrf.mxu0
      %v800 = vadd.f32 %v662, %v799
      %801 = vdwg.mxu0
      %v802 = vld [vmem:[%s210] sm:$0xe]
      %s803 = scalar_lea.vmem %s1, 4
      %v804 = vld [vmem:[%s803] sm:$0x3]
      %v806 = vunpack.c.l.b16 %v802
      %v807 = vpack.c.b16 %v302, %v806
      %vm808 = vcmask 1046528
      %v809 = vrot.slane %v807, 1
      %v810 = vrot.slane %v339, 1
      %v811 = vsel %vm808, %v809, %v810
      %v812 = vrot.slane %v340, 1
      %v813 = vsel %vm808, %v810, %v812
      %v814 = vrot.slane %v341, 1
      %v815 = vsel %vm808, %v812, %v814
      %v816 = vrot.slane %v342, 1
      %v817 = vsel %vm808, %v814, %v816
      %v818 = vrot.slane %v343, 1
      %v819 = vsel %vm808, %v816, %v818
      %v820 = vrot.slane %v344, 1
      %v821 = vsel %vm808, %v818, %v820
      %v822 = vrot.slane %v345, 1
      %v823 = vsel %vm808, %v820, %v822
      %v824 = vrot.slane %v346, 1
      %v825 = vsel %vm808, %v822, %v824
      %v826 = vrot.slane %v347, 1
      %v827 = vsel %vm808, %v824, %v826
      %v828 = vrot.slane %v348, 1
      %v829 = vsel %vm808, %v826, %v828
      %v830 = vrot.slane %v349, 1
      %v831 = vsel %vm808, %v828, %v830
      %v832 = vrot.slane %v350, 1
      %v833 = vsel %vm808, %v830, %v832
      %v834 = vrot.slane %v351, 1
      %v835 = vsel %vm808, %v832, %v834
      %v836 = vrot.slane %v352, 1
      %v837 = vsel %vm808, %v834, %v836
      %v838 = vrot.slane %v353, 1
      %v839 = vsel %vm808, %v836, %v838
      %v840 = vrot.slane %v354, 1
      %v841 = vsel %vm808, %v838, %v840
      %v842 = vrot.slane %v355, 1
      %v843 = vsel %vm808, %v840, %v842
      %v844 = vrot.slane %v356, 1
      %v845 = vsel %vm808, %v842, %v844
      %v847 = vsel %vm506, %v811, 0
      %v850 = vsel %vm506, %v813, 0
      %v853 = vsel %vm506, %v815, 0
      %v856 = vsel %vm506, %v817, 0
      %v859 = vsel %vm506, %v819, 0
      %v862 = vsel %vm506, %v821, 0
      %v865 = vsel %vm506, %v823, 0
      %v868 = vsel %vm506, %v825, 0
      %v871 = vsel %vm506, %v827, 0
      %v874 = vsel %vm506, %v829, 0
      %v877 = vsel %vm506, %v831, 0
      %v880 = vsel %vm506, %v833, 0
      %v883 = vsel %vm506, %v835, 0
      %v886 = vsel %vm506, %v837, 0
      %v889 = vsel %vm506, %v839, 0
      %v892 = vsel %vm506, %v841, 0
      %v895 = vsel %vm506, %v843, 0
      %v898 = vsel %vm506, %v845, 0
      %v901 = vsel %vm561, %v804, 0
      %903 = vmatpush.bf16.msra.mxu0 0
      %904 = vmatpush.bf16.msra.mxu0 0
      %905 = vmatpush.bf16.msra.mxu0 0
      %906 = vmatpush.bf16.msra.mxu0 0
      %907 = vmatpush.bf16.msra.mxu0 0
      %908 = vmatpush.bf16.msra.mxu0 0
      %909 = vmatpush.bf16.msra.mxu0 0
      %910 = vmatpush.bf16.msra.mxu0 %v901
      %911 = vmatmul.bf16.gmra.mxu0 %v847
      %v912 = vpop.f32.mrf.mxu0
      %v913 = vadd.f32 0.0, %v912
      %v914 = vpop.f32.mrf.mxu0
      %v915 = vadd.f32 0.0, %v914
      %916 = vmatmul.bf16.gmra.mxu0 %v850
      %v917 = vpop.f32.mrf.mxu0
      %v918 = vadd.f32 0.0, %v917
      %v919 = vpop.f32.mrf.mxu0
      %v920 = vadd.f32 0.0, %v919
      %921 = vmatmul.bf16.gmra.mxu0 %v853
      %v922 = vpop.f32.mrf.mxu0
      %v923 = vadd.f32 0.0, %v922
      %v924 = vpop.f32.mrf.mxu0
      %v925 = vadd.f32 0.0, %v924
      %926 = vmatmul.bf16.gmra.mxu0 %v856
      %v927 = vpop.f32.mrf.mxu0
      %v928 = vadd.f32 0.0, %v927
      %v929 = vpop.f32.mrf.mxu0
      %v930 = vadd.f32 0.0, %v929
      %931 = vmatmul.bf16.gmra.mxu0 %v859
      %v932 = vpop.f32.mrf.mxu0
      %v933 = vadd.f32 0.0, %v932
      %v934 = vpop.f32.mrf.mxu0
      %v935 = vadd.f32 0.0, %v934
      %936 = vmatmul.bf16.gmra.mxu0 %v862
      %v937 = vpop.f32.mrf.mxu0
      %v938 = vadd.f32 0.0, %v937
      %v939 = vpop.f32.mrf.mxu0
      %v940 = vadd.f32 0.0, %v939
      %941 = vmatmul.bf16.gmra.mxu0 %v865
      %v942 = vpop.f32.mrf.mxu0
      %v943 = vadd.f32 0.0, %v942
      %v944 = vpop.f32.mrf.mxu0
      %v945 = vadd.f32 0.0, %v944
      %946 = vmatmul.bf16.gmra.mxu0 %v868
      %v947 = vpop.f32.mrf.mxu0
      %v948 = vadd.f32 0.0, %v947
      %v949 = vpop.f32.mrf.mxu0
      %v950 = vadd.f32 0.0, %v949
      %951 = vmatmul.bf16.gmra.mxu0 %v871
      %v952 = vpop.f32.mrf.mxu0
      %v953 = vadd.f32 0.0, %v952
      %v954 = vpop.f32.mrf.mxu0
      %v955 = vadd.f32 0.0, %v954
      %956 = vmatmul.bf16.gmra.mxu0 %v874
      %v957 = vpop.f32.mrf.mxu0
      %v958 = vadd.f32 0.0, %v957
      %v959 = vpop.f32.mrf.mxu0
      %v960 = vadd.f32 0.0, %v959
      %961 = vmatmul.bf16.gmra.mxu0 %v877
      %v962 = vpop.f32.mrf.mxu0
      %v963 = vadd.f32 0.0, %v962
      %v964 = vpop.f32.mrf.mxu0
      %v965 = vadd.f32 0.0, %v964
      %966 = vmatmul.bf16.gmra.mxu0 %v880
      %v967 = vpop.f32.mrf.mxu0
      %v968 = vadd.f32 0.0, %v967
      %v969 = vpop.f32.mrf.mxu0
      %v970 = vadd.f32 0.0, %v969
      %971 = vmatmul.bf16.gmra.mxu0 %v883
      %v972 = vpop.f32.mrf.mxu0
      %v973 = vadd.f32 0.0, %v972
      %v974 = vpop.f32.mrf.mxu0
      %v975 = vadd.f32 0.0, %v974
      %976 = vmatmul.bf16.gmra.mxu0 %v886
      %v977 = vpop.f32.mrf.mxu0
      %v978 = vadd.f32 0.0, %v977
      %v979 = vpop.f32.mrf.mxu0
      %v980 = vadd.f32 0.0, %v979
      %981 = vmatmul.bf16.gmra.mxu0 %v889
      %v982 = vpop.f32.mrf.mxu0
      %v983 = vadd.f32 0.0, %v982
      %v984 = vpop.f32.mrf.mxu0
      %v985 = vadd.f32 0.0, %v984
      %986 = vmatmul.bf16.gmra.mxu0 %v892
      %v987 = vpop.f32.mrf.mxu0
      %v988 = vadd.f32 0.0, %v987
      %v989 = vpop.f32.mrf.mxu0
      %v990 = vadd.f32 0.0, %v989
      %991 = vmatmul.bf16.gmra.mxu0 %v895
      %v992 = vpop.f32.mrf.mxu0
      %v993 = vadd.f32 0.0, %v992
      %v994 = vpop.f32.mrf.mxu0
      %v995 = vadd.f32 0.0, %v994
      %996 = vmatmul.bf16.gmra.mxu0 %v898
      %v997 = vpop.f32.mrf.mxu0
      %v998 = vadd.f32 0.0, %v997
      %v999 = vpop.f32.mrf.mxu0
      %v1000 = vadd.f32 0.0, %v999
      %1001 = vdwg.mxu0
      %v1002 = vadd.f32 %v713, %v913
      %v1003 = vadd.f32 %v715, %v915
      %v1004 = vadd.f32 %v718, %v918
      %v1005 = vadd.f32 %v720, %v920
      %v1006 = vadd.f32 %v723, %v923
      %v1007 = vadd.f32 %v725, %v925
      %v1008 = vadd.f32 %v728, %v928
      %v1009 = vadd.f32 %v730, %v930
      %v1010 = vadd.f32 %v733, %v933
      %v1011 = vadd.f32 %v735, %v935
      %v1012 = vadd.f32 %v738, %v938
      %v1013 = vadd.f32 %v740, %v940
      %v1014 = vadd.f32 %v743, %v943
      %v1015 = vadd.f32 %v745, %v945
      %v1016 = vadd.f32 %v748, %v948
      %v1017 = vadd.f32 %v750, %v950
      %v1018 = vadd.f32 %v753, %v953
      %v1019 = vadd.f32 %v755, %v955
      %v1020 = vadd.f32 %v758, %v958
      %v1021 = vadd.f32 %v760, %v960
      %v1022 = vadd.f32 %v763, %v963
      %v1023 = vadd.f32 %v765, %v965
      %v1024 = vadd.f32 %v768, %v968
      %v1025 = vadd.f32 %v770, %v970
      %v1026 = vadd.f32 %v773, %v973
      %v1027 = vadd.f32 %v775, %v975
      %v1028 = vadd.f32 %v778, %v978
      %v1029 = vadd.f32 %v780, %v980
      %v1030 = vadd.f32 %v783, %v983
      %v1031 = vadd.f32 %v785, %v985
      %v1032 = vadd.f32 %v788, %v988
      %v1033 = vadd.f32 %v790, %v990
      %v1034 = vadd.f32 %v793, %v993
      %v1035 = vadd.f32 %v795, %v995
      %v1036 = vadd.f32 %v798, %v998
      %v1037 = vadd.f32 %v800, %v1000
      %v1038 = vld [vmem:[%s210 + $0x8] sm:$0xe]
      %v1039 = vld [vmem:[%s210 + $0xc] sm:$0xf]
      %v1040 = vld [vmem:[%s210 + $0x10] sm:$0xf]
      %v1041 = vld [vmem:[%s210 + $0x14] sm:$0xf]
      %v1042 = vld [vmem:[%s210 + $0x18] sm:$0xf]
      %v1043 = vld [vmem:[%s210 + $0x1c] sm:$0xf]
      %v1044 = vld [vmem:[%s210 + $0x20] sm:$0xf]
      %v1045 = vld [vmem:[%s210 + $0x24] sm:$0xf]
      %v1046 = vld [vmem:[%s210 + $0x28] sm:$0xf]
      %v1047 = vld [vmem:[%s210 + $0x2c] sm:$0xf]
      %v1048 = vld [vmem:[%s210 + $0x30] sm:$0xf]
      %v1049 = vld [vmem:[%s210 + $0x34] sm:$0xf]
      %v1050 = vld [vmem:[%s210 + $0x38] sm:$0xf]
      %v1051 = vld [vmem:[%s210 + $0x3c] sm:$0xf]
      %v1052 = vld [vmem:[%s210 + $0x40] sm:$0xf]
      %v1053 = vld [vmem:[%s210 + $0x44] sm:$0xf]
      %v1054 = vld [vmem:[%s210 + $0x48] sm:$0xf]
      %v1055 = vld [vmem:[%s210 + $0x4c] sm:$0xf]
      %v1056 = vld [vmem:[%s210 + $0x50] sm:$0xf]
      %v1057 = vld [vmem:[%s210 + $0x54] sm:$0xf]
      %v1058 = vld [vmem:[%s210 + $0x58] sm:$0xf]
      %v1059 = vld [vmem:[%s210 + $0x5c] sm:$0xf]
      %v1060 = vld [vmem:[%s210 + $0x60] sm:$0xf]
      %v1061 = vld [vmem:[%s210 + $0x64] sm:$0xf]
      %v1062 = vld [vmem:[%s210 + $0x68] sm:$0xf]
      %v1063 = vld [vmem:[%s210 + $0x6c] sm:$0xf]
      %v1064 = vld [vmem:[%s210 + $0x70] sm:$0xf]
      %v1065 = vld [vmem:[%s210 + $0x74] sm:$0xf]
      %v1066 = vld [vmem:[%s210 + $0x78] sm:$0xf]
      %v1067 = vld [vmem:[%s210 + $0x7c] sm:$0xf]
      %v1068 = vld [vmem:[%s210 + $0x80] sm:$0xf]
      %v1069 = vld [vmem:[%s210 + $0x84] sm:$0xf]
      %v1070 = vld [vmem:[%s210 + $0x88] sm:$0xf]
      %v1071 = vld [vmem:[%s210 + $0x8c] sm:$0xf]
      %v1072 = vld [vmem:[%s210 + $0x90] sm:$0xf]
      %v1073 = vld [vmem:[%s210 + $0x94] sm:$0xf]
      %v1074 = vld [vmem:[%s210 + $0x98] sm:$0x1]
      %s1075 = scalar_lea.vmem %s1, 6
      %v1076 = vld [vmem:[%s1075] sm:$0x3]
      %v1114 = vunpack.c.l.b16 %v1038
      %v1115 = vunpack.c.l.b16 %v1039
      %v1116 = vunpack.c.l.b16 %v1040
      %v1117 = vunpack.c.l.b16 %v1041
      %v1118 = vunpack.c.l.b16 %v1042
      %v1119 = vunpack.c.l.b16 %v1043
      %v1120 = vunpack.c.l.b16 %v1044
      %v1121 = vunpack.c.l.b16 %v1045
      %v1122 = vunpack.c.l.b16 %v1046
      %v1123 = vunpack.c.l.b16 %v1047
      %v1124 = vunpack.c.l.b16 %v1048
      %v1125 = vunpack.c.l.b16 %v1049
      %v1126 = vunpack.c.l.b16 %v1050
      %v1127 = vunpack.c.l.b16 %v1051
      %v1128 = vunpack.c.l.b16 %v1052
      %v1129 = vunpack.c.l.b16 %v1053
      %v1130 = vunpack.c.l.b16 %v1054
      %v1131 = vunpack.c.l.b16 %v1055
      %v1132 = vunpack.c.l.b16 %v1056
      %v1133 = vunpack.c.l.b16 %v1057
      %v1134 = vunpack.c.l.b16 %v1058
      %v1135 = vunpack.c.l.b16 %v1059
      %v1136 = vunpack.c.l.b16 %v1060
      %v1137 = vunpack.c.l.b16 %v1061
      %v1138 = vunpack.c.l.b16 %v1062
      %v1139 = vunpack.c.l.b16 %v1063
      %v1140 = vunpack.c.l.b16 %v1064
      %v1141 = vunpack.c.l.b16 %v1065
      %v1142 = vunpack.c.l.b16 %v1066
      %v1143 = vunpack.c.l.b16 %v1067
      %v1144 = vunpack.c.l.b16 %v1068
      %v1145 = vunpack.c.l.b16 %v1069
      %v1146 = vunpack.c.l.b16 %v1070
      %v1147 = vunpack.c.l.b16 %v1071
      %v1148 = vunpack.c.l.b16 %v1072
      %v1149 = vunpack.c.l.b16 %v1073
      %v1150 = vunpack.c.l.b16 %v1074
      %v1151 = vpack.c.b16 %v1115, %v1114
      %v1152 = vpack.c.b16 %v1117, %v1116
      %v1153 = vpack.c.b16 %v1119, %v1118
      %v1154 = vpack.c.b16 %v1121, %v1120
      %v1155 = vpack.c.b16 %v1123, %v1122
      %v1156 = vpack.c.b16 %v1125, %v1124
      %v1157 = vpack.c.b16 %v1127, %v1126
      %v1158 = vpack.c.b16 %v1129, %v1128
      %v1159 = vpack.c.b16 %v1131, %v1130
      %v1160 = vpack.c.b16 %v1133, %v1132
      %v1161 = vpack.c.b16 %v1135, %v1134
      %v1162 = vpack.c.b16 %v1137, %v1136
      %v1163 = vpack.c.b16 %v1139, %v1138
      %v1164 = vpack.c.b16 %v1141, %v1140
      %v1165 = vpack.c.b16 %v1143, %v1142
      %v1166 = vpack.c.b16 %v1145, %v1144
      %v1167 = vpack.c.b16 %v1147, %v1146
      %v1168 = vpack.c.b16 %v1149, %v1148
      %v1169 = vpack.c.b16 %v1150, %v1150
      %v1170 = vrot.slane %v1151, 1
      %v1171 = vrot.slane %v1152, 1
      %v1172 = vsel %vm808, %v1170, %v1171
      %v1173 = vrot.slane %v1153, 1
      %v1174 = vsel %vm808, %v1171, %v1173
      %v1175 = vrot.slane %v1154, 1
      %v1176 = vsel %vm808, %v1173, %v1175
      %v1177 = vrot.slane %v1155, 1
      %v1178 = vsel %vm808, %v1175, %v1177
      %v1179 = vrot.slane %v1156, 1
      %v1180 = vsel %vm808, %v1177, %v1179
      %v1181 = vrot.slane %v1157, 1
      %v1182 = vsel %vm808, %v1179, %v1181
      %v1183 = vrot.slane %v1158, 1
      %v1184 = vsel %vm808, %v1181, %v1183
      %v1185 = vrot.slane %v1159, 1
      %v1186 = vsel %vm808, %v1183, %v1185
      %v1187 = vrot.slane %v1160, 1
      %v1188 = vsel %vm808, %v1185, %v1187
      %v1189 = vrot.slane %v1161, 1
      %v1190 = vsel %vm808, %v1187, %v1189
      %v1191 = vrot.slane %v1162, 1
      %v1192 = vsel %vm808, %v1189, %v1191
      %v1193 = vrot.slane %v1163, 1
      %v1194 = vsel %vm808, %v1191, %v1193
      %v1195 = vrot.slane %v1164, 1
      %v1196 = vsel %vm808, %v1193, %v1195
      %v1197 = vrot.slane %v1165, 1
      %v1198 = vsel %vm808, %v1195, %v1197
      %v1199 = vrot.slane %v1166, 1
      %v1200 = vsel %vm808, %v1197, %v1199
      %v1201 = vrot.slane %v1167, 1
      %v1202 = vsel %vm808, %v1199, %v1201
      %v1203 = vrot.slane %v1168, 1
      %v1204 = vsel %vm808, %v1201, %v1203
      %v1205 = vrot.slane %v1169, 1
      %v1206 = vsel %vm808, %v1203, %v1205
      %v1208 = vsel %vm506, %v1172, 0
      %v1211 = vsel %vm506, %v1174, 0
      %v1214 = vsel %vm506, %v1176, 0
      %v1217 = vsel %vm506, %v1178, 0
      %v1220 = vsel %vm506, %v1180, 0
      %v1223 = vsel %vm506, %v1182, 0
      %v1226 = vsel %vm506, %v1184, 0
      %v1229 = vsel %vm506, %v1186, 0
      %v1232 = vsel %vm506, %v1188, 0
      %v1235 = vsel %vm506, %v1190, 0
      %v1238 = vsel %vm506, %v1192, 0
      %v1241 = vsel %vm506, %v1194, 0
      %v1244 = vsel %vm506, %v1196, 0
      %v1247 = vsel %vm506, %v1198, 0
      %v1250 = vsel %vm506, %v1200, 0
      %v1253 = vsel %vm506, %v1202, 0
      %v1256 = vsel %vm506, %v1204, 0
      %v1259 = vsel %vm506, %v1206, 0
      %v1262 = vsel %vm561, %v1076, 0
      %1264 = vmatpush.bf16.msra.mxu0 0
      %1265 = vmatpush.bf16.msra.mxu0 0
      %1266 = vmatpush.bf16.msra.mxu0 0
      %1267 = vmatpush.bf16.msra.mxu0 0
      %1268 = vmatpush.bf16.msra.mxu0 0
      %1269 = vmatpush.bf16.msra.mxu0 0
      %1270 = vmatpush.bf16.msra.mxu0 0
      %1271 = vmatpush.bf16.msra.mxu0 %v1262
      %1272 = vmatmul.bf16.gmra.mxu0 %v1208
      %v1273 = vpop.f32.mrf.mxu0
      %v1274 = vadd.f32 0.0, %v1273
      %v1275 = vpop.f32.mrf.mxu0
      %v1276 = vadd.f32 0.0, %v1275
      %1277 = vmatmul.bf16.gmra.mxu0 %v1211
      %v1278 = vpop.f32.mrf.mxu0
      %v1279 = vadd.f32 0.0, %v1278
      %v1280 = vpop.f32.mrf.mxu0
      %v1281 = vadd.f32 0.0, %v1280
      %1282 = vmatmul.bf16.gmra.mxu0 %v1214
      %v1283 = vpop.f32.mrf.mxu0
      %v1284 = vadd.f32 0.0, %v1283
      %v1285 = vpop.f32.mrf.mxu0
      %v1286 = vadd.f32 0.0, %v1285
      %1287 = vmatmul.bf16.gmra.mxu0 %v1217
      %v1288 = vpop.f32.mrf.mxu0
      %v1289 = vadd.f32 0.0, %v1288
      %v1290 = vpop.f32.mrf.mxu0
      %v1291 = vadd.f32 0.0, %v1290
      %1292 = vmatmul.bf16.gmra.mxu0 %v1220
      %v1293 = vpop.f32.mrf.mxu0
      %v1294 = vadd.f32 0.0, %v1293
      %v1295 = vpop.f32.mrf.mxu0
      %v1296 = vadd.f32 0.0, %v1295
      %1297 = vmatmul.bf16.gmra.mxu0 %v1223
      %v1298 = vpop.f32.mrf.mxu0
      %v1299 = vadd.f32 0.0, %v1298
      %v1300 = vpop.f32.mrf.mxu0
      %v1301 = vadd.f32 0.0, %v1300
      %1302 = vmatmul.bf16.gmra.mxu0 %v1226
      %v1303 = vpop.f32.mrf.mxu0
      %v1304 = vadd.f32 0.0, %v1303
      %v1305 = vpop.f32.mrf.mxu0
      %v1306 = vadd.f32 0.0, %v1305
      %1307 = vmatmul.bf16.gmra.mxu0 %v1229
      %v1308 = vpop.f32.mrf.mxu0
      %v1309 = vadd.f32 0.0, %v1308
      %v1310 = vpop.f32.mrf.mxu0
      %v1311 = vadd.f32 0.0, %v1310
      %1312 = vmatmul.bf16.gmra.mxu0 %v1232
      %v1313 = vpop.f32.mrf.mxu0
      %v1314 = vadd.f32 0.0, %v1313
      %v1315 = vpop.f32.mrf.mxu0
      %v1316 = vadd.f32 0.0, %v1315
      %1317 = vmatmul.bf16.gmra.mxu0 %v1235
      %v1318 = vpop.f32.mrf.mxu0
      %v1319 = vadd.f32 0.0, %v1318
      %v1320 = vpop.f32.mrf.mxu0
      %v1321 = vadd.f32 0.0, %v1320
      %1322 = vmatmul.bf16.gmra.mxu0 %v1238
      %v1323 = vpop.f32.mrf.mxu0
      %v1324 = vadd.f32 0.0, %v1323
      %v1325 = vpop.f32.mrf.mxu0
      %v1326 = vadd.f32 0.0, %v1325
      %1327 = vmatmul.bf16.gmra.mxu0 %v1241
      %v1328 = vpop.f32.mrf.mxu0
      %v1329 = vadd.f32 0.0, %v1328
      %v1330 = vpop.f32.mrf.mxu0
      %v1331 = vadd.f32 0.0, %v1330
      %1332 = vmatmul.bf16.gmra.mxu0 %v1244
      %v1333 = vpop.f32.mrf.mxu0
      %v1334 = vadd.f32 0.0, %v1333
      %v1335 = vpop.f32.mrf.mxu0
      %v1336 = vadd.f32 0.0, %v1335
      %1337 = vmatmul.bf16.gmra.mxu0 %v1247
      %v1338 = vpop.f32.mrf.mxu0
      %v1339 = vadd.f32 0.0, %v1338
      %v1340 = vpop.f32.mrf.mxu0
      %v1341 = vadd.f32 0.0, %v1340
      %1342 = vmatmul.bf16.gmra.mxu0 %v1250
      %v1343 = vpop.f32.mrf.mxu0
      %v1344 = vadd.f32 0.0, %v1343
      %v1345 = vpop.f32.mrf.mxu0
      %v1346 = vadd.f32 0.0, %v1345
      %1347 = vmatmul.bf16.gmra.mxu0 %v1253
      %v1348 = vpop.f32.mrf.mxu0
      %v1349 = vadd.f32 0.0, %v1348
      %v1350 = vpop.f32.mrf.mxu0
      %v1351 = vadd.f32 0.0, %v1350
      %1352 = vmatmul.bf16.gmra.mxu0 %v1256
      %v1353 = vpop.f32.mrf.mxu0
      %v1354 = vadd.f32 0.0, %v1353
      %v1355 = vpop.f32.mrf.mxu0
      %v1356 = vadd.f32 0.0, %v1355
      %1357 = vmatmul.bf16.gmra.mxu0 %v1259
      %v1358 = vpop.f32.mrf.mxu0
      %v1359 = vadd.f32 0.0, %v1358
      %v1360 = vpop.f32.mrf.mxu0
      %v1361 = vadd.f32 0.0, %v1360
      %1362 = vdwg.mxu0
      %v1363 = vadd.f32 %v1002, %v1274
      %v1364 = vadd.f32 %v1003, %v1276
      %v1365 = vadd.f32 %v1004, %v1279
      %v1366 = vadd.f32 %v1005, %v1281
      %v1367 = vadd.f32 %v1006, %v1284
      %v1368 = vadd.f32 %v1007, %v1286
      %v1369 = vadd.f32 %v1008, %v1289
      %v1370 = vadd.f32 %v1009, %v1291
      %v1371 = vadd.f32 %v1010, %v1294
      %v1372 = vadd.f32 %v1011, %v1296
      %v1373 = vadd.f32 %v1012, %v1299
      %v1374 = vadd.f32 %v1013, %v1301
      %v1375 = vadd.f32 %v1014, %v1304
      %v1376 = vadd.f32 %v1015, %v1306
      %v1377 = vadd.f32 %v1016, %v1309
      %v1378 = vadd.f32 %v1017, %v1311
      %v1379 = vadd.f32 %v1018, %v1314
      %v1380 = vadd.f32 %v1019, %v1316
      %v1381 = vadd.f32 %v1020, %v1319
      %v1382 = vadd.f32 %v1021, %v1321
      %v1383 = vadd.f32 %v1022, %v1324
      %v1384 = vadd.f32 %v1023, %v1326
      %v1385 = vadd.f32 %v1024, %v1329
      %v1386 = vadd.f32 %v1025, %v1331
      %v1387 = vadd.f32 %v1026, %v1334
      %v1388 = vadd.f32 %v1027, %v1336
      %v1389 = vadd.f32 %v1028, %v1339
      %v1390 = vadd.f32 %v1029, %v1341
      %v1391 = vadd.f32 %v1030, %v1344
      %v1392 = vadd.f32 %v1031, %v1346
      %v1393 = vadd.f32 %v1032, %v1349
      %v1394 = vadd.f32 %v1033, %v1351
      %v1395 = vadd.f32 %v1034, %v1354
      %v1396 = vadd.f32 %v1035, %v1356
      %v1397 = vadd.f32 %v1036, %v1359
      %v1398 = vadd.f32 %v1037, %v1361
      %v1399 = vld [vmem:[%s210 + $0x98] sm:$0x3]
      %s1400 = scalar_lea.vmem %s1, 8
      %v1401 = vld [vmem:[%s1400] sm:$0x3]
      %v1403 = vunpack.c.l.b16 %v1399
      %v1404 = vpack.c.b16 %v1403, %v1403
      %vm1405 = vsmask.f32 6400
      %v1407 = vshrl.u32 %v1151, 16
      %v1409 = vrot.slane %v1407, 1
      %v1410 = vshll.u32 %v1151, 16
      %v1412 = vrot.slane %v1410, 2
      %v1413 = vor.u32 %v1409, %v1412
      %v1415 = vshrl.u32 %v1152, 16
      %v1417 = vrot.slane %v1415, 1
      %v1418 = vshll.u32 %v1152, 16
      %v1420 = vrot.slane %v1418, 2
      %v1421 = vor.u32 %v1417, %v1420
      %v1422 = vsel %vm1405, %v1413, %v1421
      %v1424 = vshrl.u32 %v1153, 16
      %v1426 = vrot.slane %v1424, 1
      %v1427 = vshll.u32 %v1153, 16
      %v1429 = vrot.slane %v1427, 2
      %v1430 = vor.u32 %v1426, %v1429
      %v1431 = vsel %vm1405, %v1421, %v1430
      %v1433 = vshrl.u32 %v1154, 16
      %v1435 = vrot.slane %v1433, 1
      %v1436 = vshll.u32 %v1154, 16
      %v1438 = vrot.slane %v1436, 2
      %v1439 = vor.u32 %v1435, %v1438
      %v1440 = vsel %vm1405, %v1430, %v1439
      %v1442 = vshrl.u32 %v1155, 16
      %v1444 = vrot.slane %v1442, 1
      %v1445 = vshll.u32 %v1155, 16
      %v1447 = vrot.slane %v1445, 2
      %v1448 = vor.u32 %v1444, %v1447
      %v1449 = vsel %vm1405, %v1439, %v1448
      %v1451 = vshrl.u32 %v1156, 16
      %v1453 = vrot.slane %v1451, 1
      %v1454 = vshll.u32 %v1156, 16
      %v1456 = vrot.slane %v1454, 2
      %v1457 = vor.u32 %v1453, %v1456
      %v1458 = vsel %vm1405, %v1448, %v1457
      %v1460 = vshrl.u32 %v1157, 16
      %v1462 = vrot.slane %v1460, 1
      %v1463 = vshll.u32 %v1157, 16
      %v1465 = vrot.slane %v1463, 2
      %v1466 = vor.u32 %v1462, %v1465
      %v1467 = vsel %vm1405, %v1457, %v1466
      %v1469 = vshrl.u32 %v1158, 16
      %v1471 = vrot.slane %v1469, 1
      %v1472 = vshll.u32 %v1158, 16
      %v1474 = vrot.slane %v1472, 2
      %v1475 = vor.u32 %v1471, %v1474
      %v1476 = vsel %vm1405, %v1466, %v1475
      %v1478 = vshrl.u32 %v1159, 16
      %v1480 = vrot.slane %v1478, 1
      %v1481 = vshll.u32 %v1159, 16
      %v1483 = vrot.slane %v1481, 2
      %v1484 = vor.u32 %v1480, %v1483
      %v1485 = vsel %vm1405, %v1475, %v1484
      %v1487 = vshrl.u32 %v1160, 16
      %v1489 = vrot.slane %v1487, 1
      %v1490 = vshll.u32 %v1160, 16
      %v1492 = vrot.slane %v1490, 2
      %v1493 = vor.u32 %v1489, %v1492
      %v1494 = vsel %vm1405, %v1484, %v1493
      %v1496 = vshrl.u32 %v1161, 16
      %v1498 = vrot.slane %v1496, 1
      %v1499 = vshll.u32 %v1161, 16
      %v1501 = vrot.slane %v1499, 2
      %v1502 = vor.u32 %v1498, %v1501
      %v1503 = vsel %vm1405, %v1493, %v1502
      %v1505 = vshrl.u32 %v1162, 16
      %v1507 = vrot.slane %v1505, 1
      %v1508 = vshll.u32 %v1162, 16
      %v1510 = vrot.slane %v1508, 2
      %v1511 = vor.u32 %v1507, %v1510
      %v1512 = vsel %vm1405, %v1502, %v1511
      %v1514 = vshrl.u32 %v1163, 16
      %v1516 = vrot.slane %v1514, 1
      %v1517 = vshll.u32 %v1163, 16
      %v1519 = vrot.slane %v1517, 2
      %v1520 = vor.u32 %v1516, %v1519
      %v1521 = vsel %vm1405, %v1511, %v1520
      %v1523 = vshrl.u32 %v1164, 16
      %v1525 = vrot.slane %v1523, 1
      %v1526 = vshll.u32 %v1164, 16
      %v1528 = vrot.slane %v1526, 2
      %v1529 = vor.u32 %v1525, %v1528
      %v1530 = vsel %vm1405, %v1520, %v1529
      %v1532 = vshrl.u32 %v1165, 16
      %v1534 = vrot.slane %v1532, 1
      %v1535 = vshll.u32 %v1165, 16
      %v1537 = vrot.slane %v1535, 2
      %v1538 = vor.u32 %v1534, %v1537
      %v1539 = vsel %vm1405, %v1529, %v1538
      %v1541 = vshrl.u32 %v1166, 16
      %v1543 = vrot.slane %v1541, 1
      %v1544 = vshll.u32 %v1166, 16
      %v1546 = vrot.slane %v1544, 2
      %v1547 = vor.u32 %v1543, %v1546
      %v1548 = vsel %vm1405, %v1538, %v1547
      %v1550 = vshrl.u32 %v1167, 16
      %v1552 = vrot.slane %v1550, 1
      %v1553 = vshll.u32 %v1167, 16
      %v1555 = vrot.slane %v1553, 2
      %v1556 = vor.u32 %v1552, %v1555
      %v1557 = vsel %vm1405, %v1547, %v1556
      %v1559 = vshrl.u32 %v1168, 16
      %v1561 = vrot.slane %v1559, 1
      %v1562 = vshll.u32 %v1168, 16
      %v1564 = vrot.slane %v1562, 2
      %v1565 = vor.u32 %v1561, %v1564
      %v1566 = vsel %vm1405, %v1556, %v1565
      %v1568 = vshrl.u32 %v1404, 16
      %v1570 = vrot.slane %v1568, 1
      %v1571 = vshll.u32 %v1404, 16
      %v1573 = vrot.slane %v1571, 2
      %v1574 = vor.u32 %v1570, %v1573
      %v1575 = vsel %vm1405, %v1565, %v1574
      %v1577 = vsel %vm506, %v1422, 0
      %v1580 = vsel %vm506, %v1431, 0
      %v1583 = vsel %vm506, %v1440, 0
      %v1586 = vsel %vm506, %v1449, 0
      %v1589 = vsel %vm506, %v1458, 0
      %v1592 = vsel %vm506, %v1467, 0
      %v1595 = vsel %vm506, %v1476, 0
      %v1598 = vsel %vm506, %v1485, 0
      %v1601 = vsel %vm506, %v1494, 0
      %v1604 = vsel %vm506, %v1503, 0
      %v1607 = vsel %vm506, %v1512, 0
      %v1610 = vsel %vm506, %v1521, 0
      %v1613 = vsel %vm506, %v1530, 0
      %v1616 = vsel %vm506, %v1539, 0
      %v1619 = vsel %vm506, %v1548, 0
      %v1622 = vsel %vm506, %v1557, 0
      %v1625 = vsel %vm506, %v1566, 0
      %v1628 = vsel %vm506, %v1575, 0
      %v1631 = vsel %vm561, %v1401, 0
      %1633 = vmatpush.bf16.msra.mxu0 0
      %1634 = vmatpush.bf16.msra.mxu0 0
      %1635 = vmatpush.bf16.msra.mxu0 0
      %1636 = vmatpush.bf16.msra.mxu0 0
      %1637 = vmatpush.bf16.msra.mxu0 0
      %1638 = vmatpush.bf16.msra.mxu0 0
      %1639 = vmatpush.bf16.msra.mxu0 0
      %1640 = vmatpush.bf16.msra.mxu0 %v1631
      %1641 = vmatmul.bf16.gmra.mxu0 %v1577
      %v1642 = vpop.f32.mrf.mxu0
      %v1643 = vadd.f32 0.0, %v1642
      %v1644 = vpop.f32.mrf.mxu0
      %v1645 = vadd.f32 0.0, %v1644
      %1646 = vmatmul.bf16.gmra.mxu0 %v1580
      %v1647 = vpop.f32.mrf.mxu0
      %v1648 = vadd.f32 0.0, %v1647
      %v1649 = vpop.f32.mrf.mxu0
      %v1650 = vadd.f32 0.0, %v1649
      %1651 = vmatmul.bf16.gmra.mxu0 %v1583
      %v1652 = vpop.f32.mrf.mxu0
      %v1653 = vadd.f32 0.0, %v1652
      %v1654 = vpop.f32.mrf.mxu0
      %v1655 = vadd.f32 0.0, %v1654
      %1656 = vmatmul.bf16.gmra.mxu0 %v1586
      %v1657 = vpop.f32.mrf.mxu0
      %v1658 = vadd.f32 0.0, %v1657
      %v1659 = vpop.f32.mrf.mxu0
      %v1660 = vadd.f32 0.0, %v1659
      %1661 = vmatmul.bf16.gmra.mxu0 %v1589
      %v1662 = vpop.f32.mrf.mxu0
      %v1663 = vadd.f32 0.0, %v1662
      %v1664 = vpop.f32.mrf.mxu0
      %v1665 = vadd.f32 0.0, %v1664
      %1666 = vmatmul.bf16.gmra.mxu0 %v1592
      %v1667 = vpop.f32.mrf.mxu0
      %v1668 = vadd.f32 0.0, %v1667
      %v1669 = vpop.f32.mrf.mxu0
      %v1670 = vadd.f32 0.0, %v1669
      %1671 = vmatmul.bf16.gmra.mxu0 %v1595
      %v1672 = vpop.f32.mrf.mxu0
      %v1673 = vadd.f32 0.0, %v1672
      %v1674 = vpop.f32.mrf.mxu0
      %v1675 = vadd.f32 0.0, %v1674
      %1676 = vmatmul.bf16.gmra.mxu0 %v1598
      %v1677 = vpop.f32.mrf.mxu0
      %v1678 = vadd.f32 0.0, %v1677
      %v1679 = vpop.f32.mrf.mxu0
      %v1680 = vadd.f32 0.0, %v1679
      %1681 = vmatmul.bf16.gmra.mxu0 %v1601
      %v1682 = vpop.f32.mrf.mxu0
      %v1683 = vadd.f32 0.0, %v1682
      %v1684 = vpop.f32.mrf.mxu0
      %v1685 = vadd.f32 0.0, %v1684
      %1686 = vmatmul.bf16.gmra.mxu0 %v1604
      %v1687 = vpop.f32.mrf.mxu0
      %v1688 = vadd.f32 0.0, %v1687
      %v1689 = vpop.f32.mrf.mxu0
      %v1690 = vadd.f32 0.0, %v1689
      %1691 = vmatmul.bf16.gmra.mxu0 %v1607
      %v1692 = vpop.f32.mrf.mxu0
      %v1693 = vadd.f32 0.0, %v1692
      %v1694 = vpop.f32.mrf.mxu0
      %v1695 = vadd.f32 0.0, %v1694
      %1696 = vmatmul.bf16.gmra.mxu0 %v1610
      %v1697 = vpop.f32.mrf.mxu0
      %v1698 = vadd.f32 0.0, %v1697
      %v1699 = vpop.f32.mrf.mxu0
      %v1700 = vadd.f32 0.0, %v1699
      %1701 = vmatmul.bf16.gmra.mxu0 %v1613
      %v1702 = vpop.f32.mrf.mxu0
      %v1703 = vadd.f32 0.0, %v1702
      %v1704 = vpop.f32.mrf.mxu0
      %v1705 = vadd.f32 0.0, %v1704
      %1706 = vmatmul.bf16.gmra.mxu0 %v1616
      %v1707 = vpop.f32.mrf.mxu0
      %v1708 = vadd.f32 0.0, %v1707
      %v1709 = vpop.f32.mrf.mxu0
      %v1710 = vadd.f32 0.0, %v1709
      %1711 = vmatmul.bf16.gmra.mxu0 %v1619
      %v1712 = vpop.f32.mrf.mxu0
      %v1713 = vadd.f32 0.0, %v1712
      %v1714 = vpop.f32.mrf.mxu0
      %v1715 = vadd.f32 0.0, %v1714
      %1716 = vmatmul.bf16.gmra.mxu0 %v1622
      %v1717 = vpop.f32.mrf.mxu0
      %v1718 = vadd.f32 0.0, %v1717
      %v1719 = vpop.f32.mrf.mxu0
      %v1720 = vadd.f32 0.0, %v1719
      %1721 = vmatmul.bf16.gmra.mxu0 %v1625
      %v1722 = vpop.f32.mrf.mxu0
      %v1723 = vadd.f32 0.0, %v1722
      %v1724 = vpop.f32.mrf.mxu0
      %v1725 = vadd.f32 0.0, %v1724
      %1726 = vmatmul.bf16.gmra.mxu0 %v1628
      %v1727 = vpop.f32.mrf.mxu0
      %v1728 = vadd.f32 0.0, %v1727
      %v1729 = vpop.f32.mrf.mxu0
      %v1730 = vadd.f32 0.0, %v1729
      %1731 = vdwg.mxu0
      %v1732 = vadd.f32 %v1363, %v1643
      %v1733 = vadd.f32 %v1364, %v1645
      %v1734 = vadd.f32 %v1365, %v1648
      %v1735 = vadd.f32 %v1366, %v1650
      %v1736 = vadd.f32 %v1367, %v1653
      %v1737 = vadd.f32 %v1368, %v1655
      %v1738 = vadd.f32 %v1369, %v1658
      %v1739 = vadd.f32 %v1370, %v1660
      %v1740 = vadd.f32 %v1371, %v1663
      %v1741 = vadd.f32 %v1372, %v1665
      %v1742 = vadd.f32 %v1373, %v1668
      %v1743 = vadd.f32 %v1374, %v1670
      %v1744 = vadd.f32 %v1375, %v1673
      %v1745 = vadd.f32 %v1376, %v1675
      %v1746 = vadd.f32 %v1377, %v1678
      %v1747 = vadd.f32 %v1378, %v1680
      %v1748 = vadd.f32 %v1379, %v1683
      %v1749 = vadd.f32 %v1380, %v1685
      %v1750 = vadd.f32 %v1381, %v1688
      %v1751 = vadd.f32 %v1382, %v1690
      %v1752 = vadd.f32 %v1383, %v1693
      %v1753 = vadd.f32 %v1384, %v1695
      %v1754 = vadd.f32 %v1385, %v1698
      %v1755 = vadd.f32 %v1386, %v1700
      %v1756 = vadd.f32 %v1387, %v1703
      %v1757 = vadd.f32 %v1388, %v1705
      %v1758 = vadd.f32 %v1389, %v1708
      %v1759 = vadd.f32 %v1390, %v1710
      %v1760 = vadd.f32 %v1391, %v1713
      %v1761 = vadd.f32 %v1392, %v1715
      %v1762 = vadd.f32 %v1393, %v1718
      %v1763 = vadd.f32 %v1394, %v1720
      %v1764 = vadd.f32 %v1395, %v1723
      %v1765 = vadd.f32 %v1396, %v1725
      %v1766 = vadd.f32 %v1397, %v1728
      %v1767 = vadd.f32 %v1398, %v1730
      %v1768 = vld [vmem:[%s210 + $0x8] sm:$0xc]
      %s1769 = scalar_lea.vmem %s1, 10
      %v1770 = vld [vmem:[%s1769] sm:$0x3]
      %v1772 = vunpack.c.l.b16 %v1768
      %v1773 = vpack.c.b16 %v1115, %v1772
      %vm1774 = vcmask 1045504
      %v1775 = vrot.slane %v1773, 2
      %v1776 = vrot.slane %v1152, 2
      %v1777 = vsel %vm1774, %v1775, %v1776
      %v1778 = vrot.slane %v1153, 2
      %v1779 = vsel %vm1774, %v1776, %v1778
      %v1780 = vrot.slane %v1154, 2
      %v1781 = vsel %vm1774, %v1778, %v1780
      %v1782 = vrot.slane %v1155, 2
      %v1783 = vsel %vm1774, %v1780, %v1782
      %v1784 = vrot.slane %v1156, 2
      %v1785 = vsel %vm1774, %v1782, %v1784
      %v1786 = vrot.slane %v1157, 2
      %v1787 = vsel %vm1774, %v1784, %v1786
      %v1788 = vrot.slane %v1158, 2
      %v1789 = vsel %vm1774, %v1786, %v1788
      %v1790 = vrot.slane %v1159, 2
      %v1791 = vsel %vm1774, %v1788, %v1790
      %v1792 = vrot.slane %v1160, 2
      %v1793 = vsel %vm1774, %v1790, %v1792
      %v1794 = vrot.slane %v1161, 2
      %v1795 = vsel %vm1774, %v1792, %v1794
      %v1796 = vrot.slane %v1162, 2
      %v1797 = vsel %vm1774, %v1794, %v1796
      %v1798 = vrot.slane %v1163, 2
      %v1799 = vsel %vm1774, %v1796, %v1798
      %v1800 = vrot.slane %v1164, 2
      %v1801 = vsel %vm1774, %v1798, %v1800
      %v1802 = vrot.slane %v1165, 2
      %v1803 = vsel %vm1774, %v1800, %v1802
      %v1804 = vrot.slane %v1166, 2
      %v1805 = vsel %vm1774, %v1802, %v1804
      %v1806 = vrot.slane %v1167, 2
      %v1807 = vsel %vm1774, %v1804, %v1806
      %v1808 = vrot.slane %v1168, 2
      %v1809 = vsel %vm1774, %v1806, %v1808
      %v1810 = vrot.slane %v1404, 2
      %v1811 = vsel %vm1774, %v1808, %v1810
      %v1813 = vsel %vm506, %v1777, 0
      %v1816 = vsel %vm506, %v1779, 0
      %v1819 = vsel %vm506, %v1781, 0
      %v1822 = vsel %vm506, %v1783, 0
      %v1825 = vsel %vm506, %v1785, 0
      %v1828 = vsel %vm506, %v1787, 0
      %v1831 = vsel %vm506, %v1789, 0
      %v1834 = vsel %vm506, %v1791, 0
      %v1837 = vsel %vm506, %v1793, 0
      %v1840 = vsel %vm506, %v1795, 0
      %v1843 = vsel %vm506, %v1797, 0
      %v1846 = vsel %vm506, %v1799, 0
      %v1849 = vsel %vm506, %v1801, 0
      %v1852 = vsel %vm506, %v1803, 0
      %v1855 = vsel %vm506, %v1805, 0
      %v1858 = vsel %vm506, %v1807, 0
      %v1861 = vsel %vm506, %v1809, 0
      %v1864 = vsel %vm506, %v1811, 0
      %v1867 = vsel %vm561, %v1770, 0
      %1869 = vmatpush.bf16.msra.mxu0 0
      %1870 = vmatpush.bf16.msra.mxu0 0
      %1871 = vmatpush.bf16.msra.mxu0 0
      %1872 = vmatpush.bf16.msra.mxu0 0
      %1873 = vmatpush.bf16.msra.mxu0 0
      %1874 = vmatpush.bf16.msra.mxu0 0
      %1875 = vmatpush.bf16.msra.mxu0 0
      %1876 = vmatpush.bf16.msra.mxu0 %v1867
      %1877 = vmatmul.bf16.gmra.mxu0 %v1813
      %v1878 = vpop.f32.mrf.mxu0
      %v1879 = vadd.f32 0.0, %v1878
      %v1880 = vpop.f32.mrf.mxu0
      %v1881 = vadd.f32 0.0, %v1880
      %1882 = vmatmul.bf16.gmra.mxu0 %v1816
      %v1883 = vpop.f32.mrf.mxu0
      %v1884 = vadd.f32 0.0, %v1883
      %v1885 = vpop.f32.mrf.mxu0
      %v1886 = vadd.f32 0.0, %v1885
      %1887 = vmatmul.bf16.gmra.mxu0 %v1819
      %v1888 = vpop.f32.mrf.mxu0
      %v1889 = vadd.f32 0.0, %v1888
      %v1890 = vpop.f32.mrf.mxu0
      %v1891 = vadd.f32 0.0, %v1890
      %1892 = vmatmul.bf16.gmra.mxu0 %v1822
      %v1893 = vpop.f32.mrf.mxu0
      %v1894 = vadd.f32 0.0, %v1893
      %v1895 = vpop.f32.mrf.mxu0
      %v1896 = vadd.f32 0.0, %v1895
      %1897 = vmatmul.bf16.gmra.mxu0 %v1825
      %v1898 = vpop.f32.mrf.mxu0
      %v1899 = vadd.f32 0.0, %v1898
      %v1900 = vpop.f32.mrf.mxu0
      %v1901 = vadd.f32 0.0, %v1900
      %1902 = vmatmul.bf16.gmra.mxu0 %v1828
      %v1903 = vpop.f32.mrf.mxu0
      %v1904 = vadd.f32 0.0, %v1903
      %v1905 = vpop.f32.mrf.mxu0
      %v1906 = vadd.f32 0.0, %v1905
      %1907 = vmatmul.bf16.gmra.mxu0 %v1831
      %v1908 = vpop.f32.mrf.mxu0
      %v1909 = vadd.f32 0.0, %v1908
      %v1910 = vpop.f32.mrf.mxu0
      %v1911 = vadd.f32 0.0, %v1910
      %1912 = vmatmul.bf16.gmra.mxu0 %v1834
      %v1913 = vpop.f32.mrf.mxu0
      %v1914 = vadd.f32 0.0, %v1913
      %v1915 = vpop.f32.mrf.mxu0
      %v1916 = vadd.f32 0.0, %v1915
      %1917 = vmatmul.bf16.gmra.mxu0 %v1837
      %v1918 = vpop.f32.mrf.mxu0
      %v1919 = vadd.f32 0.0, %v1918
      %v1920 = vpop.f32.mrf.mxu0
      %v1921 = vadd.f32 0.0, %v1920
      %1922 = vmatmul.bf16.gmra.mxu0 %v1840
      %v1923 = vpop.f32.mrf.mxu0
      %v1924 = vadd.f32 0.0, %v1923
      %v1925 = vpop.f32.mrf.mxu0
      %v1926 = vadd.f32 0.0, %v1925
      %1927 = vmatmul.bf16.gmra.mxu0 %v1843
      %v1928 = vpop.f32.mrf.mxu0
      %v1929 = vadd.f32 0.0, %v1928
      %v1930 = vpop.f32.mrf.mxu0
      %v1931 = vadd.f32 0.0, %v1930
      %1932 = vmatmul.bf16.gmra.mxu0 %v1846
      %v1933 = vpop.f32.mrf.mxu0
      %v1934 = vadd.f32 0.0, %v1933
      %v1935 = vpop.f32.mrf.mxu0
      %v1936 = vadd.f32 0.0, %v1935
      %1937 = vmatmul.bf16.gmra.mxu0 %v1849
      %v1938 = vpop.f32.mrf.mxu0
      %v1939 = vadd.f32 0.0, %v1938
      %v1940 = vpop.f32.mrf.mxu0
      %v1941 = vadd.f32 0.0, %v1940
      %1942 = vmatmul.bf16.gmra.mxu0 %v1852
      %v1943 = vpop.f32.mrf.mxu0
      %v1944 = vadd.f32 0.0, %v1943
      %v1945 = vpop.f32.mrf.mxu0
      %v1946 = vadd.f32 0.0, %v1945
      %1947 = vmatmul.bf16.gmra.mxu0 %v1855
      %v1948 = vpop.f32.mrf.mxu0
      %v1949 = vadd.f32 0.0, %v1948
      %v1950 = vpop.f32.mrf.mxu0
      %v1951 = vadd.f32 0.0, %v1950
      %1952 = vmatmul.bf16.gmra.mxu0 %v1858
      %v1953 = vpop.f32.mrf.mxu0
      %v1954 = vadd.f32 0.0, %v1953
      %v1955 = vpop.f32.mrf.mxu0
      %v1956 = vadd.f32 0.0, %v1955
      %1957 = vmatmul.bf16.gmra.mxu0 %v1861
      %v1958 = vpop.f32.mrf.mxu0
      %v1959 = vadd.f32 0.0, %v1958
      %v1960 = vpop.f32.mrf.mxu0
      %v1961 = vadd.f32 0.0, %v1960
      %1962 = vmatmul.bf16.gmra.mxu0 %v1864
      %v1963 = vpop.f32.mrf.mxu0
      %v1964 = vadd.f32 0.0, %v1963
      %v1965 = vpop.f32.mrf.mxu0
      %v1966 = vadd.f32 0.0, %v1965
      %1967 = vdwg.mxu0
      %v1968 = vadd.f32 %v1732, %v1879
      %v1969 = vadd.f32 %v1733, %v1881
      %v1970 = vadd.f32 %v1734, %v1884
      %v1971 = vadd.f32 %v1735, %v1886
      %v1972 = vadd.f32 %v1736, %v1889
      %v1973 = vadd.f32 %v1737, %v1891
      %v1974 = vadd.f32 %v1738, %v1894
      %v1975 = vadd.f32 %v1739, %v1896
      %v1976 = vadd.f32 %v1740, %v1899
      %v1977 = vadd.f32 %v1741, %v1901
      %v1978 = vadd.f32 %v1742, %v1904
      %v1979 = vadd.f32 %v1743, %v1906
      %v1980 = vadd.f32 %v1744, %v1909
      %v1981 = vadd.f32 %v1745, %v1911
      %v1982 = vadd.f32 %v1746, %v1914
      %v1983 = vadd.f32 %v1747, %v1916
      %v1984 = vadd.f32 %v1748, %v1919
      %v1985 = vadd.f32 %v1749, %v1921
      %v1986 = vadd.f32 %v1750, %v1924
      %v1987 = vadd.f32 %v1751, %v1926
      %v1988 = vadd.f32 %v1752, %v1929
      %v1989 = vadd.f32 %v1753, %v1931
      %v1990 = vadd.f32 %v1754, %v1934
      %v1991 = vadd.f32 %v1755, %v1936
      %v1992 = vadd.f32 %v1756, %v1939
      %v1993 = vadd.f32 %v1757, %v1941
      %v1994 = vadd.f32 %v1758, %v1944
      %v1995 = vadd.f32 %v1759, %v1946
      %v1996 = vadd.f32 %v1760, %v1949
      %v1997 = vadd.f32 %v1761, %v1951
      %v1998 = vadd.f32 %v1762, %v1954
      %v1999 = vadd.f32 %v1763, %v1956
      %v2000 = vadd.f32 %v1764, %v1959
      %v2001 = vadd.f32 %v1765, %v1961
      %v2002 = vadd.f32 %v1766, %v1964
      %v2003 = vadd.f32 %v1767, %v1966
      %v2004 = vld [vmem:[%s210 + $0x10] sm:$0xc]
      %v2005 = vld [vmem:[%s210 + $0x14] sm:$0xf]
      %v2006 = vld [vmem:[%s210 + $0x18] sm:$0xf]
      %v2007 = vld [vmem:[%s210 + $0x1c] sm:$0xf]
      %v2008 = vld [vmem:[%s210 + $0x20] sm:$0xf]
      %v2009 = vld [vmem:[%s210 + $0x24] sm:$0xf]
      %v2010 = vld [vmem:[%s210 + $0x28] sm:$0xf]
      %v2011 = vld [vmem:[%s210 + $0x2c] sm:$0xf]
      %v2012 = vld [vmem:[%s210 + $0x30] sm:$0xf]
      %v2013 = vld [vmem:[%s210 + $0x34] sm:$0xf]
      %v2014 = vld [vmem:[%s210 + $0x38] sm:$0xf]
      %v2015 = vld [vmem:[%s210 + $0x3c] sm:$0xf]
      %v2016 = vld [vmem:[%s210 + $0x40] sm:$0xf]
      %v2017 = vld [vmem:[%s210 + $0x44] sm:$0xf]
      %v2018 = vld [vmem:[%s210 + $0x48] sm:$0xf]
      %v2019 = vld [vmem:[%s210 + $0x4c] sm:$0xf]
      %v2020 = vld [vmem:[%s210 + $0x50] sm:$0xf]
      %v2021 = vld [vmem:[%s210 + $0x54] sm:$0xf]
      %v2022 = vld [vmem:[%s210 + $0x58] sm:$0xf]
      %v2023 = vld [vmem:[%s210 + $0x5c] sm:$0xf]
      %v2024 = vld [vmem:[%s210 + $0x60] sm:$0xf]
      %v2025 = vld [vmem:[%s210 + $0x64] sm:$0xf]
      %v2026 = vld [vmem:[%s210 + $0x68] sm:$0xf]
      %v2027 = vld [vmem:[%s210 + $0x6c] sm:$0xf]
      %v2028 = vld [vmem:[%s210 + $0x70] sm:$0xf]
      %v2029 = vld [vmem:[%s210 + $0x74] sm:$0xf]
      %v2030 = vld [vmem:[%s210 + $0x78] sm:$0xf]
      %v2031 = vld [vmem:[%s210 + $0x7c] sm:$0xf]
      %v2032 = vld [vmem:[%s210 + $0x80] sm:$0xf]
      %v2033 = vld [vmem:[%s210 + $0x84] sm:$0xf]
      %v2034 = vld [vmem:[%s210 + $0x88] sm:$0xf]
      %v2035 = vld [vmem:[%s210 + $0x8c] sm:$0xf]
      %v2036 = vld [vmem:[%s210 + $0x90] sm:$0xf]
      %v2037 = vld [vmem:[%s210 + $0x94] sm:$0xf]
      %v2038 = vld [vmem:[%s210 + $0x98] sm:$0xf]
      %v2039 = vld [vmem:[%s210 + $0x9c] sm:$0xf]
      %v2040 = vld [vmem:[%s210 + $0xa0] sm:$0x3]
      %s2041 = scalar_lea.vmem %s1, 12
      %v2042 = vld [vmem:[%s2041] sm:$0x3]
      %v2080 = vunpack.c.l.b16 %v2004
      %v2081 = vunpack.c.l.b16 %v2005
      %v2082 = vunpack.c.l.b16 %v2006
      %v2083 = vunpack.c.l.b16 %v2007
      %v2084 = vunpack.c.l.b16 %v2008
      %v2085 = vunpack.c.l.b16 %v2009
      %v2086 = vunpack.c.l.b16 %v2010
      %v2087 = vunpack.c.l.b16 %v2011
      %v2088 = vunpack.c.l.b16 %v2012
      %v2089 = vunpack.c.l.b16 %v2013
      %v2090 = vunpack.c.l.b16 %v2014
      %v2091 = vunpack.c.l.b16 %v2015
      %v2092 = vunpack.c.l.b16 %v2016
      %v2093 = vunpack.c.l.b16 %v2017
      %v2094 = vunpack.c.l.b16 %v2018
      %v2095 = vunpack.c.l.b16 %v2019
      %v2096 = vunpack.c.l.b16 %v2020
      %v2097 = vunpack.c.l.b16 %v2021
      %v2098 = vunpack.c.l.b16 %v2022
      %v2099 = vunpack.c.l.b16 %v2023
      %v2100 = vunpack.c.l.b16 %v2024
      %v2101 = vunpack.c.l.b16 %v2025
      %v2102 = vunpack.c.l.b16 %v2026
      %v2103 = vunpack.c.l.b16 %v2027
      %v2104 = vunpack.c.l.b16 %v2028
      %v2105 = vunpack.c.l.b16 %v2029
      %v2106 = vunpack.c.l.b16 %v2030
      %v2107 = vunpack.c.l.b16 %v2031
      %v2108 = vunpack.c.l.b16 %v2032
      %v2109 = vunpack.c.l.b16 %v2033
      %v2110 = vunpack.c.l.b16 %v2034
      %v2111 = vunpack.c.l.b16 %v2035
      %v2112 = vunpack.c.l.b16 %v2036
      %v2113 = vunpack.c.l.b16 %v2037
      %v2114 = vunpack.c.l.b16 %v2038
      %v2115 = vunpack.c.l.b16 %v2039
      %v2116 = vunpack.c.l.b16 %v2040
      %v2117 = vpack.c.b16 %v2081, %v2080
      %v2118 = vpack.c.b16 %v2083, %v2082
      %v2119 = vpack.c.b16 %v2085, %v2084
      %v2120 = vpack.c.b16 %v2087, %v2086
      %v2121 = vpack.c.b16 %v2089, %v2088
      %v2122 = vpack.c.b16 %v2091, %v2090
      %v2123 = vpack.c.b16 %v2093, %v2092
      %v2124 = vpack.c.b16 %v2095, %v2094
      %v2125 = vpack.c.b16 %v2097, %v2096
      %v2126 = vpack.c.b16 %v2099, %v2098
      %v2127 = vpack.c.b16 %v2101, %v2100
      %v2128 = vpack.c.b16 %v2103, %v2102
      %v2129 = vpack.c.b16 %v2105, %v2104
      %v2130 = vpack.c.b16 %v2107, %v2106
      %v2131 = vpack.c.b16 %v2109, %v2108
      %v2132 = vpack.c.b16 %v2111, %v2110
      %v2133 = vpack.c.b16 %v2113, %v2112
      %v2134 = vpack.c.b16 %v2115, %v2114
      %v2135 = vpack.c.b16 %v2116, %v2116
      %v2136 = vrot.slane %v2117, 2
      %v2137 = vrot.slane %v2118, 2
      %v2138 = vsel %vm1774, %v2136, %v2137
      %v2139 = vrot.slane %v2119, 2
      %v2140 = vsel %vm1774, %v2137, %v2139
      %v2141 = vrot.slane %v2120, 2
      %v2142 = vsel %vm1774, %v2139, %v2141
      %v2143 = vrot.slane %v2121, 2
      %v2144 = vsel %vm1774, %v2141, %v2143
      %v2145 = vrot.slane %v2122, 2
      %v2146 = vsel %vm1774, %v2143, %v2145
      %v2147 = vrot.slane %v2123, 2
      %v2148 = vsel %vm1774, %v2145, %v2147
      %v2149 = vrot.slane %v2124, 2
      %v2150 = vsel %vm1774, %v2147, %v2149
      %v2151 = vrot.slane %v2125, 2
      %v2152 = vsel %vm1774, %v2149, %v2151
      %v2153 = vrot.slane %v2126, 2
      %v2154 = vsel %vm1774, %v2151, %v2153
      %v2155 = vrot.slane %v2127, 2
      %v2156 = vsel %vm1774, %v2153, %v2155
      %v2157 = vrot.slane %v2128, 2
      %v2158 = vsel %vm1774, %v2155, %v2157
      %v2159 = vrot.slane %v2129, 2
      %v2160 = vsel %vm1774, %v2157, %v2159
      %v2161 = vrot.slane %v2130, 2
      %v2162 = vsel %vm1774, %v2159, %v2161
      %v2163 = vrot.slane %v2131, 2
      %v2164 = vsel %vm1774, %v2161, %v2163
      %v2165 = vrot.slane %v2132, 2
      %v2166 = vsel %vm1774, %v2163, %v2165
      %v2167 = vrot.slane %v2133, 2
      %v2168 = vsel %vm1774, %v2165, %v2167
      %v2169 = vrot.slane %v2134, 2
      %v2170 = vsel %vm1774, %v2167, %v2169
      %v2171 = vrot.slane %v2135, 2
      %v2172 = vsel %vm1774, %v2169, %v2171
      %v2174 = vsel %vm506, %v2138, 0
      %v2177 = vsel %vm506, %v2140, 0
      %v2180 = vsel %vm506, %v2142, 0
      %v2183 = vsel %vm506, %v2144, 0
      %v2186 = vsel %vm506, %v2146, 0
      %v2189 = vsel %vm506, %v2148, 0
      %v2192 = vsel %vm506, %v2150, 0
      %v2195 = vsel %vm506, %v2152, 0
      %v2198 = vsel %vm506, %v2154, 0
      %v2201 = vsel %vm506, %v2156, 0
      %v2204 = vsel %vm506, %v2158, 0
      %v2207 = vsel %vm506, %v2160, 0
      %v2210 = vsel %vm506, %v2162, 0
      %v2213 = vsel %vm506, %v2164, 0
      %v2216 = vsel %vm506, %v2166, 0
      %v2219 = vsel %vm506, %v2168, 0
      %v2222 = vsel %vm506, %v2170, 0
      %v2225 = vsel %vm506, %v2172, 0
      %v2228 = vsel %vm561, %v2042, 0
      %2230 = vmatpush.bf16.msra.mxu0 0
      %2231 = vmatpush.bf16.msra.mxu0 0
      %2232 = vmatpush.bf16.msra.mxu0 0
      %2233 = vmatpush.bf16.msra.mxu0 0
      %2234 = vmatpush.bf16.msra.mxu0 0
      %2235 = vmatpush.bf16.msra.mxu0 0
      %2236 = vmatpush.bf16.msra.mxu0 0
      %2237 = vmatpush.bf16.msra.mxu0 %v2228
      %2238 = vmatmul.bf16.gmra.mxu0 %v2174
      %v2239 = vpop.f32.mrf.mxu0
      %v2240 = vadd.f32 0.0, %v2239
      %v2241 = vpop.f32.mrf.mxu0
      %v2242 = vadd.f32 0.0, %v2241
      %2243 = vmatmul.bf16.gmra.mxu0 %v2177
      %v2244 = vpop.f32.mrf.mxu0
      %v2245 = vadd.f32 0.0, %v2244
      %v2246 = vpop.f32.mrf.mxu0
      %v2247 = vadd.f32 0.0, %v2246
      %2248 = vmatmul.bf16.gmra.mxu0 %v2180
      %v2249 = vpop.f32.mrf.mxu0
      %v2250 = vadd.f32 0.0, %v2249
      %v2251 = vpop.f32.mrf.mxu0
      %v2252 = vadd.f32 0.0, %v2251
      %2253 = vmatmul.bf16.gmra.mxu0 %v2183
      %v2254 = vpop.f32.mrf.mxu0
      %v2255 = vadd.f32 0.0, %v2254
      %v2256 = vpop.f32.mrf.mxu0
      %v2257 = vadd.f32 0.0, %v2256
      %2258 = vmatmul.bf16.gmra.mxu0 %v2186
      %v2259 = vpop.f32.mrf.mxu0
      %v2260 = vadd.f32 0.0, %v2259
      %v2261 = vpop.f32.mrf.mxu0
      %v2262 = vadd.f32 0.0, %v2261
      %2263 = vmatmul.bf16.gmra.mxu0 %v2189
      %v2264 = vpop.f32.mrf.mxu0
      %v2265 = vadd.f32 0.0, %v2264
      %v2266 = vpop.f32.mrf.mxu0
      %v2267 = vadd.f32 0.0, %v2266
      %2268 = vmatmul.bf16.gmra.mxu0 %v2192
      %v2269 = vpop.f32.mrf.mxu0
      %v2270 = vadd.f32 0.0, %v2269
      %v2271 = vpop.f32.mrf.mxu0
      %v2272 = vadd.f32 0.0, %v2271
      %2273 = vmatmul.bf16.gmra.mxu0 %v2195
      %v2274 = vpop.f32.mrf.mxu0
      %v2275 = vadd.f32 0.0, %v2274
      %v2276 = vpop.f32.mrf.mxu0
      %v2277 = vadd.f32 0.0, %v2276
      %2278 = vmatmul.bf16.gmra.mxu0 %v2198
      %v2279 = vpop.f32.mrf.mxu0
      %v2280 = vadd.f32 0.0, %v2279
      %v2281 = vpop.f32.mrf.mxu0
      %v2282 = vadd.f32 0.0, %v2281
      %2283 = vmatmul.bf16.gmra.mxu0 %v2201
      %v2284 = vpop.f32.mrf.mxu0
      %v2285 = vadd.f32 0.0, %v2284
      %v2286 = vpop.f32.mrf.mxu0
      %v2287 = vadd.f32 0.0, %v2286
      %2288 = vmatmul.bf16.gmra.mxu0 %v2204
      %v2289 = vpop.f32.mrf.mxu0
      %v2290 = vadd.f32 0.0, %v2289
      %v2291 = vpop.f32.mrf.mxu0
      %v2292 = vadd.f32 0.0, %v2291
      %2293 = vmatmul.bf16.gmra.mxu0 %v2207
      %v2294 = vpop.f32.mrf.mxu0
      %v2295 = vadd.f32 0.0, %v2294
      %v2296 = vpop.f32.mrf.mxu0
      %v2297 = vadd.f32 0.0, %v2296
      %2298 = vmatmul.bf16.gmra.mxu0 %v2210
      %v2299 = vpop.f32.mrf.mxu0
      %v2300 = vadd.f32 0.0, %v2299
      %v2301 = vpop.f32.mrf.mxu0
      %v2302 = vadd.f32 0.0, %v2301
      %2303 = vmatmul.bf16.gmra.mxu0 %v2213
      %v2304 = vpop.f32.mrf.mxu0
      %v2305 = vadd.f32 0.0, %v2304
      %v2306 = vpop.f32.mrf.mxu0
      %v2307 = vadd.f32 0.0, %v2306
      %2308 = vmatmul.bf16.gmra.mxu0 %v2216
      %v2309 = vpop.f32.mrf.mxu0
      %v2310 = vadd.f32 0.0, %v2309
      %v2311 = vpop.f32.mrf.mxu0
      %v2312 = vadd.f32 0.0, %v2311
      %2313 = vmatmul.bf16.gmra.mxu0 %v2219
      %v2314 = vpop.f32.mrf.mxu0
      %v2315 = vadd.f32 0.0, %v2314
      %v2316 = vpop.f32.mrf.mxu0
      %v2317 = vadd.f32 0.0, %v2316
      %2318 = vmatmul.bf16.gmra.mxu0 %v2222
      %v2319 = vpop.f32.mrf.mxu0
      %v2320 = vadd.f32 0.0, %v2319
      %v2321 = vpop.f32.mrf.mxu0
      %v2322 = vadd.f32 0.0, %v2321
      %2323 = vmatmul.bf16.gmra.mxu0 %v2225
      %v2324 = vpop.f32.mrf.mxu0
      %v2325 = vadd.f32 0.0, %v2324
      %v2326 = vpop.f32.mrf.mxu0
      %v2327 = vadd.f32 0.0, %v2326
      %2328 = vdwg.mxu0
      %v2329 = vadd.f32 %v1968, %v2240
      %v2330 = vadd.f32 %v1969, %v2242
      %v2331 = vadd.f32 %v1970, %v2245
      %v2332 = vadd.f32 %v1971, %v2247
      %v2333 = vadd.f32 %v1972, %v2250
      %v2334 = vadd.f32 %v1973, %v2252
      %v2335 = vadd.f32 %v1974, %v2255
      %v2336 = vadd.f32 %v1975, %v2257
      %v2337 = vadd.f32 %v1976, %v2260
      %v2338 = vadd.f32 %v1977, %v2262
      %v2339 = vadd.f32 %v1978, %v2265
      %v2340 = vadd.f32 %v1979, %v2267
      %v2341 = vadd.f32 %v1980, %v2270
      %v2342 = vadd.f32 %v1981, %v2272
      %v2343 = vadd.f32 %v1982, %v2275
      %v2344 = vadd.f32 %v1983, %v2277
      %v2345 = vadd.f32 %v1984, %v2280
      %v2346 = vadd.f32 %v1985, %v2282
      %v2347 = vadd.f32 %v1986, %v2285
      %v2348 = vadd.f32 %v1987, %v2287
      %v2349 = vadd.f32 %v1988, %v2290
      %v2350 = vadd.f32 %v1989, %v2292
      %v2351 = vadd.f32 %v1990, %v2295
      %v2352 = vadd.f32 %v1991, %v2297
      %v2353 = vadd.f32 %v1992, %v2300
      %v2354 = vadd.f32 %v1993, %v2302
      %v2355 = vadd.f32 %v1994, %v2305
      %v2356 = vadd.f32 %v1995, %v2307
      %v2357 = vadd.f32 %v1996, %v2310
      %v2358 = vadd.f32 %v1997, %v2312
      %v2359 = vadd.f32 %v1998, %v2315
      %v2360 = vadd.f32 %v1999, %v2317
      %v2361 = vadd.f32 %v2000, %v2320
      %v2362 = vadd.f32 %v2001, %v2322
      %v2363 = vadd.f32 %v2002, %v2325
      %v2364 = vadd.f32 %v2003, %v2327
      %v2365 = vld [vmem:[%s210 + $0xa0] sm:$0x7]
      %s2366 = scalar_lea.vmem %s1, 14
      %v2367 = vld [vmem:[%s2366] sm:$0x3]
      %v2369 = vunpack.c.l.b16 %v2365
      %v2370 = vpack.c.b16 %v2369, %v2369
      %vm2371 = vsmask.f32 5376
      %v2373 = vshrl.u32 %v2117, 16
      %v2375 = vrot.slane %v2373, 2
      %v2376 = vshll.u32 %v2117, 16
      %v2378 = vrot.slane %v2376, 3
      %v2379 = vor.u32 %v2375, %v2378
      %v2381 = vshrl.u32 %v2118, 16
      %v2383 = vrot.slane %v2381, 2
      %v2384 = vshll.u32 %v2118, 16
      %v2386 = vrot.slane %v2384, 3
      %v2387 = vor.u32 %v2383, %v2386
      %v2388 = vsel %vm2371, %v2379, %v2387
      %v2390 = vshrl.u32 %v2119, 16
      %v2392 = vrot.slane %v2390, 2
      %v2393 = vshll.u32 %v2119, 16
      %v2395 = vrot.slane %v2393, 3
      %v2396 = vor.u32 %v2392, %v2395
      %v2397 = vsel %vm2371, %v2387, %v2396
      %v2399 = vshrl.u32 %v2120, 16
      %v2401 = vrot.slane %v2399, 2
      %v2402 = vshll.u32 %v2120, 16
      %v2404 = vrot.slane %v2402, 3
      %v2405 = vor.u32 %v2401, %v2404
      %v2406 = vsel %vm2371, %v2396, %v2405
      %v2408 = vshrl.u32 %v2121, 16
      %v2410 = vrot.slane %v2408, 2
      %v2411 = vshll.u32 %v2121, 16
      %v2413 = vrot.slane %v2411, 3
      %v2414 = vor.u32 %v2410, %v2413
      %v2415 = vsel %vm2371, %v2405, %v2414
      %v2417 = vshrl.u32 %v2122, 16
      %v2419 = vrot.slane %v2417, 2
      %v2420 = vshll.u32 %v2122, 16
      %v2422 = vrot.slane %v2420, 3
      %v2423 = vor.u32 %v2419, %v2422
      %v2424 = vsel %vm2371, %v2414, %v2423
      %v2426 = vshrl.u32 %v2123, 16
      %v2428 = vrot.slane %v2426, 2
      %v2429 = vshll.u32 %v2123, 16
      %v2431 = vrot.slane %v2429, 3
      %v2432 = vor.u32 %v2428, %v2431
      %v2433 = vsel %vm2371, %v2423, %v2432
      %v2435 = vshrl.u32 %v2124, 16
      %v2437 = vrot.slane %v2435, 2
      %v2438 = vshll.u32 %v2124, 16
      %v2440 = vrot.slane %v2438, 3
      %v2441 = vor.u32 %v2437, %v2440
      %v2442 = vsel %vm2371, %v2432, %v2441
      %v2444 = vshrl.u32 %v2125, 16
      %v2446 = vrot.slane %v2444, 2
      %v2447 = vshll.u32 %v2125, 16
      %v2449 = vrot.slane %v2447, 3
      %v2450 = vor.u32 %v2446, %v2449
      %v2451 = vsel %vm2371, %v2441, %v2450
      %v2453 = vshrl.u32 %v2126, 16
      %v2455 = vrot.slane %v2453, 2
      %v2456 = vshll.u32 %v2126, 16
      %v2458 = vrot.slane %v2456, 3
      %v2459 = vor.u32 %v2455, %v2458
      %v2460 = vsel %vm2371, %v2450, %v2459
      %v2462 = vshrl.u32 %v2127, 16
      %v2464 = vrot.slane %v2462, 2
      %v2465 = vshll.u32 %v2127, 16
      %v2467 = vrot.slane %v2465, 3
      %v2468 = vor.u32 %v2464, %v2467
      %v2469 = vsel %vm2371, %v2459, %v2468
      %v2471 = vshrl.u32 %v2128, 16
      %v2473 = vrot.slane %v2471, 2
      %v2474 = vshll.u32 %v2128, 16
      %v2476 = vrot.slane %v2474, 3
      %v2477 = vor.u32 %v2473, %v2476
      %v2478 = vsel %vm2371, %v2468, %v2477
      %v2480 = vshrl.u32 %v2129, 16
      %v2482 = vrot.slane %v2480, 2
      %v2483 = vshll.u32 %v2129, 16
      %v2485 = vrot.slane %v2483, 3
      %v2486 = vor.u32 %v2482, %v2485
      %v2487 = vsel %vm2371, %v2477, %v2486
      %v2489 = vshrl.u32 %v2130, 16
      %v2491 = vrot.slane %v2489, 2
      %v2492 = vshll.u32 %v2130, 16
      %v2494 = vrot.slane %v2492, 3
      %v2495 = vor.u32 %v2491, %v2494
      %v2496 = vsel %vm2371, %v2486, %v2495
      %v2498 = vshrl.u32 %v2131, 16
      %v2500 = vrot.slane %v2498, 2
      %v2501 = vshll.u32 %v2131, 16
      %v2503 = vrot.slane %v2501, 3
      %v2504 = vor.u32 %v2500, %v2503
      %v2505 = vsel %vm2371, %v2495, %v2504
      %v2507 = vshrl.u32 %v2132, 16
      %v2509 = vrot.slane %v2507, 2
      %v2510 = vshll.u32 %v2132, 16
      %v2512 = vrot.slane %v2510, 3
      %v2513 = vor.u32 %v2509, %v2512
      %v2514 = vsel %vm2371, %v2504, %v2513
      %v2516 = vshrl.u32 %v2133, 16
      %v2518 = vrot.slane %v2516, 2
      %v2519 = vshll.u32 %v2133, 16
      %v2521 = vrot.slane %v2519, 3
      %v2522 = vor.u32 %v2518, %v2521
      %v2523 = vsel %vm2371, %v2513, %v2522
      %v2525 = vshrl.u32 %v2134, 16
      %v2527 = vrot.slane %v2525, 2
      %v2528 = vshll.u32 %v2134, 16
      %v2530 = vrot.slane %v2528, 3
      %v2531 = vor.u32 %v2527, %v2530
      %v2532 = vsel %vm2371, %v2522, %v2531
      %v2534 = vshrl.u32 %v2370, 16
      %v2536 = vrot.slane %v2534, 2
      %v2537 = vshll.u32 %v2370, 16
      %v2539 = vrot.slane %v2537, 3
      %v2540 = vor.u32 %v2536, %v2539
      %v2541 = vsel %vm2371, %v2531, %v2540
      %v2543 = vsel %vm506, %v2388, 0
      %v2546 = vsel %vm506, %v2397, 0
      %v2549 = vsel %vm506, %v2406, 0
      %v2552 = vsel %vm506, %v2415, 0
      %v2555 = vsel %vm506, %v2424, 0
      %v2558 = vsel %vm506, %v2433, 0
      %v2561 = vsel %vm506, %v2442, 0
      %v2564 = vsel %vm506, %v2451, 0
      %v2567 = vsel %vm506, %v2460, 0
      %v2570 = vsel %vm506, %v2469, 0
      %v2573 = vsel %vm506, %v2478, 0
      %v2576 = vsel %vm506, %v2487, 0
      %v2579 = vsel %vm506, %v2496, 0
      %v2582 = vsel %vm506, %v2505, 0
      %v2585 = vsel %vm506, %v2514, 0
      %v2588 = vsel %vm506, %v2523, 0
      %v2591 = vsel %vm506, %v2532, 0
      %v2594 = vsel %vm506, %v2541, 0
      %v2597 = vsel %vm561, %v2367, 0
      %2599 = vmatpush.bf16.msra.mxu0 0
      %2600 = vmatpush.bf16.msra.mxu0 0
      %2601 = vmatpush.bf16.msra.mxu0 0
      %2602 = vmatpush.bf16.msra.mxu0 0
      %2603 = vmatpush.bf16.msra.mxu0 0
      %2604 = vmatpush.bf16.msra.mxu0 0
      %2605 = vmatpush.bf16.msra.mxu0 0
      %2606 = vmatpush.bf16.msra.mxu0 %v2597
      %2607 = vmatmul.bf16.gmra.mxu0 %v2543
      %v2608 = vpop.f32.mrf.mxu0
      %v2609 = vadd.f32 0.0, %v2608
      %v2610 = vpop.f32.mrf.mxu0
      %v2611 = vadd.f32 0.0, %v2610
      %2612 = vmatmul.bf16.gmra.mxu0 %v2546
      %v2613 = vpop.f32.mrf.mxu0
      %v2614 = vadd.f32 0.0, %v2613
      %v2615 = vpop.f32.mrf.mxu0
      %v2616 = vadd.f32 0.0, %v2615
      %2617 = vmatmul.bf16.gmra.mxu0 %v2549
      %v2618 = vpop.f32.mrf.mxu0
      %v2619 = vadd.f32 0.0, %v2618
      %v2620 = vpop.f32.mrf.mxu0
      %v2621 = vadd.f32 0.0, %v2620
      %2622 = vmatmul.bf16.gmra.mxu0 %v2552
      %v2623 = vpop.f32.mrf.mxu0
      %v2624 = vadd.f32 0.0, %v2623
      %v2625 = vpop.f32.mrf.mxu0
      %v2626 = vadd.f32 0.0, %v2625
      %2627 = vmatmul.bf16.gmra.mxu0 %v2555
      %v2628 = vpop.f32.mrf.mxu0
      %v2629 = vadd.f32 0.0, %v2628
      %v2630 = vpop.f32.mrf.mxu0
      %v2631 = vadd.f32 0.0, %v2630
      %2632 = vmatmul.bf16.gmra.mxu0 %v2558
      %v2633 = vpop.f32.mrf.mxu0
      %v2634 = vadd.f32 0.0, %v2633
      %v2635 = vpop.f32.mrf.mxu0
      %v2636 = vadd.f32 0.0, %v2635
      %2637 = vmatmul.bf16.gmra.mxu0 %v2561
      %v2638 = vpop.f32.mrf.mxu0
      %v2639 = vadd.f32 0.0, %v2638
      %v2640 = vpop.f32.mrf.mxu0
      %v2641 = vadd.f32 0.0, %v2640
      %2642 = vmatmul.bf16.gmra.mxu0 %v2564
      %v2643 = vpop.f32.mrf.mxu0
      %v2644 = vadd.f32 0.0, %v2643
      %v2645 = vpop.f32.mrf.mxu0
      %v2646 = vadd.f32 0.0, %v2645
      %2647 = vmatmul.bf16.gmra.mxu0 %v2567
      %v2648 = vpop.f32.mrf.mxu0
      %v2649 = vadd.f32 0.0, %v2648
      %v2650 = vpop.f32.mrf.mxu0
      %v2651 = vadd.f32 0.0, %v2650
      %2652 = vmatmul.bf16.gmra.mxu0 %v2570
      %v2653 = vpop.f32.mrf.mxu0
      %v2654 = vadd.f32 0.0, %v2653
      %v2655 = vpop.f32.mrf.mxu0
      %v2656 = vadd.f32 0.0, %v2655
      %2657 = vmatmul.bf16.gmra.mxu0 %v2573
      %v2658 = vpop.f32.mrf.mxu0
      %v2659 = vadd.f32 0.0, %v2658
      %v2660 = vpop.f32.mrf.mxu0
      %v2661 = vadd.f32 0.0, %v2660
      %2662 = vmatmul.bf16.gmra.mxu0 %v2576
      %v2663 = vpop.f32.mrf.mxu0
      %v2664 = vadd.f32 0.0, %v2663
      %v2665 = vpop.f32.mrf.mxu0
      %v2666 = vadd.f32 0.0, %v2665
      %2667 = vmatmul.bf16.gmra.mxu0 %v2579
      %v2668 = vpop.f32.mrf.mxu0
      %v2669 = vadd.f32 0.0, %v2668
      %v2670 = vpop.f32.mrf.mxu0
      %v2671 = vadd.f32 0.0, %v2670
      %2672 = vmatmul.bf16.gmra.mxu0 %v2582
      %v2673 = vpop.f32.mrf.mxu0
      %v2674 = vadd.f32 0.0, %v2673
      %v2675 = vpop.f32.mrf.mxu0
      %v2676 = vadd.f32 0.0, %v2675
      %2677 = vmatmul.bf16.gmra.mxu0 %v2585
      %v2678 = vpop.f32.mrf.mxu0
      %v2679 = vadd.f32 0.0, %v2678
      %v2680 = vpop.f32.mrf.mxu0
      %v2681 = vadd.f32 0.0, %v2680
      %2682 = vmatmul.bf16.gmra.mxu0 %v2588
      %v2683 = vpop.f32.mrf.mxu0
      %v2684 = vadd.f32 0.0, %v2683
      %v2685 = vpop.f32.mrf.mxu0
      %v2686 = vadd.f32 0.0, %v2685
      %2687 = vmatmul.bf16.gmra.mxu0 %v2591
      %v2688 = vpop.f32.mrf.mxu0
      %v2689 = vadd.f32 0.0, %v2688
      %v2690 = vpop.f32.mrf.mxu0
      %v2691 = vadd.f32 0.0, %v2690
      %2692 = vmatmul.bf16.gmra.mxu0 %v2594
      %v2693 = vpop.f32.mrf.mxu0
      %v2694 = vadd.f32 0.0, %v2693
      %v2695 = vpop.f32.mrf.mxu0
      %v2696 = vadd.f32 0.0, %v2695
      %2697 = vdwg.mxu0
      %v2698 = vadd.f32 %v2329, %v2609
      %v2699 = vadd.f32 %v2330, %v2611
      %v2700 = vadd.f32 %v2331, %v2614
      %v2701 = vadd.f32 %v2332, %v2616
      %v2702 = vadd.f32 %v2333, %v2619
      %v2703 = vadd.f32 %v2334, %v2621
      %v2704 = vadd.f32 %v2335, %v2624
      %v2705 = vadd.f32 %v2336, %v2626
      %v2706 = vadd.f32 %v2337, %v2629
      %v2707 = vadd.f32 %v2338, %v2631
      %v2708 = vadd.f32 %v2339, %v2634
      %v2709 = vadd.f32 %v2340, %v2636
      %v2710 = vadd.f32 %v2341, %v2639
      %v2711 = vadd.f32 %v2342, %v2641
      %v2712 = vadd.f32 %v2343, %v2644
      %v2713 = vadd.f32 %v2344, %v2646
      %v2714 = vadd.f32 %v2345, %v2649
      %v2715 = vadd.f32 %v2346, %v2651
      %v2716 = vadd.f32 %v2347, %v2654
      %v2717 = vadd.f32 %v2348, %v2656
      %v2718 = vadd.f32 %v2349, %v2659
      %v2719 = vadd.f32 %v2350, %v2661
      %v2720 = vadd.f32 %v2351, %v2664
      %v2721 = vadd.f32 %v2352, %v2666
      %v2722 = vadd.f32 %v2353, %v2669
      %v2723 = vadd.f32 %v2354, %v2671
      %v2724 = vadd.f32 %v2355, %v2674
      %v2725 = vadd.f32 %v2356, %v2676
      %v2726 = vadd.f32 %v2357, %v2679
      %v2727 = vadd.f32 %v2358, %v2681
      %v2728 = vadd.f32 %v2359, %v2684
      %v2729 = vadd.f32 %v2360, %v2686
      %v2730 = vadd.f32 %v2361, %v2689
      %v2731 = vadd.f32 %v2362, %v2691
      %v2732 = vadd.f32 %v2363, %v2694
      %v2733 = vadd.f32 %v2364, %v2696
      %v2734 = vld [vmem:[%s210 + $0x10] sm:$0x8]
      %s2735 = scalar_lea.vmem %s1, 16
      %v2736 = vld [vmem:[%s2735] sm:$0x3]
      %v2738 = vunpack.c.l.b16 %v2734
      %v2739 = vpack.c.b16 %v2081, %v2738
      %vm2740 = vcmask 1044480
      %v2741 = vrot.slane %v2739, 3
      %v2742 = vrot.slane %v2118, 3
      %v2743 = vsel %vm2740, %v2741, %v2742
      %v2744 = vrot.slane %v2119, 3
      %v2745 = vsel %vm2740, %v2742, %v2744
      %v2746 = vrot.slane %v2120, 3
      %v2747 = vsel %vm2740, %v2744, %v2746
      %v2748 = vrot.slane %v2121, 3
      %v2749 = vsel %vm2740, %v2746, %v2748
      %v2750 = vrot.slane %v2122, 3
      %v2751 = vsel %vm2740, %v2748, %v2750
      %v2752 = vrot.slane %v2123, 3
      %v2753 = vsel %vm2740, %v2750, %v2752
      %v2754 = vrot.slane %v2124, 3
      %v2755 = vsel %vm2740, %v2752, %v2754
      %v2756 = vrot.slane %v2125, 3
      %v2757 = vsel %vm2740, %v2754, %v2756
      %v2758 = vrot.slane %v2126, 3
      %v2759 = vsel %vm2740, %v2756, %v2758
      %v2760 = vrot.slane %v2127, 3
      %v2761 = vsel %vm2740, %v2758, %v2760
      %v2762 = vrot.slane %v2128, 3
      %v2763 = vsel %vm2740, %v2760, %v2762
      %v2764 = vrot.slane %v2129, 3
      %v2765 = vsel %vm2740, %v2762, %v2764
      %v2766 = vrot.slane %v2130, 3
      %v2767 = vsel %vm2740, %v2764, %v2766
      %v2768 = vrot.slane %v2131, 3
      %v2769 = vsel %vm2740, %v2766, %v2768
      %v2770 = vrot.slane %v2132, 3
      %v2771 = vsel %vm2740, %v2768, %v2770
      %v2772 = vrot.slane %v2133, 3
      %v2773 = vsel %vm2740, %v2770, %v2772
      %v2774 = vrot.slane %v2134, 3
      %v2775 = vsel %vm2740, %v2772, %v2774
      %v2776 = vrot.slane %v2370, 3
      %v2777 = vsel %vm2740, %v2774, %v2776
      %v2779 = vsel %vm506, %v2743, 0
      %v2782 = vsel %vm506, %v2745, 0
      %v2785 = vsel %vm506, %v2747, 0
      %v2788 = vsel %vm506, %v2749, 0
      %v2791 = vsel %vm506, %v2751, 0
      %v2794 = vsel %vm506, %v2753, 0
      %v2797 = vsel %vm506, %v2755, 0
      %v2800 = vsel %vm506, %v2757, 0
      %v2803 = vsel %vm506, %v2759, 0
      %v2806 = vsel %vm506, %v2761, 0
      %v2809 = vsel %vm506, %v2763, 0
      %v2812 = vsel %vm506, %v2765, 0
      %v2815 = vsel %vm506, %v2767, 0
      %v2818 = vsel %vm506, %v2769, 0
      %v2821 = vsel %vm506, %v2771, 0
      %v2824 = vsel %vm506, %v2773, 0
      %v2827 = vsel %vm506, %v2775, 0
      %v2830 = vsel %vm506, %v2777, 0
      %v2833 = vsel %vm561, %v2736, 0
      %2835 = vmatpush.bf16.msra.mxu0 0
      %2836 = vmatpush.bf16.msra.mxu0 0
      %2837 = vmatpush.bf16.msra.mxu0 0
      %2838 = vmatpush.bf16.msra.mxu0 0
      %2839 = vmatpush.bf16.msra.mxu0 0
      %2840 = vmatpush.bf16.msra.mxu0 0
      %2841 = vmatpush.bf16.msra.mxu0 0
      %2842 = vmatpush.bf16.msra.mxu0 %v2833
      %2843 = vmatmul.bf16.gmra.mxu0 %v2779
      %v2844 = vpop.f32.mrf.mxu0
      %v2845 = vadd.f32 0.0, %v2844
      %v2846 = vpop.f32.mrf.mxu0
      %v2847 = vadd.f32 0.0, %v2846
      %2848 = vmatmul.bf16.gmra.mxu0 %v2782
      %v2849 = vpop.f32.mrf.mxu0
      %v2850 = vadd.f32 0.0, %v2849
      %v2851 = vpop.f32.mrf.mxu0
      %v2852 = vadd.f32 0.0, %v2851
      %2853 = vmatmul.bf16.gmra.mxu0 %v2785
      %v2854 = vpop.f32.mrf.mxu0
      %v2855 = vadd.f32 0.0, %v2854
      %v2856 = vpop.f32.mrf.mxu0
      %v2857 = vadd.f32 0.0, %v2856
      %2858 = vmatmul.bf16.gmra.mxu0 %v2788
      %v2859 = vpop.f32.mrf.mxu0
      %v2860 = vadd.f32 0.0, %v2859
      %v2861 = vpop.f32.mrf.mxu0
      %v2862 = vadd.f32 0.0, %v2861
      %2863 = vmatmul.bf16.gmra.mxu0 %v2791
      %v2864 = vpop.f32.mrf.mxu0
      %v2865 = vadd.f32 0.0, %v2864
      %v2866 = vpop.f32.mrf.mxu0
      %v2867 = vadd.f32 0.0, %v2866
      %2868 = vmatmul.bf16.gmra.mxu0 %v2794
      %v2869 = vpop.f32.mrf.mxu0
      %v2870 = vadd.f32 0.0, %v2869
      %v2871 = vpop.f32.mrf.mxu0
      %v2872 = vadd.f32 0.0, %v2871
      %2873 = vmatmul.bf16.gmra.mxu0 %v2797
      %v2874 = vpop.f32.mrf.mxu0
      %v2875 = vadd.f32 0.0, %v2874
      %v2876 = vpop.f32.mrf.mxu0
      %v2877 = vadd.f32 0.0, %v2876
      %2878 = vmatmul.bf16.gmra.mxu0 %v2800
      %v2879 = vpop.f32.mrf.mxu0
      %v2880 = vadd.f32 0.0, %v2879
      %v2881 = vpop.f32.mrf.mxu0
      %v2882 = vadd.f32 0.0, %v2881
      %2883 = vmatmul.bf16.gmra.mxu0 %v2803
      %v2884 = vpop.f32.mrf.mxu0
      %v2885 = vadd.f32 0.0, %v2884
      %v2886 = vpop.f32.mrf.mxu0
      %v2887 = vadd.f32 0.0, %v2886
      %2888 = vmatmul.bf16.gmra.mxu0 %v2806
      %v2889 = vpop.f32.mrf.mxu0
      %v2890 = vadd.f32 0.0, %v2889
      %v2891 = vpop.f32.mrf.mxu0
      %v2892 = vadd.f32 0.0, %v2891
      %2893 = vmatmul.bf16.gmra.mxu0 %v2809
      %v2894 = vpop.f32.mrf.mxu0
      %v2895 = vadd.f32 0.0, %v2894
      %v2896 = vpop.f32.mrf.mxu0
      %v2897 = vadd.f32 0.0, %v2896
      %2898 = vmatmul.bf16.gmra.mxu0 %v2812
      %v2899 = vpop.f32.mrf.mxu0
      %v2900 = vadd.f32 0.0, %v2899
      %v2901 = vpop.f32.mrf.mxu0
      %v2902 = vadd.f32 0.0, %v2901
      %2903 = vmatmul.bf16.gmra.mxu0 %v2815
      %v2904 = vpop.f32.mrf.mxu0
      %v2905 = vadd.f32 0.0, %v2904
      %v2906 = vpop.f32.mrf.mxu0
      %v2907 = vadd.f32 0.0, %v2906
      %2908 = vmatmul.bf16.gmra.mxu0 %v2818
      %v2909 = vpop.f32.mrf.mxu0
      %v2910 = vadd.f32 0.0, %v2909
      %v2911 = vpop.f32.mrf.mxu0
      %v2912 = vadd.f32 0.0, %v2911
      %2913 = vmatmul.bf16.gmra.mxu0 %v2821
      %v2914 = vpop.f32.mrf.mxu0
      %v2915 = vadd.f32 0.0, %v2914
      %v2916 = vpop.f32.mrf.mxu0
      %v2917 = vadd.f32 0.0, %v2916
      %2918 = vmatmul.bf16.gmra.mxu0 %v2824
      %v2919 = vpop.f32.mrf.mxu0
      %v2920 = vadd.f32 0.0, %v2919
      %v2921 = vpop.f32.mrf.mxu0
      %v2922 = vadd.f32 0.0, %v2921
      %2923 = vmatmul.bf16.gmra.mxu0 %v2827
      %v2924 = vpop.f32.mrf.mxu0
      %v2925 = vadd.f32 0.0, %v2924
      %v2926 = vpop.f32.mrf.mxu0
      %v2927 = vadd.f32 0.0, %v2926
      %2928 = vmatmul.bf16.gmra.mxu0 %v2830
      %v2929 = vpop.f32.mrf.mxu0
      %v2930 = vadd.f32 0.0, %v2929
      %v2931 = vpop.f32.mrf.mxu0
      %v2932 = vadd.f32 0.0, %v2931
      %2933 = vdwg.mxu0
      %v2934 = vadd.f32 %v2698, %v2845
      %v2935 = vadd.f32 %v2699, %v2847
      %v2936 = vadd.f32 %v2700, %v2850
      %v2937 = vadd.f32 %v2701, %v2852
      %v2938 = vadd.f32 %v2702, %v2855
      %v2939 = vadd.f32 %v2703, %v2857
      %v2940 = vadd.f32 %v2704, %v2860
      %v2941 = vadd.f32 %v2705, %v2862
      %v2942 = vadd.f32 %v2706, %v2865
      %v2943 = vadd.f32 %v2707, %v2867
      %v2944 = vadd.f32 %v2708, %v2870
      %v2945 = vadd.f32 %v2709, %v2872
      %v2946 = vadd.f32 %v2710, %v2875
      %v2947 = vadd.f32 %v2711, %v2877
      %v2948 = vadd.f32 %v2712, %v2880
      %v2949 = vadd.f32 %v2713, %v2882
      %v2950 = vadd.f32 %v2714, %v2885
      %v2951 = vadd.f32 %v2715, %v2887
      %v2952 = vadd.f32 %v2716, %v2890
      %v2953 = vadd.f32 %v2717, %v2892
      %v2954 = vadd.f32 %v2718, %v2895
      %v2955 = vadd.f32 %v2719, %v2897
      %v2956 = vadd.f32 %v2720, %v2900
      %v2957 = vadd.f32 %v2721, %v2902
      %v2958 = vadd.f32 %v2722, %v2905
      %v2959 = vadd.f32 %v2723, %v2907
      %v2960 = vadd.f32 %v2724, %v2910
      %v2961 = vadd.f32 %v2725, %v2912
      %v2962 = vadd.f32 %v2726, %v2915
      %v2963 = vadd.f32 %v2727, %v2917
      %v2964 = vadd.f32 %v2728, %v2920
      %v2965 = vadd.f32 %v2729, %v2922
      %v2966 = vadd.f32 %v2730, %v2925
      %v2967 = vadd.f32 %v2731, %v2927
      %v2968 = vadd.f32 %v2732, %v2930
      %v2969 = vadd.f32 %v2733, %v2932
      %v2970 = vld [vmem:[%s215] sm:$0xff]
      %v2971 = vld [vmem:[%s215 + $0x8] sm:$0xff]
      %v2972 = vld [vmem:[%s215 + $0x10] sm:$0xff]
      %v2973 = vld [vmem:[%s215 + $0x18] sm:$0xff]
      %v2974 = vld [vmem:[%s215 + $0x20] sm:$0xff]
      %v2975 = vld [vmem:[%s215 + $0x28] sm:$0xff]
      %v2976 = vld [vmem:[%s215 + $0x30] sm:$0xff]
      %v2977 = vld [vmem:[%s215 + $0x38] sm:$0xff]
      %v2978 = vld [vmem:[%s215 + $0x40] sm:$0xff]
      %v2979 = vld [vmem:[%s215 + $0x48] sm:$0xff]
      %v2980 = vld [vmem:[%s215 + $0x50] sm:$0xff]
      %v2981 = vld [vmem:[%s215 + $0x58] sm:$0xff]
      %v2982 = vld [vmem:[%s215 + $0x60] sm:$0xff]
      %v2983 = vld [vmem:[%s215 + $0x68] sm:$0xff]
      %v2984 = vld [vmem:[%s215 + $0x70] sm:$0xff]
      %v2985 = vld [vmem:[%s215 + $0x78] sm:$0xff]
      %v2986 = vld [vmem:[%s215 + $0x80] sm:$0xff]
      %v2987 = vld [vmem:[%s215 + $0x88] sm:$0xff]
      %v2988 = vld [vmem:[%s215 + $0x90] sm:$0xff]
      %v2989 = vld [vmem:[%s215 + $0x98] sm:$0xff]
      %v2990 = vld [vmem:[%s215 + $0xa0] sm:$0xff]
      %v2991 = vld [vmem:[%s215 + $0xa8] sm:$0xff]
      %v2992 = vld [vmem:[%s215 + $0xb0] sm:$0xff]
      %v2993 = vld [vmem:[%s215 + $0xb8] sm:$0xff]
      %v2994 = vld [vmem:[%s215 + $0xc0] sm:$0xff]
      %v2995 = vld [vmem:[%s215 + $0xc8] sm:$0xff]
      %v2996 = vld [vmem:[%s215 + $0xd0] sm:$0xff]
      %v2997 = vld [vmem:[%s215 + $0xd8] sm:$0xff]
      %v2998 = vld [vmem:[%s215 + $0xe0] sm:$0xff]
      %v2999 = vld [vmem:[%s215 + $0xe8] sm:$0xff]
      %v3000 = vld [vmem:[%s215 + $0xf0] sm:$0xff]
      %v3001 = vld [vmem:[%s215 + $0xf8] sm:$0xff]
      %v3002 = vld [vmem:[%s215 + $0x100] sm:$0xff]
      %v3003 = vld [vmem:[%s215 + $0x108] sm:$0xff]
      %v3004 = vld [vmem:[%s215 + $0x110] sm:$0xff]
      %v3005 = vld [vmem:[%s215 + $0x118] sm:$0xff]
      %3007 = vset.pattern.permute.xlu0 0
      %3008 = vperm.xlu0 %3007, %v2970
      %v3009 = vpop.permute.xlu0 %3008
      %3012 = vset.pattern.permute.xlu0 0
      %3013 = vperm.xlu0 %3012, %v2971
      %v3014 = vpop.permute.xlu0 %3013
      %3017 = vset.pattern.permute.xlu0 0
      %3018 = vperm.xlu0 %3017, %v2972
      %v3019 = vpop.permute.xlu0 %3018
      %3022 = vset.pattern.permute.xlu0 0
      %3023 = vperm.xlu0 %3022, %v2973
      %v3024 = vpop.permute.xlu0 %3023
      %3027 = vset.pattern.permute.xlu0 0
      %3028 = vperm.xlu0 %3027, %v2974
      %v3029 = vpop.permute.xlu0 %3028
      %3032 = vset.pattern.permute.xlu0 0
      %3033 = vperm.xlu0 %3032, %v2975
      %v3034 = vpop.permute.xlu0 %3033
      %3037 = vset.pattern.permute.xlu0 0
      %3038 = vperm.xlu0 %3037, %v2976
      %v3039 = vpop.permute.xlu0 %3038
      %3042 = vset.pattern.permute.xlu0 0
      %3043 = vperm.xlu0 %3042, %v2977
      %v3044 = vpop.permute.xlu0 %3043
      %3047 = vset.pattern.permute.xlu0 0
      %3048 = vperm.xlu0 %3047, %v2978
      %v3049 = vpop.permute.xlu0 %3048
      %3052 = vset.pattern.permute.xlu0 0
      %3053 = vperm.xlu0 %3052, %v2979
      %v3054 = vpop.permute.xlu0 %3053
      %3057 = vset.pattern.permute.xlu0 0
      %3058 = vperm.xlu0 %3057, %v2980
      %v3059 = vpop.permute.xlu0 %3058
      %3062 = vset.pattern.permute.xlu0 0
      %3063 = vperm.xlu0 %3062, %v2981
      %v3064 = vpop.permute.xlu0 %3063
      %3067 = vset.pattern.permute.xlu0 0
      %3068 = vperm.xlu0 %3067, %v2982
      %v3069 = vpop.permute.xlu0 %3068
      %3072 = vset.pattern.permute.xlu0 0
      %3073 = vperm.xlu0 %3072, %v2983
      %v3074 = vpop.permute.xlu0 %3073
      %3077 = vset.pattern.permute.xlu0 0
      %3078 = vperm.xlu0 %3077, %v2984
      %v3079 = vpop.permute.xlu0 %3078
      %3082 = vset.pattern.permute.xlu0 0
      %3083 = vperm.xlu0 %3082, %v2985
      %v3084 = vpop.permute.xlu0 %3083
      %3087 = vset.pattern.permute.xlu0 0
      %3088 = vperm.xlu0 %3087, %v2986
      %v3089 = vpop.permute.xlu0 %3088
      %3092 = vset.pattern.permute.xlu0 0
      %3093 = vperm.xlu0 %3092, %v2987
      %v3094 = vpop.permute.xlu0 %3093
      %3097 = vset.pattern.permute.xlu0 0
      %3098 = vperm.xlu0 %3097, %v2988
      %v3099 = vpop.permute.xlu0 %3098
      %3102 = vset.pattern.permute.xlu0 0
      %3103 = vperm.xlu0 %3102, %v2989
      %v3104 = vpop.permute.xlu0 %3103
      %3107 = vset.pattern.permute.xlu0 0
      %3108 = vperm.xlu0 %3107, %v2990
      %v3109 = vpop.permute.xlu0 %3108
      %3112 = vset.pattern.permute.xlu0 0
      %3113 = vperm.xlu0 %3112, %v2991
      %v3114 = vpop.permute.xlu0 %3113
      %3117 = vset.pattern.permute.xlu0 0
      %3118 = vperm.xlu0 %3117, %v2992
      %v3119 = vpop.permute.xlu0 %3118
      %3122 = vset.pattern.permute.xlu0 0
      %3123 = vperm.xlu0 %3122, %v2993
      %v3124 = vpop.permute.xlu0 %3123
      %3127 = vset.pattern.permute.xlu0 0
      %3128 = vperm.xlu0 %3127, %v2994
      %v3129 = vpop.permute.xlu0 %3128
      %3132 = vset.pattern.permute.xlu0 0
      %3133 = vperm.xlu0 %3132, %v2995
      %v3134 = vpop.permute.xlu0 %3133
      %3137 = vset.pattern.permute.xlu0 0
      %3138 = vperm.xlu0 %3137, %v2996
      %v3139 = vpop.permute.xlu0 %3138
      %3142 = vset.pattern.permute.xlu0 0
      %3143 = vperm.xlu0 %3142, %v2997
      %v3144 = vpop.permute.xlu0 %3143
      %3147 = vset.pattern.permute.xlu0 0
      %3148 = vperm.xlu0 %3147, %v2998
      %v3149 = vpop.permute.xlu0 %3148
      %3152 = vset.pattern.permute.xlu0 0
      %3153 = vperm.xlu0 %3152, %v2999
      %v3154 = vpop.permute.xlu0 %3153
      %3157 = vset.pattern.permute.xlu0 0
      %3158 = vperm.xlu0 %3157, %v3000
      %v3159 = vpop.permute.xlu0 %3158
      %3162 = vset.pattern.permute.xlu0 0
      %3163 = vperm.xlu0 %3162, %v3001
      %v3164 = vpop.permute.xlu0 %3163
      %3167 = vset.pattern.permute.xlu0 0
      %3168 = vperm.xlu0 %3167, %v3002
      %v3169 = vpop.permute.xlu0 %3168
      %3172 = vset.pattern.permute.xlu0 0
      %3173 = vperm.xlu0 %3172, %v3003
      %v3174 = vpop.permute.xlu0 %3173
      %3177 = vset.pattern.permute.xlu0 0
      %3178 = vperm.xlu0 %3177, %v3004
      %v3179 = vpop.permute.xlu0 %3178
      %3182 = vset.pattern.permute.xlu0 0
      %3183 = vperm.xlu0 %3182, %v3005
      %v3184 = vpop.permute.xlu0 %3183
      %v3186 = vmul.f32 %v2934, %v3009
      %v3187 = vmul.f32 %v2935, %v3014
      %v3188 = vmul.f32 %v2936, %v3019
      %v3189 = vmul.f32 %v2937, %v3024
      %v3190 = vmul.f32 %v2938, %v3029
      %v3191 = vmul.f32 %v2939, %v3034
      %v3192 = vmul.f32 %v2940, %v3039
      %v3193 = vmul.f32 %v2941, %v3044
      %v3194 = vmul.f32 %v2942, %v3049
      %v3195 = vmul.f32 %v2943, %v3054
      %v3196 = vmul.f32 %v2944, %v3059
      %v3197 = vmul.f32 %v2945, %v3064
      %v3198 = vmul.f32 %v2946, %v3069
      %v3199 = vmul.f32 %v2947, %v3074
      %v3200 = vmul.f32 %v2948, %v3079
      %v3201 = vmul.f32 %v2949, %v3084
      %v3202 = vmul.f32 %v2950, %v3089
      %v3203 = vmul.f32 %v2951, %v3094
      %v3204 = vmul.f32 %v2952, %v3099
      %v3205 = vmul.f32 %v2953, %v3104
      %v3206 = vmul.f32 %v2954, %v3109
      %v3207 = vmul.f32 %v2955, %v3114
      %v3208 = vmul.f32 %v2956, %v3119
      %v3209 = vmul.f32 %v2957, %v3124
      %v3210 = vmul.f32 %v2958, %v3129
      %v3211 = vmul.f32 %v2959, %v3134
      %v3212 = vmul.f32 %v2960, %v3139
      %v3213 = vmul.f32 %v2961, %v3144
      %v3214 = vmul.f32 %v2962, %v3149
      %v3215 = vmul.f32 %v2963, %v3154
      %v3216 = vmul.f32 %v2964, %v3159
      %v3217 = vmul.f32 %v2965, %v3164
      %v3218 = vmul.f32 %v2966, %v3169
      %v3219 = vmul.f32 %v2967, %v3174
      %v3220 = vmul.f32 %v2968, %v3179
      %v3221 = vmul.f32 %v2969, %v3184
      %v3222 = vadd.f32 %v3186, %v3187
      %v3223 = vadd.f32 %v3222, %v3188
      %v3224 = vadd.f32 %v3223, %v3189
      %v3225 = vadd.f32 %v3224, %v3190
      %v3226 = vadd.f32 %v3225, %v3191
      %v3227 = vadd.f32 %v3226, %v3192
      %v3228 = vadd.f32 %v3227, %v3193
      %v3229 = vadd.f32 %v3228, %v3194
      %v3230 = vadd.f32 %v3229, %v3195
      %v3231 = vadd.f32 %v3230, %v3196
      %v3232 = vadd.f32 %v3231, %v3197
      %v3233 = vadd.f32 %v3232, %v3198
      %v3234 = vadd.f32 %v3233, %v3199
      %v3235 = vadd.f32 %v3234, %v3200
      %v3236 = vadd.f32 %v3235, %v3201
      %v3237 = vadd.f32 %v3236, %v3202
      %v3238 = vadd.f32 %v3237, %v3203
      %v3239 = vadd.f32 %v3238, %v3204
      %v3240 = vadd.f32 %v3239, %v3205
      %v3241 = vadd.f32 %v3240, %v3206
      %v3242 = vadd.f32 %v3241, %v3207
      %v3243 = vadd.f32 %v3242, %v3208
      %v3244 = vadd.f32 %v3243, %v3209
      %v3245 = vadd.f32 %v3244, %v3210
      %v3246 = vadd.f32 %v3245, %v3211
      %v3247 = vadd.f32 %v3246, %v3212
      %v3248 = vadd.f32 %v3247, %v3213
      %v3249 = vadd.f32 %v3248, %v3214
      %v3250 = vadd.f32 %v3249, %v3215
      %v3251 = vadd.f32 %v3250, %v3216
      %v3252 = vadd.f32 %v3251, %v3217
      %v3253 = vadd.f32 %v3252, %v3218
      %v3254 = vadd.f32 %v3253, %v3219
      %v3255 = vadd.f32 %v3254, %v3220
      %v3256 = vadd.f32 %v3255, %v3221
      %v3257 = vrot.slane %v3256, 4
      %v3258 = vadd.f32 %v3256, %v3257
      %v3259 = vrot.slane %v3258, 2
      %v3260 = vadd.f32 %v3258, %v3259
      %v3261 = vrot.slane %v3260, 1
      %v3262 = vadd.f32 %v3260, %v3261
      %3263 = vst [vmem:[%s222] sm:$0x1] %v3262
      %v3264 = vmul.f32 %v3186, %v3186
      %v3265 = vmul.f32 %v3187, %v3187
      %v3266 = vmul.f32 %v3188, %v3188
      %v3267 = vmul.f32 %v3189, %v3189
      %v3268 = vmul.f32 %v3190, %v3190
      %v3269 = vmul.f32 %v3191, %v3191
      %v3270 = vmul.f32 %v3192, %v3192
      %v3271 = vmul.f32 %v3193, %v3193
      %v3272 = vmul.f32 %v3194, %v3194
      %v3273 = vmul.f32 %v3195, %v3195
      %v3274 = vmul.f32 %v3196, %v3196
      %v3275 = vmul.f32 %v3197, %v3197
      %v3276 = vmul.f32 %v3198, %v3198
      %v3277 = vmul.f32 %v3199, %v3199
      %v3278 = vmul.f32 %v3200, %v3200
      %v3279 = vmul.f32 %v3201, %v3201
      %v3280 = vmul.f32 %v3202, %v3202
      %v3281 = vmul.f32 %v3203, %v3203
      %v3282 = vmul.f32 %v3204, %v3204
      %v3283 = vmul.f32 %v3205, %v3205
      %v3284 = vmul.f32 %v3206, %v3206
      %v3285 = vmul.f32 %v3207, %v3207
      %v3286 = vmul.f32 %v3208, %v3208
      %v3287 = vmul.f32 %v3209, %v3209
      %v3288 = vmul.f32 %v3210, %v3210
      %v3289 = vmul.f32 %v3211, %v3211
      %v3290 = vmul.f32 %v3212, %v3212
      %v3291 = vmul.f32 %v3213, %v3213
      %v3292 = vmul.f32 %v3214, %v3214
      %v3293 = vmul.f32 %v3215, %v3215
      %v3294 = vmul.f32 %v3216, %v3216
      %v3295 = vmul.f32 %v3217, %v3217
      %v3296 = vmul.f32 %v3218, %v3218
      %v3297 = vmul.f32 %v3219, %v3219
      %v3298 = vmul.f32 %v3220, %v3220
      %v3299 = vmul.f32 %v3221, %v3221
      %v3300 = vadd.f32 %v3264, %v3265
      %v3301 = vadd.f32 %v3300, %v3266
      %v3302 = vadd.f32 %v3301, %v3267
      %v3303 = vadd.f32 %v3302, %v3268
      %v3304 = vadd.f32 %v3303, %v3269
      %v3305 = vadd.f32 %v3304, %v3270
      %v3306 = vadd.f32 %v3305, %v3271
      %v3307 = vadd.f32 %v3306, %v3272
      %v3308 = vadd.f32 %v3307, %v3273
      %v3309 = vadd.f32 %v3308, %v3274
      %v3310 = vadd.f32 %v3309, %v3275
      %v3311 = vadd.f32 %v3310, %v3276
      %v3312 = vadd.f32 %v3311, %v3277
      %v3313 = vadd.f32 %v3312, %v3278
      %v3314 = vadd.f32 %v3313, %v3279
      %v3315 = vadd.f32 %v3314, %v3280
      %v3316 = vadd.f32 %v3315, %v3281
      %v3317 = vadd.f32 %v3316, %v3282
      %v3318 = vadd.f32 %v3317, %v3283
      %v3319 = vadd.f32 %v3318, %v3284
      %v3320 = vadd.f32 %v3319, %v3285
      %v3321 = vadd.f32 %v3320, %v3286
      %v3322 = vadd.f32 %v3321, %v3287
      %v3323 = vadd.f32 %v3322, %v3288
      %v3324 = vadd.f32 %v3323, %v3289
      %v3325 = vadd.f32 %v3324, %v3290
      %v3326 = vadd.f32 %v3325, %v3291
      %v3327 = vadd.f32 %v3326, %v3292
      %v3328 = vadd.f32 %v3327, %v3293
      %v3329 = vadd.f32 %v3328, %v3294
      %v3330 = vadd.f32 %v3329, %v3295
      %v3331 = vadd.f32 %v3330, %v3296
      %v3332 = vadd.f32 %v3331, %v3297
      %v3333 = vadd.f32 %v3332, %v3298
      %v3334 = vadd.f32 %v3333, %v3299
      %v3335 = vrot.slane %v3334, 4
      %v3336 = vadd.f32 %v3334, %v3335
      %v3337 = vrot.slane %v3336, 2
      %v3338 = vadd.f32 %v3336, %v3337
      %v3339 = vrot.slane %v3338, 1
      %v3340 = vadd.f32 %v3338, %v3339
      %3341 = vst [vmem:[%s222 + $0x1] sm:$0x1] %v3340
      %p3342 = scmp.lt.s32.totalorder %s18, 1
      %s3343 = scalar_select %p3342, %s18, 1
      %p3344 = scmp.lt.s32.totalorder %s19, 0
      %s3345 = scalar_select %p3344, %s19, 0
      %s3346 = sadd.s32 %s3345, %s3343
      %s3347 = smul.addr %s3346, 2
      %s3348 = scalar_lea.vmem %s3, %s3347
      // Predicated region
      $region33: #{conv_layer_forward.2} parent=31 // pred_check
        %p3349 = pneg %p121
      $region34: #{conv_layer_forward.2} parent=31 // pred_check_branch
        %3351 = sbr.rel (%p3349) target = $region36
      $region35: #{conv_layer_forward.2} parent=31 // pred_region
        _
      $region36: #{conv_layer_forward.2} parent=31 // pred_fallthru
        _
    $region32: #{conv_layer_forward.2} parent=5 // pred_fallthru
      _
    %p3352 = scmp.le.s32.totalorder 2, %s9
    // Predicated region
    $region37: #{conv_layer_forward.2} parent=5 // pred_check
      %p3353 = pneg %p3352
    $region38: #{conv_layer_forward.2} parent=5 // pred_check_branch
      %3355 = sbr.rel (%p3353) target = $region40
    $region39: #{conv_layer_forward.2} parent=5 // pred_region
      %s3356 = ssub.s32 %s9, 2
      // Predicated region
      $region41: #{conv_layer_forward.2} parent=39 // pred_check
        %p3357 = pneg %p127
      $region42: #{conv_layer_forward.2} parent=39 // pred_check_branch
        %3359 = sbr.rel (%p3357) target = $region44
      $region43: #{conv_layer_forward.2} parent=39 // pred_region
        %p3360 = scmp.lt.s32.totalorder %s20, 1
        %s3361 = scalar_select %p3360, %s20, 1
        %p3362 = scmp.lt.s32.totalorder %s21, 0
        %s3363 = scalar_select %p3362, %s21, 0
        %s3364 = sadd.s32 %s3363, %s3361
        %s3365 = smul.addr %s3364, 2
        %s3366 = scalar_lea.vmem %s3, %s3365
      $region44: #{conv_layer_forward.2} parent=39 // pred_fallthru
        _
    $region40: #{conv_layer_forward.2} parent=5 // pred_fallthru
      _
  $region6: #{conv_layer_forward.2} parent=0 // loop_footer
    %s13 = sadd.s32 1, %s9
  $region7: #{conv_layer_forward.2} parent=0 // loop_footer_branch
    %8 = sbr.rel target = $region3
  $region8: #{conv_layer_forward.2} parent=0 // loop_exit
    _

</llo_original>
